<compile_context>
chip_gen: v7x
topology: tpu7x:2x2x1
jax: 0.10.0
libtpu: 0.0.40
codegen_flags: <defaults>
</compile_context>

<pallas_src>
from functools import partial

import jax
import jax.numpy as jnp
from jax import lax
from jax.experimental import pallas as pl
from jax.experimental.pallas import tpu as pltpu

IN_FEATURES = 160 * 160 * 3   # 76800, hard-coded by ImageMLP
OUT_FEATURES = 10


def _bit_mlp_kernel(a_scale_ref, deq_ref, x_ref, w_ref, o_ref, acc_ref,
                    *, mxu_dtype, acc_dtype):
    """One K-tile of softmax(BitLinear(x)) with a pre-quantized ternary weight.

    a_scale_ref : (B, 1)  f32   per-row activation quant scale (127/max|x|)
    deq_ref     : (B, 1)  f32   precomputed 1/(a_scale*w_scale)
    x_ref       : (B, TK) f32   activation tile (K on lanes)
    w_ref       : (N, TK) int8  pre-quantized ternary weight tile, PyTorch (out,in) layout
    o_ref       : (B, N)  f32   softmax output (resident across the K grid)
    acc_ref     : (B, N)  acc_dtype VMEM accumulator scratch (int32 or f32)
    """
    k = pl.program_id(0)

    @pl.when(k == 0)
    def _init():
        acc_ref[...] = jnp.zeros_like(acc_ref)

    # Activation quant to integer values; weight is already ternary int8.
    # Dequantization is deferred to the finalize step.
    x_int = jnp.clip(jnp.round(x_ref[...] * a_scale_ref[...]), -128.0, 127.0)

    # mxu_dtype is int8 (v5e/v6e: native int MXU, int32 accumulate) or bf16
    # (v7x/other: exact for |x_int| <= 128 and w in {-1,0,1}, f32 accumulate).
    # NOTE: both contracting dims are on lanes; Mosaic transposes the small
    # (10, TK) weight tile on the XLU, which has slack here.
    acc_ref[...] += lax.dot_general(
        x_int.astype(mxu_dtype), w_ref[...].astype(mxu_dtype),
        dimension_numbers=(((1,), (1,)), ((), ())),   # contract K (lanes of both)
        preferred_element_type=acc_dtype)             # (B, N) partial

    @pl.when(k == pl.num_programs(0) - 1)
    def _finish():
        y = acc_ref[...].astype(jnp.float32) * deq_ref[...]   # deferred dequant
        m = jnp.max(y, axis=-1, keepdims=True)
        e = jnp.exp(y - m)
        o_ref[...] = e / jnp.sum(e, axis=-1, keepdims=True)   # only (B,10) divides


def _pick_k_tile(K, target_steps):
    """Largest lane-aligned (multiple of 128) tile dividing K whose step count is
    closest to target_steps (>= 2 so the DMA pipeline stays double-buffered)."""
    candidates = [s for s in range(2, 65)
                  if K % s == 0 and (K // s) % 128 == 0]
    if not candidates:
        return K   # single block: block == full dim is always legal
    best = min(candidates, key=lambda s: abs(s - target_steps))
    return K // best


def prequantize_bitlinear_weight(weight):
    """Offline BitNet b1.58 weight quantization (run once per weight update).

    Returns (w_q int8 ternary in PyTorch (out,in) layout, inv_w_scale = mean|w|).
    """
    w = jnp.asarray(weight, jnp.float32)
    mean_abs = jnp.maximum(jnp.mean(jnp.abs(w)), 1e-5)      # == 1 / w_scale
    w_q = jnp.clip(jnp.round(w / mean_abs), -1.0, 1.0).astype(jnp.int8)
    return w_q, mean_abs


@partial(jax.jit, static_argnames=("mxu_int8", "target_k_steps"))
def image_mlp_forward(x_nchw, w_q, inv_w_scale, *, mxu_int8=False, target_k_steps=4):
    """x_nchw: (B, 3, 160, 160) f32; w_q: (10, 76800) int8 ternary; inv_w_scale: scalar f32."""
    B = x_nchw.shape[0]
    x2d = x_nchw.reshape(B, -1).astype(jnp.float32)     # nn.Flatten (glue)
    N, K = w_q.shape

    # Per-row full-K activation reduction hoisted out of the kernel (x is small);
    # this is what allows K to be tiled and pipelined inside the kernel.
    max_abs = jnp.maximum(jnp.max(jnp.abs(x2d), axis=-1, keepdims=True), 1e-5)
    a_scale = 127.0 / max_abs                            # (B, 1)
    deq = (max_abs / 127.0) * inv_w_scale                # (B, 1) = 1/(a_scale*w_scale)

    mxu_dtype = jnp.int8 if mxu_int8 else jnp.bfloat16
    acc_dtype = jnp.int32 if mxu_int8 else jnp.float32
    # Exactness: |sum| <= 128 * 76800 ~= 9.8e6, below 2^24 (f32) and 2^31 (int32).

    tk = _pick_k_tile(K, target_k_steps)
    grid = (K // tk,)

    kernel = partial(_bit_mlp_kernel, mxu_dtype=mxu_dtype, acc_dtype=acc_dtype)

    grid_spec = pltpu.PrefetchScalarGridSpec(
        num_scalar_prefetch=0,
        grid=grid,
        in_specs=[
            pl.BlockSpec((B, 1), lambda k: (0, 0)),      # a_scale (resident)
            pl.BlockSpec((B, 1), lambda k: (0, 0)),      # deq     (resident)
            pl.BlockSpec((B, tk), lambda k: (0, k)),     # x K-tile (f32)
            pl.BlockSpec((N, tk), lambda k: (0, k)),     # w K-tile (int8, PyTorch layout)
        ],
        out_specs=pl.BlockSpec((B, N), lambda k: (0, 0)),
        scratch_shapes=[pltpu.VMEM((B, N), acc_dtype)],
    )

    return pl.pallas_call(
        kernel,
        out_shape=jax.ShapeDtypeStruct((B, N), jnp.float32),
        grid_spec=grid_spec,
        compiler_params=pltpu.CompilerParams(
            dimension_semantics=("arbitrary",),   # K is a reduction axis
            vmem_limit_bytes=32 << 20,            # safe on v7x (64 MiB physical)
        ),
    )(a_scale, deq, x2d, w_q)


def _device_kind():
    try:
        return jax.devices()[0].device_kind.lower()
    except Exception:
        return ""


if __name__ == "__main__":
    key = jax.random.PRNGKey(0)
    kx, kw = jax.random.split(key)

    B = 2
    x = jax.random.normal(kx, (B, 3, 160, 160), dtype=jnp.float32)

    # Deterministic BitLinear weight in PyTorch layout (out, in),
    # uniform(-1/sqrt(fan_in), 1/sqrt(fan_in)) like nn.Linear's default init.
    bound = 1.0 / (IN_FEATURES ** 0.5)
    weight = jax.random.uniform(
        kw, (OUT_FEATURES, IN_FEATURES), dtype=jnp.float32,
        minval=-bound, maxval=bound)

    # Offline (once per weight update): ternary int8 weight + scalar scale.
    w_q, inv_w_scale = jax.block_until_ready(prequantize_bitlinear_weight(weight))

    # Generation-aware knobs: int8 MXU on v5e/v6e, bf16 on v7x/unknown;
    # ~2 K-steps on v7x (overhead-bound), ~4 on v5e/v6e (HBM-bound, overhead hidden).
    kind = _device_kind()
    is_v7 = ("v7" in kind) or ("tpu7" in kind)
    use_int8_mxu = (("v5" in kind) or ("v6" in kind)) and not is_v7
    target_k_steps = 2 if is_v7 else 4

    try:
        out = jax.block_until_ready(
            image_mlp_forward(x, w_q, inv_w_scale,
                              mxu_int8=use_int8_mxu,
                              target_k_steps=target_k_steps))
    except Exception:
        # Portable fallback: bf16 MXU (exact for these integer values) if this
        # backend rejects the int8 matmul lowering.
        out = jax.block_until_ready(
            image_mlp_forward(x, w_q, inv_w_scale,
                              mxu_int8=False,
                              target_k_steps=target_k_steps))

    assert out.shape == (B, OUT_FEATURES)
    assert bool(jnp.all(jnp.isfinite(out)))
    assert bool(jnp.allclose(jnp.sum(out, axis=1), 1.0, atol=1e-5))

    # Pure-JAX reference (dequant-before-matmul order, as in the PyTorch module).
    x2d = x.reshape(B, -1)
    a = 127.0 / jnp.maximum(jnp.max(jnp.abs(x2d), axis=-1, keepdims=True), 1e-5)
    xq = jnp.clip(jnp.round(x2d * a), -128.0, 127.0) / a
    s = 1.0 / jnp.maximum(jnp.mean(jnp.abs(weight)), 1e-5)
    wq = jnp.clip(jnp.round(weight * s), -1.0, 1.0) / s
    ref = jax.nn.softmax(
        jnp.dot(xq, wq.T, precision=jax.lax.Precision.HIGHEST), axis=1)
    assert bool(jnp.allclose(out, ref, atol=1e-4, rtol=1e-4))

    print("KERNEL_OK")
</pallas_src>

<mosaic_0001>
module attributes {stable_mosaic.version = 11 : i64} {
  func.func @_bit_mlp_kernel(%arg0: i32, %arg1: memref<2x1xf32, #tpu.memory_space<vmem>>, %arg2: memref<2x1xf32, #tpu.memory_space<vmem>>, %arg3: memref<2x19200xf32, #tpu.memory_space<vmem>>, %arg4: memref<10x19200xi8, #tpu.memory_space<vmem>>, %arg5: memref<2x10xf32, #tpu.memory_space<vmem>>, %arg6: memref<2x10xf32, #tpu.memory_space<vmem>>) attributes {dimension_semantics = [#tpu.dimension_semantics<arbitrary>], iteration_bounds = array<i64: 4>, scalar_prefetch = 0 : i64, scratch_operands = 1 : i64, tpu.core_type = #tpu.core_type<tc>, window_params = [{pipeline_mode = #tpu.pipeline_mode<synchronous>, transform_indices = @transform_0, window_bounds = array<i64: 2, 1>}, {pipeline_mode = #tpu.pipeline_mode<synchronous>, transform_indices = @transform_1, window_bounds = array<i64: 2, 1>}, {transform_indices = @transform_2, window_bounds = array<i64: 2, 19200>}, {transform_indices = @transform_3, window_bounds = array<i64: 10, 19200>}, {pipeline_mode = #tpu.pipeline_mode<synchronous>, transform_indices = @transform_4, window_bounds = array<i64: 2, 10>}]} {
    %c0_i32 = arith.constant 0 : i32
    %0 = arith.cmpi eq, %arg0, %c0_i32 : i32
    %1 = arith.extui %0 : i1 to i32
    %c0_i32_0 = arith.constant 0 : i32
    %2 = arith.cmpi ne, %1, %c0_i32_0 : i32
    scf.if %2 {
      %cst_13 = arith.constant 0.000000e+00 : f32
      %22 = vector.broadcast %cst_13 : f32 to vector<2x10xf32>
      %c0_14 = arith.constant 0 : index
      %c0_15 = arith.constant 0 : index
      %23 = vector.load %arg6[%c0_14, %c0_15] : memref<2x10xf32, #tpu.memory_space<vmem>>, vector<2x10xf32>
      tpu.vector_store %arg6[%c0_14, %c0_15], %22 {strides = array<i32>} : memref<2x10xf32, #tpu.memory_space<vmem>>, vector<2x10xf32>,
    } else {
    }
    %c0 = arith.constant 0 : index
    %c0_1 = arith.constant 0 : index
    %3 = vector.load %arg3[%c0, %c0_1] : memref<2x19200xf32, #tpu.memory_space<vmem>>, vector<2x19200xf32>
    %c0_2 = arith.constant 0 : index
    %c0_3 = arith.constant 0 : index
    %4 = vector.load %arg1[%c0_2, %c0_3] : memref<2x1xf32, #tpu.memory_space<vmem>>, vector<2x1xf32>
    %5 = vector.broadcast %4 : vector<2x1xf32> to vector<2x19200xf32>
    %6 = arith.mulf %3, %5 : vector<2x19200xf32>
    %7 = math.roundeven %6 : vector<2x19200xf32>
    %cst = arith.constant -1.280000e+02 : f32
    %cst_4 = arith.constant 1.270000e+02 : f32
    %8 = vector.broadcast %cst : f32 to vector<2x19200xf32>
    %9 = arith.maximumf %8, %7 : vector<2x19200xf32>
    %10 = vector.broadcast %cst_4 : f32 to vector<2x19200xf32>
    %11 = arith.minimumf %10, %9 : vector<2x19200xf32>
    %c0_5 = arith.constant 0 : index
    %c0_6 = arith.constant 0 : index
    %12 = vector.load %arg6[%c0_5, %c0_6] : memref<2x10xf32, #tpu.memory_space<vmem>>, vector<2x10xf32>
    %13 = arith.truncf %11 : vector<2x19200xf32> to vector<2x19200xbf16>
    %c0_7 = arith.constant 0 : index
    %c0_8 = arith.constant 0 : index
    %14 = vector.load %arg4[%c0_7, %c0_8] : memref<10x19200xi8, #tpu.memory_space<vmem>>, vector<10x19200xi8>
    %15 = arith.sitofp %14 : vector<10x19200xi8> to vector<10x19200xbf16>
    %cst_9 = arith.constant dense<0.000000e+00> : vector<2x10xf32>
    %16 = tpu.matmul %13, %15, %cst_9 {dimension_numbers = #tpu.dot_dimension_numbers<[1], [1], [0], [0], [0, 0, 1, 0], [], []>} : vector<2x19200xbf16>, vector<10x19200xbf16>, vector<2x10xf32> -> vector<2x10xf32>
    %17 = arith.addf %12, %16 : vector<2x10xf32>
    %c0_10 = arith.constant 0 : index
    %c0_11 = arith.constant 0 : index
    %18 = vector.load %arg6[%c0_10, %c0_11] : memref<2x10xf32, #tpu.memory_space<vmem>>, vector<2x10xf32>
    tpu.vector_store %arg6[%c0_10, %c0_11], %17 {strides = array<i32>} : memref<2x10xf32, #tpu.memory_space<vmem>>, vector<2x10xf32>,
    %c3_i32 = arith.constant 3 : i32
    %19 = arith.cmpi eq, %arg0, %c3_i32 : i32
    %20 = arith.extui %19 : i1 to i32
    %c0_i32_12 = arith.constant 0 : i32
    %21 = arith.cmpi ne, %20, %c0_i32_12 : i32
    scf.if %21 {
      %c0_13 = arith.constant 0 : index
      %c0_14 = arith.constant 0 : index
      %22 = vector.load %arg6[%c0_13, %c0_14] : memref<2x10xf32, #tpu.memory_space<vmem>>, vector<2x10xf32>
      %c0_15 = arith.constant 0 : index
      %c0_16 = arith.constant 0 : index
      %23 = vector.load %arg2[%c0_15, %c0_16] : memref<2x1xf32, #tpu.memory_space<vmem>>, vector<2x1xf32>
      %24 = vector.broadcast %23 : vector<2x1xf32> to vector<2x10xf32>
      %25 = arith.mulf %22, %24 : vector<2x10xf32>
      %cst_17 = arith.constant dense<0xFF800000> : vector<2xf32>
      %26 = vector.multi_reduction <maximumf>, %25, %cst_17 [1] : vector<2x10xf32> to vector<2xf32>
      %27 = vector.shape_cast %26 : vector<2xf32> to vector<2x1xf32>
      %28 = vector.broadcast %27 : vector<2x1xf32> to vector<2x10xf32>
      %29 = arith.subf %25, %28 : vector<2x10xf32>
      %30 = math.exp %29 : vector<2x10xf32>
      %cst_18 = arith.constant dense<0.000000e+00> : vector<2xf32>
      %31 = vector.multi_reduction <add>, %30, %cst_18 [1] : vector<2x10xf32> to vector<2xf32>
      %32 = vector.shape_cast %31 : vector<2xf32> to vector<2x1xf32>
      %33 = vector.broadcast %32 : vector<2x1xf32> to vector<2x10xf32>
      %34 = arith.divf %30, %33 : vector<2x10xf32>
      %c0_19 = arith.constant 0 : index
      %c0_20 = arith.constant 0 : index
      %35 = vector.load %arg5[%c0_19, %c0_20] : memref<2x10xf32, #tpu.memory_space<vmem>>, vector<2x10xf32>
      tpu.vector_store %arg5[%c0_19, %c0_20], %34 {strides = array<i32>} : memref<2x10xf32, #tpu.memory_space<vmem>>, vector<2x10xf32>,
    } else {
    }
    return
  }
  func.func @transform_0(%arg0: i32) -> (i32, i32) {
    %c0_i32 = arith.constant 0 : i32
    %c0_i32_0 = arith.constant 0 : i32
    %c0_i32_1 = arith.constant 0 : i32
    return %c0_i32, %c0_i32_0 : i32, i32
  }
  func.func @transform_1(%arg0: i32) -> (i32, i32) {
    %c0_i32 = arith.constant 0 : i32
    %c0_i32_0 = arith.constant 0 : i32
    %c0_i32_1 = arith.constant 0 : i32
    return %c0_i32, %c0_i32_0 : i32, i32
  }
  func.func @transform_2(%arg0: i32) -> (i32, i32) {
    %c0_i32 = arith.constant 0 : i32
    %c0_i32_0 = arith.constant 0 : i32
    return %c0_i32, %arg0 : i32, i32
  }
  func.func @transform_3(%arg0: i32) -> (i32, i32) {
    %c0_i32 = arith.constant 0 : i32
    %c0_i32_0 = arith.constant 0 : i32
    return %c0_i32, %arg0 : i32, i32
  }
  func.func @transform_4(%arg0: i32) -> (i32, i32) {
    %c0_i32 = arith.constant 0 : i32
    %c0_i32_0 = arith.constant 0 : i32
    %c0_i32_1 = arith.constant 0 : i32
    return %c0_i32, %c0_i32_0 : i32, i32
  }
}

</mosaic_0001>

<llo_original>
// kernel: image_mlp_forward.1
$region0: #{image_mlp_forward.1}
  #allocation0 [shape = 'u32[]', space=smem, size = 0x4, offset = 0x4, fixed_abs, tag = 'smem constant byte address 0x4 - core index']
  #allocation1 [shape = 'u32[144,128]{1,0:T(1,128)}', space=vmem, size = 0x12000, scoped, tag = 'internal scratch']
  #allocation2 [shape = 'f32[2,10]{1,0:T(2,128)}', space=vmem, size = 0x400, scoped, tag = 'scratch operand']
  %s0 = inlined_call_operand.vmem [shape: f32[2,1], index: 0, kind: input, shape index: {}]
  %s1 = inlined_call_operand.vmem [shape: f32[2,1], index: 1, kind: input, shape index: {}]
  %s2 = inlined_call_operand.vmem [shape: f32[2,76800], index: 2, kind: input, shape index: {}]
  %s3 = inlined_call_operand.vmem [shape: s8[10,76800], index: 3, kind: input, shape index: {}]
  %s4 = inlined_call_operand.hbm [shape: f32[2,10], index: 4, kind: output, shape index: {}]
  %s5 = sld [smem:[#allocation0]]
  $region83: #{image_mlp_forward.1} parent=0
    _
  %s7 = ssub.s32 1, %s5
  %s8 = scalar_select 0, %s7, %s5
  $region1: #{image_mlp_forward.1} parent=0
    #allocation3 [shape = 'u8[614400]{0}', space=vmem, size = 0x96000, scoped, tag = 'input window, operand 3']
    #allocation4 [shape = 'u8[1024]{0}', space=vmem, size = 0x400, scoped, tag = 'output window, operand 0, single buffered']
    #allocation5 [shape = 's32[2]{0}', space=sflag, size = 0x8, scoped, tag = 'scoped memory for image_mlp_forward.1']
    %9 = vsyncpa [#allocation5], 0
    loop: start=0, step=1, limit=6
    $region2: #{image_mlp_forward.1} parent=1 // loop_pre_header
      _
    $region3: #{image_mlp_forward.1} parent=1 // loop_header
      %s11 = sphi 0, %s15
      %p12 = scmp.ge.s32.totalorder %s11, 6
      %s19 = sphi 0, %s19
      %s21 = sphi 0, %s19
      %s22 = sphi 0, %s21
      %s36 = sphi 0, %s22
      %s40 = sphi 0, %s40
      %s42 = sphi 0, %s40
      %s43 = sphi 0, %s42
      %s57 = sphi 0, %s43
      %s63 = sphi 0, %s65
      %s66 = sphi 0, %s63
      %s67 = sphi 0, %s66
      %s83 = sphi 0, %s67
      %s89 = sphi 0, %s91
      %s92 = sphi 0, %s89
      %s93 = sphi 0, %s92
      %s109 = sphi 0, %s93
      %s113 = sphi 0, %s113
      %s115 = sphi 0, %s113
      %s116 = sphi 0, %s115
      %s130 = sphi 0, %s116
    $region4: #{image_mlp_forward.1} parent=1 // loop_header_branch
      %14 = sbr.rel (%p12) target = $region8
    $region5: #{image_mlp_forward.1} parent=1 // loop_body
      %s16 = ssub.s32 %s11, 1
      %s17 = ssub.s32 %s11, 2
      %s18 = sadd.s32 %s11, 1
      %s20 = sadd.s32 %s19, 1
      %p23 = scmp.eq.s32.totalorder %s11, 3
      %p24 = scmp.ne.s32.totalorder %s19, %s21
      %p25 = scmp.eq.s32.totalorder %s11, 0
      %p26 = por %p24, %p25
      %p27 = scmp.ne.s32.totalorder %s19, %s21
      %p28 = scmp.eq.s32.totalorder %s16, 3
      %p29 = por %p27, %p28
      %p30 = scmp.ne.s32.totalorder %s21, %s22
      %p31 = scmp.eq.s32.totalorder %s16, 0
      %p32 = por %p30, %p31
      %p33 = scmp.ne.s32.totalorder %s21, %s22
      %p34 = scmp.eq.s32.totalorder %s17, 3
      %p35 = por %p33, %p34
      %p37 = scmp.ne.s32.totalorder %s22, %s36
      %p38 = scmp.eq.s32.totalorder %s17, 0
      %p39 = por %p37, %p38
      %s41 = sadd.s32 %s40, 1
      %p44 = scmp.eq.s32.totalorder %s11, 3
      %p45 = scmp.ne.s32.totalorder %s40, %s42
      %p46 = scmp.eq.s32.totalorder %s11, 0
      %p47 = por %p45, %p46
      %p48 = scmp.ne.s32.totalorder %s40, %s42
      %p49 = scmp.eq.s32.totalorder %s16, 3
      %p50 = por %p48, %p49
      %p51 = scmp.ne.s32.totalorder %s42, %s43
      %p52 = scmp.eq.s32.totalorder %s16, 0
      %p53 = por %p51, %p52
      %p54 = scmp.ne.s32.totalorder %s42, %s43
      %p55 = scmp.eq.s32.totalorder %s17, 3
      %p56 = por %p54, %p55
      %p58 = scmp.ne.s32.totalorder %s43, %s57
      %p59 = scmp.eq.s32.totalorder %s17, 0
      %p60 = por %p58, %p59
      %s61 = ssub.s32 %s11, %s18
      %p62 = scmp.eq.s32.totalorder %s61, 0
      %s64 = sadd.s32 %s63, 1
      %s65 = scalar_select %p62, %s63, %s64
      %p68 = pneg %p62
      %p69 = scmp.eq.s32.totalorder %s11, 3
      %p70 = por %p68, %p69
      %p71 = scmp.ne.s32.totalorder %s63, %s66
      %p72 = scmp.eq.s32.totalorder %s11, 0
      %p73 = por %p71, %p72
      %p74 = scmp.ne.s32.totalorder %s63, %s66
      %p75 = scmp.eq.s32.totalorder %s16, 3
      %p76 = por %p74, %p75
      %p77 = scmp.ne.s32.totalorder %s66, %s67
      %p78 = scmp.eq.s32.totalorder %s16, 0
      %p79 = por %p77, %p78
      %p80 = scmp.ne.s32.totalorder %s66, %s67
      %p81 = scmp.eq.s32.totalorder %s17, 3
      %p82 = por %p80, %p81
      %p84 = scmp.ne.s32.totalorder %s67, %s83
      %p85 = scmp.eq.s32.totalorder %s17, 0
      %p86 = por %p84, %p85
      %s87 = ssub.s32 %s11, %s18
      %p88 = scmp.eq.s32.totalorder %s87, 0
      %s90 = sadd.s32 %s89, 1
      %s91 = scalar_select %p88, %s89, %s90
      %p94 = pneg %p88
      %p95 = scmp.eq.s32.totalorder %s11, 3
      %p96 = por %p94, %p95
      %p97 = scmp.ne.s32.totalorder %s89, %s92
      %p98 = scmp.eq.s32.totalorder %s11, 0
      %p99 = por %p97, %p98
      %p100 = scmp.ne.s32.totalorder %s89, %s92
      %p101 = scmp.eq.s32.totalorder %s16, 3
      %p102 = por %p100, %p101
      %p103 = scmp.ne.s32.totalorder %s92, %s93
      %p104 = scmp.eq.s32.totalorder %s16, 0
      %p105 = por %p103, %p104
      %p106 = scmp.ne.s32.totalorder %s92, %s93
      %p107 = scmp.eq.s32.totalorder %s17, 3
      %p108 = por %p106, %p107
      %p110 = scmp.ne.s32.totalorder %s93, %s109
      %p111 = scmp.eq.s32.totalorder %s17, 0
      %p112 = por %p110, %p111
      %s114 = sadd.s32 %s113, 1
      %p117 = scmp.eq.s32.totalorder %s11, 3
      %p118 = scmp.ne.s32.totalorder %s113, %s115
      %p119 = scmp.eq.s32.totalorder %s11, 0
      %p120 = por %p118, %p119
      %p121 = scmp.ne.s32.totalorder %s113, %s115
      %p122 = scmp.eq.s32.totalorder %s16, 3
      %p123 = por %p121, %p122
      %p124 = scmp.ne.s32.totalorder %s115, %s116
      %p125 = scmp.eq.s32.totalorder %s16, 0
      %p126 = por %p124, %p125
      %p127 = scmp.ne.s32.totalorder %s115, %s116
      %p128 = scmp.eq.s32.totalorder %s17, 3
      %p129 = por %p127, %p128
      %p131 = scmp.ne.s32.totalorder %s116, %s130
      %p132 = scmp.eq.s32.totalorder %s17, 0
      %p133 = por %p131, %p132
      %p134 = scmp.le.s32.totalorder 1, %s11
      %p135 = scmp.lt.s32.totalorder %s11, 5
      %p136 = pnand %p134, %p135
      %p137 = pneg %p136
      // Predicated region
      $region9: #{image_mlp_forward.1} parent=5 // pred_check
        _
      $region10: #{image_mlp_forward.1} parent=5 // pred_check_branch
        %139 = sbr.rel (%p136) target = $region12
      $region11: #{image_mlp_forward.1} parent=5 // pred_region
        %s140 = ssub.s32 %s11, 1
        // Predicated region
        $region13: #{image_mlp_forward.1} parent=11 // pred_check
          %p141 = pneg %p32
        $region14: #{image_mlp_forward.1} parent=11 // pred_check_branch
          %143 = sbr.rel (%p141) target = $region16
        $region15: #{image_mlp_forward.1} parent=11 // pred_region
          _
        $region16: #{image_mlp_forward.1} parent=11 // pred_fallthru
          _
        // Predicated region
        $region17: #{image_mlp_forward.1} parent=11 // pred_check
          %p144 = pneg %p53
        $region18: #{image_mlp_forward.1} parent=11 // pred_check_branch
          %146 = sbr.rel (%p144) target = $region20
        $region19: #{image_mlp_forward.1} parent=11 // pred_region
          _
        $region20: #{image_mlp_forward.1} parent=11 // pred_fallthru
          _
      $region12: #{image_mlp_forward.1} parent=5 // pred_fallthru
        _
      %p147 = scmp.lt.s32.totalorder %s11, 4
      // Predicated region
      $region21: #{image_mlp_forward.1} parent=5 // pred_check
        %p148 = pneg %p147
      $region22: #{image_mlp_forward.1} parent=5 // pred_check_branch
        %150 = sbr.rel (%p148) target = $region24
      $region23: #{image_mlp_forward.1} parent=5 // pred_region
        // Predicated region
        $region25: #{image_mlp_forward.1} parent=23 // pred_check
          %p151 = pneg %p73
        $region26: #{image_mlp_forward.1} parent=23 // pred_check_branch
          %153 = sbr.rel (%p151) target = $region28
        $region27: #{image_mlp_forward.1} parent=23 // pred_region
          %s154 = smul.u32 150, %s11
          %p155 = scmp.lt.s32.totalorder %s154, 599
          %s156 = scalar_select %p155, %s154, 599
          %s157 = smul.addr %s156, 2
          %s158 = scalar_lea.vmem %s2, %s157
          %s159 = smul.u32 150, %s11
        $region28: #{image_mlp_forward.1} parent=23 // pred_fallthru
          _
        // Predicated region
        $region29: #{image_mlp_forward.1} parent=23 // pred_check
          %p160 = pneg %p99
        $region30: #{image_mlp_forward.1} parent=23 // pred_check_branch
          %162 = sbr.rel (%p160) target = $region32
        $region31: #{image_mlp_forward.1} parent=23 // pred_region
          %s163 = sand.u32 %s89, 1
          %s164 = sand.u32 %s89, 1
          %s165 = smul.addr %s164, 600
          %s166 = scalar_lea.vmem [#allocation3], %s165
          %s167 = smul.u32 150, %s11
          %s168 = smul.addr %s167, 2
          %s169 = scalar_lea.vmem %s3, %s168
          // Predicated region
          $region33: #{image_mlp_forward.1} parent=31 // pred_check
            _
          $region34: #{image_mlp_forward.1} parent=31 // pred_check_branch
            %171 = sbr.rel (0) target = $region36
          $region35: #{image_mlp_forward.1} parent=31 // pred_region
            // Predicated region
            $region37: #{image_mlp_forward.1} parent=35 // pred_check
              _
            $region38: #{image_mlp_forward.1} parent=35 // pred_check_branch
              %173 = sbr.rel (0) target = $region40
            $region39: #{image_mlp_forward.1} parent=35 // pred_region
              %s174 = scalar_lea.vmem %s169, 296
              %s175 = scalar_lea.vmem %s166, 296 [#allocation3]
              loop: start=0, step=1, limit=1
              $region41: #{image_mlp_forward.1} parent=39 // loop_pre_header
                _
              $region42: #{image_mlp_forward.1} parent=39 // loop_header
                %s177 = sphi 0, %s181
                %p178 = scmp.ge.s32.totalorder %s177, 1
                %s182 = sphi %s169, %s169
                %s183 = sphi %s166, %s166
              $region43: #{image_mlp_forward.1} parent=39 // loop_header_branch
                %180 = sbr.rel (%p178) target = $region47
              $region44: #{image_mlp_forward.1} parent=39 // loop_body
                %v184 = vld [vmem:[%s182] sm:$0xff]
                %185 = vst [vmem:[%s183] sm:$0xff] %v184
                %v186 = vld [vmem:[%s182 + $0x8] sm:$0xff]
                %187 = vst [vmem:[%s183 + $0x8] sm:$0xff] %v186
                %v188 = vld [vmem:[%s182 + $0x10] sm:$0xff]
                %189 = vst [vmem:[%s183 + $0x10] sm:$0xff] %v188
                %v190 = vld [vmem:[%s182 + $0x18] sm:$0xff]
                %191 = vst [vmem:[%s183 + $0x18] sm:$0xff] %v190
                %v192 = vld [vmem:[%s182 + $0x20] sm:$0xff]
                %193 = vst [vmem:[%s183 + $0x20] sm:$0xff] %v192
                %v194 = vld [vmem:[%s182 + $0x28] sm:$0xff]
                %195 = vst [vmem:[%s183 + $0x28] sm:$0xff] %v194
                %v196 = vld [vmem:[%s182 + $0x30] sm:$0xff]
                %197 = vst [vmem:[%s183 + $0x30] sm:$0xff] %v196
                %v198 = vld [vmem:[%s182 + $0x38] sm:$0xff]
                %199 = vst [vmem:[%s183 + $0x38] sm:$0xff] %v198
                %v200 = vld [vmem:[%s182 + $0x40] sm:$0xff]
                %201 = vst [vmem:[%s183 + $0x40] sm:$0xff] %v200
                %v202 = vld [vmem:[%s182 + $0x48] sm:$0xff]
                %203 = vst [vmem:[%s183 + $0x48] sm:$0xff] %v202
                %v204 = vld [vmem:[%s182 + $0x50] sm:$0xff]
                %205 = vst [vmem:[%s183 + $0x50] sm:$0xff] %v204
                %v206 = vld [vmem:[%s182 + $0x58] sm:$0xff]
                %207 = vst [vmem:[%s183 + $0x58] sm:$0xff] %v206
                %v208 = vld [vmem:[%s182 + $0x60] sm:$0xff]
                %209 = vst [vmem:[%s183 + $0x60] sm:$0xff] %v208
                %v210 = vld [vmem:[%s182 + $0x68] sm:$0xff]
                %211 = vst [vmem:[%s183 + $0x68] sm:$0xff] %v210
                %v212 = vld [vmem:[%s182 + $0x70] sm:$0xff]
                %213 = vst [vmem:[%s183 + $0x70] sm:$0xff] %v212
                %v214 = vld [vmem:[%s182 + $0x78] sm:$0xff]
                %215 = vst [vmem:[%s183 + $0x78] sm:$0xff] %v214
                %v216 = vld [vmem:[%s182 + $0x80] sm:$0xff]
                %217 = vst [vmem:[%s183 + $0x80] sm:$0xff] %v216
                %v218 = vld [vmem:[%s182 + $0x88] sm:$0xff]
                %219 = vst [vmem:[%s183 + $0x88] sm:$0xff] %v218
                %v220 = vld [vmem:[%s182 + $0x90] sm:$0xff]
                %221 = vst [vmem:[%s183 + $0x90] sm:$0xff] %v220
                %v222 = vld [vmem:[%s182 + $0x98] sm:$0xff]
                %223 = vst [vmem:[%s183 + $0x98] sm:$0xff] %v222
                %v224 = vld [vmem:[%s182 + $0xa0] sm:$0xff]
                %225 = vst [vmem:[%s183 + $0xa0] sm:$0xff] %v224
                %v226 = vld [vmem:[%s182 + $0xa8] sm:$0xff]
                %227 = vst [vmem:[%s183 + $0xa8] sm:$0xff] %v226
                %v228 = vld [vmem:[%s182 + $0xb0] sm:$0xff]
                %229 = vst [vmem:[%s183 + $0xb0] sm:$0xff] %v228
                %v230 = vld [vmem:[%s182 + $0xb8] sm:$0xff]
                %231 = vst [vmem:[%s183 + $0xb8] sm:$0xff] %v230
                %v232 = vld [vmem:[%s182 + $0xc0] sm:$0xff]
                %233 = vst [vmem:[%s183 + $0xc0] sm:$0xff] %v232
                %v234 = vld [vmem:[%s182 + $0xc8] sm:$0xff]
                %235 = vst [vmem:[%s183 + $0xc8] sm:$0xff] %v234
                %v236 = vld [vmem:[%s182 + $0xd0] sm:$0xff]
                %237 = vst [vmem:[%s183 + $0xd0] sm:$0xff] %v236
                %v238 = vld [vmem:[%s182 + $0xd8] sm:$0xff]
                %239 = vst [vmem:[%s183 + $0xd8] sm:$0xff] %v238
                %v240 = vld [vmem:[%s182 + $0xe0] sm:$0xff]
                %241 = vst [vmem:[%s183 + $0xe0] sm:$0xff] %v240
                %v242 = vld [vmem:[%s182 + $0xe8] sm:$0xff]
                %243 = vst [vmem:[%s183 + $0xe8] sm:$0xff] %v242
                %v244 = vld [vmem:[%s182 + $0xf0] sm:$0xff]
                %245 = vst [vmem:[%s183 + $0xf0] sm:$0xff] %v244
                %v246 = vld [vmem:[%s182 + $0xf8] sm:$0xff]
                %247 = vst [vmem:[%s183 + $0xf8] sm:$0xff] %v246
                %v248 = vld [vmem:[%s182 + $0x100] sm:$0xff]
                %249 = vst [vmem:[%s183 + $0x100] sm:$0xff] %v248
                %v250 = vld [vmem:[%s182 + $0x108] sm:$0xff]
                %251 = vst [vmem:[%s183 + $0x108] sm:$0xff] %v250
                %v252 = vld [vmem:[%s182 + $0x110] sm:$0xff]
                %253 = vst [vmem:[%s183 + $0x110] sm:$0xff] %v252
                %v254 = vld [vmem:[%s182 + $0x118] sm:$0xff]
                %255 = vst [vmem:[%s183 + $0x118] sm:$0xff] %v254
                %v256 = vld [vmem:[%s182 + $0x120] sm:$0xff]
                %257 = vst [vmem:[%s183 + $0x120] sm:$0xff] %v256
                %v258 = vld [vmem:[%s182 + $0x4b0] sm:$0xff]
                %259 = vst [vmem:[%s183 + $0x12c] sm:$0xff] %v258
                %v260 = vld [vmem:[%s182 + $0x4b8] sm:$0xff]
                %261 = vst [vmem:[%s183 + $0x134] sm:$0xff] %v260
                %v262 = vld [vmem:[%s182 + $0x4c0] sm:$0xff]
                %263 = vst [vmem:[%s183 + $0x13c] sm:$0xff] %v262
                %v264 = vld [vmem:[%s182 + $0x4c8] sm:$0xff]
                %265 = vst [vmem:[%s183 + $0x144] sm:$0xff] %v264
                %v266 = vld [vmem:[%s182 + $0x4d0] sm:$0xff]
                %267 = vst [vmem:[%s183 + $0x14c] sm:$0xff] %v266
                %v268 = vld [vmem:[%s182 + $0x4d8] sm:$0xff]
                %269 = vst [vmem:[%s183 + $0x154] sm:$0xff] %v268
                %v270 = vld [vmem:[%s182 + $0x4e0] sm:$0xff]
                %271 = vst [vmem:[%s183 + $0x15c] sm:$0xff] %v270
                %v272 = vld [vmem:[%s182 + $0x4e8] sm:$0xff]
                %273 = vst [vmem:[%s183 + $0x164] sm:$0xff] %v272
                %v274 = vld [vmem:[%s182 + $0x4f0] sm:$0xff]
                %275 = vst [vmem:[%s183 + $0x16c] sm:$0xff] %v274
                %v276 = vld [vmem:[%s182 + $0x4f8] sm:$0xff]
                %277 = vst [vmem:[%s183 + $0x174] sm:$0xff] %v276
                %v278 = vld [vmem:[%s182 + $0x500] sm:$0xff]
                %279 = vst [vmem:[%s183 + $0x17c] sm:$0xff] %v278
                %v280 = vld [vmem:[%s182 + $0x508] sm:$0xff]
                %281 = vst [vmem:[%s183 + $0x184] sm:$0xff] %v280
                %v282 = vld [vmem:[%s182 + $0x510] sm:$0xff]
                %283 = vst [vmem:[%s183 + $0x18c] sm:$0xff] %v282
                %v284 = vld [vmem:[%s182 + $0x518] sm:$0xff]
                %285 = vst [vmem:[%s183 + $0x194] sm:$0xff] %v284
                %v286 = vld [vmem:[%s182 + $0x520] sm:$0xff]
                %287 = vst [vmem:[%s183 + $0x19c] sm:$0xff] %v286
                %v288 = vld [vmem:[%s182 + $0x528] sm:$0xff]
                %289 = vst [vmem:[%s183 + $0x1a4] sm:$0xff] %v288
                %v290 = vld [vmem:[%s182 + $0x530] sm:$0xff]
                %291 = vst [vmem:[%s183 + $0x1ac] sm:$0xff] %v290
                %v292 = vld [vmem:[%s182 + $0x538] sm:$0xff]
                %293 = vst [vmem:[%s183 + $0x1b4] sm:$0xff] %v292
                %v294 = vld [vmem:[%s182 + $0x540] sm:$0xff]
                %295 = vst [vmem:[%s183 + $0x1bc] sm:$0xff] %v294
                %v296 = vld [vmem:[%s182 + $0x548] sm:$0xff]
                %297 = vst [vmem:[%s183 + $0x1c4] sm:$0xff] %v296
                %v298 = vld [vmem:[%s182 + $0x550] sm:$0xff]
                %299 = vst [vmem:[%s183 + $0x1cc] sm:$0xff] %v298
                %v300 = vld [vmem:[%s182 + $0x558] sm:$0xff]
                %301 = vst [vmem:[%s183 + $0x1d4] sm:$0xff] %v300
                %v302 = vld [vmem:[%s182 + $0x560] sm:$0xff]
                %303 = vst [vmem:[%s183 + $0x1dc] sm:$0xff] %v302
                %v304 = vld [vmem:[%s182 + $0x568] sm:$0xff]
                %305 = vst [vmem:[%s183 + $0x1e4] sm:$0xff] %v304
                %v306 = vld [vmem:[%s182 + $0x570] sm:$0xff]
                %307 = vst [vmem:[%s183 + $0x1ec] sm:$0xff] %v306
                %v308 = vld [vmem:[%s182 + $0x578] sm:$0xff]
                %309 = vst [vmem:[%s183 + $0x1f4] sm:$0xff] %v308
                %v310 = vld [vmem:[%s182 + $0x580] sm:$0xff]
                %311 = vst [vmem:[%s183 + $0x1fc] sm:$0xff] %v310
                %v312 = vld [vmem:[%s182 + $0x588] sm:$0xff]
                %313 = vst [vmem:[%s183 + $0x204] sm:$0xff] %v312
                %v314 = vld [vmem:[%s182 + $0x590] sm:$0xff]
                %315 = vst [vmem:[%s183 + $0x20c] sm:$0xff] %v314
                %v316 = vld [vmem:[%s182 + $0x598] sm:$0xff]
                %317 = vst [vmem:[%s183 + $0x214] sm:$0xff] %v316
                %v318 = vld [vmem:[%s182 + $0x5a0] sm:$0xff]
                %319 = vst [vmem:[%s183 + $0x21c] sm:$0xff] %v318
                %v320 = vld [vmem:[%s182 + $0x5a8] sm:$0xff]
                %321 = vst [vmem:[%s183 + $0x224] sm:$0xff] %v320
                %v322 = vld [vmem:[%s182 + $0x5b0] sm:$0xff]
                %323 = vst [vmem:[%s183 + $0x22c] sm:$0xff] %v322
                %v324 = vld [vmem:[%s182 + $0x5b8] sm:$0xff]
                %325 = vst [vmem:[%s183 + $0x234] sm:$0xff] %v324
                %v326 = vld [vmem:[%s182 + $0x5c0] sm:$0xff]
                %327 = vst [vmem:[%s183 + $0x23c] sm:$0xff] %v326
                %v328 = vld [vmem:[%s182 + $0x5c8] sm:$0xff]
                %329 = vst [vmem:[%s183 + $0x244] sm:$0xff] %v328
                %v330 = vld [vmem:[%s182 + $0x5d0] sm:$0xff]
                %331 = vst [vmem:[%s183 + $0x24c] sm:$0xff] %v330
              $region45: #{image_mlp_forward.1} parent=39 // loop_footer
                %s181 = sadd.s32 1, %s177
              $region46: #{image_mlp_forward.1} parent=39 // loop_footer_branch
                %176 = sbr.rel target = $region42
              $region47: #{image_mlp_forward.1} parent=39 // loop_exit
                _
              loop: start=0, step=1, limit=1
              $region48: #{image_mlp_forward.1} parent=39 // loop_pre_header
                _
              $region49: #{image_mlp_forward.1} parent=39 // loop_header
                %s334 = sphi 0, %s338
                %p335 = scmp.ge.s32.totalorder %s334, 1
                %s339 = sphi %s174, %s174
                %s340 = sphi %s175, %s175
              $region50: #{image_mlp_forward.1} parent=39 // loop_header_branch
                %337 = sbr.rel (%p335) target = $region54
              $region51: #{image_mlp_forward.1} parent=39 // loop_body
                %v341 = vld [vmem:[%s339] sm:$0xf]
                %342 = vst [vmem:[%s340] sm:$0xf] %v341
                %v343 = vld [vmem:[%s339 + $0x4b0] sm:$0xf]
                %344 = vst [vmem:[%s340 + $0x12c] sm:$0xf] %v343
              $region52: #{image_mlp_forward.1} parent=39 // loop_footer
                %s338 = sadd.s32 1, %s334
              $region53: #{image_mlp_forward.1} parent=39 // loop_footer_branch
                %333 = sbr.rel target = $region49
              $region54: #{image_mlp_forward.1} parent=39 // loop_exit
                _
            $region40: #{image_mlp_forward.1} parent=35 // pred_fallthru
              _
          $region36: #{image_mlp_forward.1} parent=31 // pred_fallthru
            _
          %345 = vnop
        $region32: #{image_mlp_forward.1} parent=23 // pred_fallthru
          _
      $region24: #{image_mlp_forward.1} parent=5 // pred_fallthru
        _
      %p346 = scmp.le.s32.totalorder 1, %s11
      %p347 = scmp.lt.s32.totalorder %s11, 5
      %p348 = pnand %p346, %p347
      %p349 = pneg %p348
      // Predicated region
      $region55: #{image_mlp_forward.1} parent=5 // pred_check
        _
      $region56: #{image_mlp_forward.1} parent=5 // pred_check_branch
        %351 = sbr.rel (%p348) target = $region58
      $region57: #{image_mlp_forward.1} parent=5 // pred_region
        %s352 = ssub.s32 %s11, 1
        %s353 = sand.u32 %s92, 1
        %s354 = sand.u32 %s92, 1
        %s355 = smul.addr %s354, 600
        %s356 = scalar_lea.vmem [#allocation3], %s355
        // Predicated region
        $region59: #{image_mlp_forward.1} parent=57 // pred_check
          %p357 = pneg %p105
        $region60: #{image_mlp_forward.1} parent=57 // pred_check_branch
          %359 = sbr.rel (%p357) target = $region62
        $region61: #{image_mlp_forward.1} parent=57 // pred_region
          _
        $region62: #{image_mlp_forward.1} parent=57 // pred_fallthru
          _
        %p360 = pneg %p32
        %p361 = pneg %p29
        %p362 = pneg %p53
        %p363 = pneg %p50
        %s364 = smul.u32 150, %s16
        %p365 = scmp.lt.s32.totalorder %s364, 599
        %s366 = scalar_select %p365, %s364, 599
        %s367 = smul.addr %s366, 2
        %s368 = scalar_lea.vmem %s2, %s367
        %p369 = pneg %p79
        %p370 = pneg %p76
        %s371 = sand.u32 %s92, 1
        %s372 = sand.u32 %s92, 1
        %s373 = smul.addr %s372, 600
        %s374 = scalar_lea.vmem [#allocation3], %s373
        %p375 = pneg %p105
        %p376 = pneg %p102
        %p377 = pneg %p126
        %p378 = pneg %p123
        %s379 = smul.u32 150, %s16
        %p380 = scmp.lt.s32.totalorder %s379, 599
        %s381 = scalar_select %p380, %s379, 599
        %s382 = smul.addr %s381, 2
        %s383 = scalar_lea.vmem %s2, %s382
        %s384 = smul.u32 150, %s16
        %s385 = smul.u32 150, %s16
        %p387 = scmp.eq.s32.totalorder %s16, 0
        // Predicated region
        $region63: #{image_mlp_forward.1} parent=57 // pred_check
          %p388 = pneg %p387
        $region64: #{image_mlp_forward.1} parent=57 // pred_check_branch
          %390 = sbr.rel (%p388) target = $region66
        $region65: #{image_mlp_forward.1} parent=57 // pred_region
          %vm391 = vcmask 74752
          %392 = vst.msk [vmem:[#allocation2] sm:$0x3] %vm391, 0.0
        $region66: #{image_mlp_forward.1} parent=57 // pred_fallthru
          _
        %v393 = vld [vmem:[%s383] sm:$0xff]
        %v394 = vld [vmem:[%s383 + $0x8] sm:$0xff]
        %v395 = vld [vmem:[%s383 + $0x10] sm:$0xff]
        %v396 = vld [vmem:[%s383 + $0x18] sm:$0xff]
        %v397 = vld [vmem:[%s383 + $0x20] sm:$0xff]
        %v398 = vld [vmem:[%s383 + $0x28] sm:$0xff]
        %v399 = vld [vmem:[%s383 + $0x30] sm:$0xff]
        %v400 = vld [vmem:[%s383 + $0x38] sm:$0xff]
        %v401 = vld [vmem:[%s383 + $0x40] sm:$0xff]
        %v402 = vld [vmem:[%s383 + $0x48] sm:$0xff]
        %v403 = vld [vmem:[%s383 + $0x50] sm:$0xff]
        %v404 = vld [vmem:[%s383 + $0x58] sm:$0xff]
        %v405 = vld [vmem:[%s383 + $0x60] sm:$0xff]
        %v406 = vld [vmem:[%s383 + $0x68] sm:$0xff]
        %v407 = vld [vmem:[%s383 + $0x70] sm:$0xff]
        %v408 = vld [vmem:[%s383 + $0x78] sm:$0xff]
        %v409 = vld [vmem:[%s383 + $0x80] sm:$0xff]
        %v410 = vld [vmem:[%s383 + $0x88] sm:$0xff]
        %v411 = vld [vmem:[%s383 + $0x90] sm:$0xff]
        %v412 = vld [vmem:[%s383 + $0x98] sm:$0xff]
        %v413 = vld [vmem:[%s383 + $0xa0] sm:$0xff]
        %v414 = vld [vmem:[%s383 + $0xa8] sm:$0xff]
        %v415 = vld [vmem:[%s383 + $0xb0] sm:$0xff]
        %v416 = vld [vmem:[%s383 + $0xb8] sm:$0xff]
        %v417 = vld [vmem:[%s383 + $0xc0] sm:$0xff]
        %v418 = vld [vmem:[%s383 + $0xc8] sm:$0xff]
        %v419 = vld [vmem:[%s383 + $0xd0] sm:$0xff]
        %v420 = vld [vmem:[%s383 + $0xd8] sm:$0xff]
        %v421 = vld [vmem:[%s383 + $0xe0] sm:$0xff]
        %v422 = vld [vmem:[%s383 + $0xe8] sm:$0xff]
        %v423 = vld [vmem:[%s383 + $0xf0] sm:$0xff]
        %v424 = vld [vmem:[%s383 + $0xf8] sm:$0xff]
        %v425 = vld [vmem:[%s383 + $0x100] sm:$0xff]
        %v426 = vld [vmem:[%s383 + $0x108] sm:$0xff]
        %v427 = vld [vmem:[%s383 + $0x110] sm:$0xff]
        %v428 = vld [vmem:[%s383 + $0x118] sm:$0xff]
        %v429 = vld [vmem:[%s383 + $0x120] sm:$0xff]
        %v430 = vld [vmem:[%s383 + $0x128] sm:$0xf]
        %v431 = vld [vmem:[%s0] sm:$0x3]
        %433 = vset.pattern.permute.xlu0 0
        %434 = vperm.xlu0 %433, %v431
        %v435 = vpop.permute.xlu0 %434
        %v437 = vunpack.c.l.s4 269488144
        %v438 = vunpack.c.0.s8 %v437
        %v439 = vlaneseq
        %v440 = vshrl.u32 %v439, 7
        %v441 = vsub.s32 %v438, %v440
        %v442 = vrot.slane %v435, %v441
        %v444 = vmul.f32 %v393, %v442
        %v445 = vmul.f32 %v394, %v442
        %v446 = vmul.f32 %v395, %v442
        %v447 = vmul.f32 %v396, %v442
        %v448 = vmul.f32 %v397, %v442
        %v449 = vmul.f32 %v398, %v442
        %v450 = vmul.f32 %v399, %v442
        %v451 = vmul.f32 %v400, %v442
        %v452 = vmul.f32 %v401, %v442
        %v453 = vmul.f32 %v402, %v442
        %v454 = vmul.f32 %v403, %v442
        %v455 = vmul.f32 %v404, %v442
        %v456 = vmul.f32 %v405, %v442
        %v457 = vmul.f32 %v406, %v442
        %v458 = vmul.f32 %v407, %v442
        %v459 = vmul.f32 %v408, %v442
        %v460 = vmul.f32 %v409, %v442
        %v461 = vmul.f32 %v410, %v442
        %v462 = vmul.f32 %v411, %v442
        %v463 = vmul.f32 %v412, %v442
        %v464 = vmul.f32 %v413, %v442
        %v465 = vmul.f32 %v414, %v442
        %v466 = vmul.f32 %v415, %v442
        %v467 = vmul.f32 %v416, %v442
        %v468 = vmul.f32 %v417, %v442
        %v469 = vmul.f32 %v418, %v442
        %v470 = vmul.f32 %v419, %v442
        %v471 = vmul.f32 %v420, %v442
        %v472 = vmul.f32 %v421, %v442
        %v473 = vmul.f32 %v422, %v442
        %v474 = vmul.f32 %v423, %v442
        %v475 = vmul.f32 %v424, %v442
        %v476 = vmul.f32 %v425, %v442
        %v477 = vmul.f32 %v426, %v442
        %v478 = vmul.f32 %v427, %v442
        %v479 = vmul.f32 %v428, %v442
        %v480 = vmul.f32 %v429, %v442
        %v481 = vmul.f32 %v430, %v442
        %v482 = vround.ne.pseudo %v444
        %v483 = vround.ne.pseudo %v445
        %v484 = vround.ne.pseudo %v446
        %v485 = vround.ne.pseudo %v447
        %v486 = vround.ne.pseudo %v448
        %v487 = vround.ne.pseudo %v449
        %v488 = vround.ne.pseudo %v450
        %v489 = vround.ne.pseudo %v451
        %v490 = vround.ne.pseudo %v452
        %v491 = vround.ne.pseudo %v453
        %v492 = vround.ne.pseudo %v454
        %v493 = vround.ne.pseudo %v455
        %v494 = vround.ne.pseudo %v456
        %v495 = vround.ne.pseudo %v457
        %v496 = vround.ne.pseudo %v458
        %v497 = vround.ne.pseudo %v459
        %v498 = vround.ne.pseudo %v460
        %v499 = vround.ne.pseudo %v461
        %v500 = vround.ne.pseudo %v462
        %v501 = vround.ne.pseudo %v463
        %v502 = vround.ne.pseudo %v464
        %v503 = vround.ne.pseudo %v465
        %v504 = vround.ne.pseudo %v466
        %v505 = vround.ne.pseudo %v467
        %v506 = vround.ne.pseudo %v468
        %v507 = vround.ne.pseudo %v469
        %v508 = vround.ne.pseudo %v470
        %v509 = vround.ne.pseudo %v471
        %v510 = vround.ne.pseudo %v472
        %v511 = vround.ne.pseudo %v473
        %v512 = vround.ne.pseudo %v474
        %v513 = vround.ne.pseudo %v475
        %v514 = vround.ne.pseudo %v476
        %v515 = vround.ne.pseudo %v477
        %v516 = vround.ne.pseudo %v478
        %v517 = vround.ne.pseudo %v479
        %v518 = vround.ne.pseudo %v480
        %v519 = vround.ne.pseudo %v481
        %v520 = vmax.f32 %v482, -128.0
        %v521 = vmax.f32 %v483, -128.0
        %v522 = vmax.f32 %v484, -128.0
        %v523 = vmax.f32 %v485, -128.0
        %v524 = vmax.f32 %v486, -128.0
        %v525 = vmax.f32 %v487, -128.0
        %v526 = vmax.f32 %v488, -128.0
        %v527 = vmax.f32 %v489, -128.0
        %v528 = vmax.f32 %v490, -128.0
        %v529 = vmax.f32 %v491, -128.0
        %v530 = vmax.f32 %v492, -128.0
        %v531 = vmax.f32 %v493, -128.0
        %v532 = vmax.f32 %v494, -128.0
        %v533 = vmax.f32 %v495, -128.0
        %v534 = vmax.f32 %v496, -128.0
        %v535 = vmax.f32 %v497, -128.0
        %v536 = vmax.f32 %v498, -128.0
        %v537 = vmax.f32 %v499, -128.0
        %v538 = vmax.f32 %v500, -128.0
        %v539 = vmax.f32 %v501, -128.0
        %v540 = vmax.f32 %v502, -128.0
        %v541 = vmax.f32 %v503, -128.0
        %v542 = vmax.f32 %v504, -128.0
        %v543 = vmax.f32 %v505, -128.0
        %v544 = vmax.f32 %v506, -128.0
        %v545 = vmax.f32 %v507, -128.0
        %v546 = vmax.f32 %v508, -128.0
        %v547 = vmax.f32 %v509, -128.0
        %v548 = vmax.f32 %v510, -128.0
        %v549 = vmax.f32 %v511, -128.0
        %v550 = vmax.f32 %v512, -128.0
        %v551 = vmax.f32 %v513, -128.0
        %v552 = vmax.f32 %v514, -128.0
        %v553 = vmax.f32 %v515, -128.0
        %v554 = vmax.f32 %v516, -128.0
        %v555 = vmax.f32 %v517, -128.0
        %v556 = vmax.f32 %v518, -128.0
        %v557 = vmax.f32 %v519, -128.0
        %v558 = vmin.f32 %v520, 127.0
        %v559 = vmin.f32 %v521, 127.0
        %v560 = vmin.f32 %v522, 127.0
        %v561 = vmin.f32 %v523, 127.0
        %v562 = vmin.f32 %v524, 127.0
        %v563 = vmin.f32 %v525, 127.0
        %v564 = vmin.f32 %v526, 127.0
        %v565 = vmin.f32 %v527, 127.0
        %v566 = vmin.f32 %v528, 127.0
        %v567 = vmin.f32 %v529, 127.0
        %v568 = vmin.f32 %v530, 127.0
        %v569 = vmin.f32 %v531, 127.0
        %v570 = vmin.f32 %v532, 127.0
        %v571 = vmin.f32 %v533, 127.0
        %v572 = vmin.f32 %v534, 127.0
        %v573 = vmin.f32 %v535, 127.0
        %v574 = vmin.f32 %v536, 127.0
        %v575 = vmin.f32 %v537, 127.0
        %v576 = vmin.f32 %v538, 127.0
        %v577 = vmin.f32 %v539, 127.0
        %v578 = vmin.f32 %v540, 127.0
        %v579 = vmin.f32 %v541, 127.0
        %v580 = vmin.f32 %v542, 127.0
        %v581 = vmin.f32 %v543, 127.0
        %v582 = vmin.f32 %v544, 127.0
        %v583 = vmin.f32 %v545, 127.0
        %v584 = vmin.f32 %v546, 127.0
        %v585 = vmin.f32 %v547, 127.0
        %v586 = vmin.f32 %v548, 127.0
        %v587 = vmin.f32 %v549, 127.0
        %v588 = vmin.f32 %v550, 127.0
        %v589 = vmin.f32 %v551, 127.0
        %v590 = vmin.f32 %v552, 127.0
        %v591 = vmin.f32 %v553, 127.0
        %v592 = vmin.f32 %v554, 127.0
        %v593 = vmin.f32 %v555, 127.0
        %v594 = vmin.f32 %v556, 127.0
        %v595 = vmin.f32 %v557, 127.0
        %v596 = vld [vmem:[#allocation2] sm:$0x3]
        %v635 = vcombine.high %v558, %v558
        %v637 = vunpack.c.l.s4 1983009808
        %v638 = vunpack.c.0.s8 %v637
        %v639 = vlaneseq
        %v640 = vshrl.u32 %v639, 7
        %v641 = vsub.s32 %v638, %v640
        %v642 = vrot.slane %v558, %v641
        %v644 = vunpack.c.l.s4 1983009808
        %v645 = vunpack.c.0.s8 %v644
        %v646 = vlaneseq
        %v647 = vshrl.u32 %v646, 7
        %v648 = vsub.s32 %v645, %v647
        %v649 = vrot.slane %v635, %v648
        %v650 = vcombine.high %v642, %v642
        %v651 = vcombine.high %v649, %v649
        %v652 = vcombine.high %v559, %v559
        %v654 = vunpack.c.l.s4 1983009808
        %v655 = vunpack.c.0.s8 %v654
        %v656 = vlaneseq
        %v657 = vshrl.u32 %v656, 7
        %v658 = vsub.s32 %v655, %v657
        %v659 = vrot.slane %v559, %v658
        %v661 = vunpack.c.l.s4 1983009808
        %v662 = vunpack.c.0.s8 %v661
        %v663 = vlaneseq
        %v664 = vshrl.u32 %v663, 7
        %v665 = vsub.s32 %v662, %v664
        %v666 = vrot.slane %v652, %v665
        %v667 = vcombine.high %v659, %v659
        %v668 = vcombine.high %v666, %v666
        %v669 = vcombine.high %v560, %v560
        %v671 = vunpack.c.l.s4 1983009808
        %v672 = vunpack.c.0.s8 %v671
        %v673 = vlaneseq
        %v674 = vshrl.u32 %v673, 7
        %v675 = vsub.s32 %v672, %v674
        %v676 = vrot.slane %v560, %v675
        %v678 = vunpack.c.l.s4 1983009808
        %v679 = vunpack.c.0.s8 %v678
        %v680 = vlaneseq
        %v681 = vshrl.u32 %v680, 7
        %v682 = vsub.s32 %v679, %v681
        %v683 = vrot.slane %v669, %v682
        %v684 = vcombine.high %v676, %v676
        %v685 = vcombine.high %v683, %v683
        %v686 = vcombine.high %v561, %v561
        %v688 = vunpack.c.l.s4 1983009808
        %v689 = vunpack.c.0.s8 %v688
        %v690 = vlaneseq
        %v691 = vshrl.u32 %v690, 7
        %v692 = vsub.s32 %v689, %v691
        %v693 = vrot.slane %v561, %v692
        %v695 = vunpack.c.l.s4 1983009808
        %v696 = vunpack.c.0.s8 %v695
        %v697 = vlaneseq
        %v698 = vshrl.u32 %v697, 7
        %v699 = vsub.s32 %v696, %v698
        %v700 = vrot.slane %v686, %v699
        %v701 = vcombine.high %v693, %v693
        %v702 = vcombine.high %v700, %v700
        %v703 = vcombine.high %v562, %v562
        %v705 = vunpack.c.l.s4 1983009808
        %v706 = vunpack.c.0.s8 %v705
        %v707 = vlaneseq
        %v708 = vshrl.u32 %v707, 7
        %v709 = vsub.s32 %v706, %v708
        %v710 = vrot.slane %v562, %v709
        %v712 = vunpack.c.l.s4 1983009808
        %v713 = vunpack.c.0.s8 %v712
        %v714 = vlaneseq
        %v715 = vshrl.u32 %v714, 7
        %v716 = vsub.s32 %v713, %v715
        %v717 = vrot.slane %v703, %v716
        %v718 = vcombine.high %v710, %v710
        %v719 = vcombine.high %v717, %v717
        %v720 = vcombine.high %v563, %v563
        %v722 = vunpack.c.l.s4 1983009808
        %v723 = vunpack.c.0.s8 %v722
        %v724 = vlaneseq
        %v725 = vshrl.u32 %v724, 7
        %v726 = vsub.s32 %v723, %v725
        %v727 = vrot.slane %v563, %v726
        %v729 = vunpack.c.l.s4 1983009808
        %v730 = vunpack.c.0.s8 %v729
        %v731 = vlaneseq
        %v732 = vshrl.u32 %v731, 7
        %v733 = vsub.s32 %v730, %v732
        %v734 = vrot.slane %v720, %v733
        %v735 = vcombine.high %v727, %v727
        %v736 = vcombine.high %v734, %v734
        %v737 = vcombine.high %v564, %v564
        %v739 = vunpack.c.l.s4 1983009808
        %v740 = vunpack.c.0.s8 %v739
        %v741 = vlaneseq
        %v742 = vshrl.u32 %v741, 7
        %v743 = vsub.s32 %v740, %v742
        %v744 = vrot.slane %v564, %v743
        %v746 = vunpack.c.l.s4 1983009808
        %v747 = vunpack.c.0.s8 %v746
        %v748 = vlaneseq
        %v749 = vshrl.u32 %v748, 7
        %v750 = vsub.s32 %v747, %v749
        %v751 = vrot.slane %v737, %v750
        %v752 = vcombine.high %v744, %v744
        %v753 = vcombine.high %v751, %v751
        %v754 = vcombine.high %v565, %v565
        %v756 = vunpack.c.l.s4 1983009808
        %v757 = vunpack.c.0.s8 %v756
        %v758 = vlaneseq
        %v759 = vshrl.u32 %v758, 7
        %v760 = vsub.s32 %v757, %v759
        %v761 = vrot.slane %v565, %v760
        %v763 = vunpack.c.l.s4 1983009808
        %v764 = vunpack.c.0.s8 %v763
        %v765 = vlaneseq
        %v766 = vshrl.u32 %v765, 7
        %v767 = vsub.s32 %v764, %v766
        %v768 = vrot.slane %v754, %v767
        %v769 = vcombine.high %v761, %v761
        %v770 = vcombine.high %v768, %v768
        %v771 = vcombine.high %v566, %v566
        %v773 = vunpack.c.l.s4 1983009808
        %v774 = vunpack.c.0.s8 %v773
        %v775 = vlaneseq
        %v776 = vshrl.u32 %v775, 7
        %v777 = vsub.s32 %v774, %v776
        %v778 = vrot.slane %v566, %v777
        %v780 = vunpack.c.l.s4 1983009808
        %v781 = vunpack.c.0.s8 %v780
        %v782 = vlaneseq
        %v783 = vshrl.u32 %v782, 7
        %v784 = vsub.s32 %v781, %v783
        %v785 = vrot.slane %v771, %v784
        %v786 = vcombine.high %v778, %v778
        %v787 = vcombine.high %v785, %v785
        %v788 = vcombine.high %v567, %v567
        %v790 = vunpack.c.l.s4 1983009808
        %v791 = vunpack.c.0.s8 %v790
        %v792 = vlaneseq
        %v793 = vshrl.u32 %v792, 7
        %v794 = vsub.s32 %v791, %v793
        %v795 = vrot.slane %v567, %v794
        %v797 = vunpack.c.l.s4 1983009808
        %v798 = vunpack.c.0.s8 %v797
        %v799 = vlaneseq
        %v800 = vshrl.u32 %v799, 7
        %v801 = vsub.s32 %v798, %v800
        %v802 = vrot.slane %v788, %v801
        %v803 = vcombine.high %v795, %v795
        %v804 = vcombine.high %v802, %v802
        %v805 = vcombine.high %v568, %v568
        %v807 = vunpack.c.l.s4 1983009808
        %v808 = vunpack.c.0.s8 %v807
        %v809 = vlaneseq
        %v810 = vshrl.u32 %v809, 7
        %v811 = vsub.s32 %v808, %v810
        %v812 = vrot.slane %v568, %v811
        %v814 = vunpack.c.l.s4 1983009808
        %v815 = vunpack.c.0.s8 %v814
        %v816 = vlaneseq
        %v817 = vshrl.u32 %v816, 7
        %v818 = vsub.s32 %v815, %v817
        %v819 = vrot.slane %v805, %v818
        %v820 = vcombine.high %v812, %v812
        %v821 = vcombine.high %v819, %v819
        %v822 = vcombine.high %v569, %v569
        %v824 = vunpack.c.l.s4 1983009808
        %v825 = vunpack.c.0.s8 %v824
        %v826 = vlaneseq
        %v827 = vshrl.u32 %v826, 7
        %v828 = vsub.s32 %v825, %v827
        %v829 = vrot.slane %v569, %v828
        %v831 = vunpack.c.l.s4 1983009808
        %v832 = vunpack.c.0.s8 %v831
        %v833 = vlaneseq
        %v834 = vshrl.u32 %v833, 7
        %v835 = vsub.s32 %v832, %v834
        %v836 = vrot.slane %v822, %v835
        %v837 = vcombine.high %v829, %v829
        %v838 = vcombine.high %v836, %v836
        %v839 = vcombine.high %v570, %v570
        %v841 = vunpack.c.l.s4 1983009808
        %v842 = vunpack.c.0.s8 %v841
        %v843 = vlaneseq
        %v844 = vshrl.u32 %v843, 7
        %v845 = vsub.s32 %v842, %v844
        %v846 = vrot.slane %v570, %v845
        %v848 = vunpack.c.l.s4 1983009808
        %v849 = vunpack.c.0.s8 %v848
        %v850 = vlaneseq
        %v851 = vshrl.u32 %v850, 7
        %v852 = vsub.s32 %v849, %v851
        %v853 = vrot.slane %v839, %v852
        %v854 = vcombine.high %v846, %v846
        %v855 = vcombine.high %v853, %v853
        %v856 = vcombine.high %v571, %v571
        %v858 = vunpack.c.l.s4 1983009808
        %v859 = vunpack.c.0.s8 %v858
        %v860 = vlaneseq
        %v861 = vshrl.u32 %v860, 7
        %v862 = vsub.s32 %v859, %v861
        %v863 = vrot.slane %v571, %v862
        %v865 = vunpack.c.l.s4 1983009808
        %v866 = vunpack.c.0.s8 %v865
        %v867 = vlaneseq
        %v868 = vshrl.u32 %v867, 7
        %v869 = vsub.s32 %v866, %v868
        %v870 = vrot.slane %v856, %v869
        %v871 = vcombine.high %v863, %v863
        %v872 = vcombine.high %v870, %v870
        %v873 = vcombine.high %v572, %v572
        %v875 = vunpack.c.l.s4 1983009808
        %v876 = vunpack.c.0.s8 %v875
        %v877 = vlaneseq
        %v878 = vshrl.u32 %v877, 7
        %v879 = vsub.s32 %v876, %v878
        %v880 = vrot.slane %v572, %v879
        %v882 = vunpack.c.l.s4 1983009808
        %v883 = vunpack.c.0.s8 %v882
        %v884 = vlaneseq
        %v885 = vshrl.u32 %v884, 7
        %v886 = vsub.s32 %v883, %v885
        %v887 = vrot.slane %v873, %v886
        %v888 = vcombine.high %v880, %v880
        %v889 = vcombine.high %v887, %v887
        %v890 = vcombine.high %v573, %v573
        %v892 = vunpack.c.l.s4 1983009808
        %v893 = vunpack.c.0.s8 %v892
        %v894 = vlaneseq
        %v895 = vshrl.u32 %v894, 7
        %v896 = vsub.s32 %v893, %v895
        %v897 = vrot.slane %v573, %v896
        %v899 = vunpack.c.l.s4 1983009808
        %v900 = vunpack.c.0.s8 %v899
        %v901 = vlaneseq
        %v902 = vshrl.u32 %v901, 7
        %v903 = vsub.s32 %v900, %v902
        %v904 = vrot.slane %v890, %v903
        %v905 = vcombine.high %v897, %v897
        %v906 = vcombine.high %v904, %v904
        %v907 = vcombine.high %v574, %v574
        %v909 = vunpack.c.l.s4 1983009808
        %v910 = vunpack.c.0.s8 %v909
        %v911 = vlaneseq
        %v912 = vshrl.u32 %v911, 7
        %v913 = vsub.s32 %v910, %v912
        %v914 = vrot.slane %v574, %v913
        %v916 = vunpack.c.l.s4 1983009808
        %v917 = vunpack.c.0.s8 %v916
        %v918 = vlaneseq
        %v919 = vshrl.u32 %v918, 7
        %v920 = vsub.s32 %v917, %v919
        %v921 = vrot.slane %v907, %v920
        %v922 = vcombine.high %v914, %v914
        %v923 = vcombine.high %v921, %v921
        %v924 = vcombine.high %v575, %v575
        %v926 = vunpack.c.l.s4 1983009808
        %v927 = vunpack.c.0.s8 %v926
        %v928 = vlaneseq
        %v929 = vshrl.u32 %v928, 7
        %v930 = vsub.s32 %v927, %v929
        %v931 = vrot.slane %v575, %v930
        %v933 = vunpack.c.l.s4 1983009808
        %v934 = vunpack.c.0.s8 %v933
        %v935 = vlaneseq
        %v936 = vshrl.u32 %v935, 7
        %v937 = vsub.s32 %v934, %v936
        %v938 = vrot.slane %v924, %v937
        %v939 = vcombine.high %v931, %v931
        %v940 = vcombine.high %v938, %v938
        %v941 = vcombine.high %v576, %v576
        %v943 = vunpack.c.l.s4 1983009808
        %v944 = vunpack.c.0.s8 %v943
        %v945 = vlaneseq
        %v946 = vshrl.u32 %v945, 7
        %v947 = vsub.s32 %v944, %v946
        %v948 = vrot.slane %v576, %v947
        %v950 = vunpack.c.l.s4 1983009808
        %v951 = vunpack.c.0.s8 %v950
        %v952 = vlaneseq
        %v953 = vshrl.u32 %v952, 7
        %v954 = vsub.s32 %v951, %v953
        %v955 = vrot.slane %v941, %v954
        %v956 = vcombine.high %v948, %v948
        %v957 = vcombine.high %v955, %v955
        %v958 = vcombine.high %v577, %v577
        %v960 = vunpack.c.l.s4 1983009808
        %v961 = vunpack.c.0.s8 %v960
        %v962 = vlaneseq
        %v963 = vshrl.u32 %v962, 7
        %v964 = vsub.s32 %v961, %v963
        %v965 = vrot.slane %v577, %v964
        %v967 = vunpack.c.l.s4 1983009808
        %v968 = vunpack.c.0.s8 %v967
        %v969 = vlaneseq
        %v970 = vshrl.u32 %v969, 7
        %v971 = vsub.s32 %v968, %v970
        %v972 = vrot.slane %v958, %v971
        %v973 = vcombine.high %v965, %v965
        %v974 = vcombine.high %v972, %v972
        %v975 = vcombine.high %v578, %v578
        %v977 = vunpack.c.l.s4 1983009808
        %v978 = vunpack.c.0.s8 %v977
        %v979 = vlaneseq
        %v980 = vshrl.u32 %v979, 7
        %v981 = vsub.s32 %v978, %v980
        %v982 = vrot.slane %v578, %v981
        %v984 = vunpack.c.l.s4 1983009808
        %v985 = vunpack.c.0.s8 %v984
        %v986 = vlaneseq
        %v987 = vshrl.u32 %v986, 7
        %v988 = vsub.s32 %v985, %v987
        %v989 = vrot.slane %v975, %v988
        %v990 = vcombine.high %v982, %v982
        %v991 = vcombine.high %v989, %v989
        %v992 = vcombine.high %v579, %v579
        %v994 = vunpack.c.l.s4 1983009808
        %v995 = vunpack.c.0.s8 %v994
        %v996 = vlaneseq
        %v997 = vshrl.u32 %v996, 7
        %v998 = vsub.s32 %v995, %v997
        %v999 = vrot.slane %v579, %v998
        %v1001 = vunpack.c.l.s4 1983009808
        %v1002 = vunpack.c.0.s8 %v1001
        %v1003 = vlaneseq
        %v1004 = vshrl.u32 %v1003, 7
        %v1005 = vsub.s32 %v1002, %v1004
        %v1006 = vrot.slane %v992, %v1005
        %v1007 = vcombine.high %v999, %v999
        %v1008 = vcombine.high %v1006, %v1006
        %v1009 = vcombine.high %v580, %v580
        %v1011 = vunpack.c.l.s4 1983009808
        %v1012 = vunpack.c.0.s8 %v1011
        %v1013 = vlaneseq
        %v1014 = vshrl.u32 %v1013, 7
        %v1015 = vsub.s32 %v1012, %v1014
        %v1016 = vrot.slane %v580, %v1015
        %v1018 = vunpack.c.l.s4 1983009808
        %v1019 = vunpack.c.0.s8 %v1018
        %v1020 = vlaneseq
        %v1021 = vshrl.u32 %v1020, 7
        %v1022 = vsub.s32 %v1019, %v1021
        %v1023 = vrot.slane %v1009, %v1022
        %v1024 = vcombine.high %v1016, %v1016
        %v1025 = vcombine.high %v1023, %v1023
        %v1026 = vcombine.high %v581, %v581
        %v1028 = vunpack.c.l.s4 1983009808
        %v1029 = vunpack.c.0.s8 %v1028
        %v1030 = vlaneseq
        %v1031 = vshrl.u32 %v1030, 7
        %v1032 = vsub.s32 %v1029, %v1031
        %v1033 = vrot.slane %v581, %v1032
        %v1035 = vunpack.c.l.s4 1983009808
        %v1036 = vunpack.c.0.s8 %v1035
        %v1037 = vlaneseq
        %v1038 = vshrl.u32 %v1037, 7
        %v1039 = vsub.s32 %v1036, %v1038
        %v1040 = vrot.slane %v1026, %v1039
        %v1041 = vcombine.high %v1033, %v1033
        %v1042 = vcombine.high %v1040, %v1040
        %v1043 = vcombine.high %v582, %v582
        %v1045 = vunpack.c.l.s4 1983009808
        %v1046 = vunpack.c.0.s8 %v1045
        %v1047 = vlaneseq
        %v1048 = vshrl.u32 %v1047, 7
        %v1049 = vsub.s32 %v1046, %v1048
        %v1050 = vrot.slane %v582, %v1049
        %v1052 = vunpack.c.l.s4 1983009808
        %v1053 = vunpack.c.0.s8 %v1052
        %v1054 = vlaneseq
        %v1055 = vshrl.u32 %v1054, 7
        %v1056 = vsub.s32 %v1053, %v1055
        %v1057 = vrot.slane %v1043, %v1056
        %v1058 = vcombine.high %v1050, %v1050
        %v1059 = vcombine.high %v1057, %v1057
        %v1060 = vcombine.high %v583, %v583
        %v1062 = vunpack.c.l.s4 1983009808
        %v1063 = vunpack.c.0.s8 %v1062
        %v1064 = vlaneseq
        %v1065 = vshrl.u32 %v1064, 7
        %v1066 = vsub.s32 %v1063, %v1065
        %v1067 = vrot.slane %v583, %v1066
        %v1069 = vunpack.c.l.s4 1983009808
        %v1070 = vunpack.c.0.s8 %v1069
        %v1071 = vlaneseq
        %v1072 = vshrl.u32 %v1071, 7
        %v1073 = vsub.s32 %v1070, %v1072
        %v1074 = vrot.slane %v1060, %v1073
        %v1075 = vcombine.high %v1067, %v1067
        %v1076 = vcombine.high %v1074, %v1074
        %v1077 = vcombine.high %v584, %v584
        %v1079 = vunpack.c.l.s4 1983009808
        %v1080 = vunpack.c.0.s8 %v1079
        %v1081 = vlaneseq
        %v1082 = vshrl.u32 %v1081, 7
        %v1083 = vsub.s32 %v1080, %v1082
        %v1084 = vrot.slane %v584, %v1083
        %v1086 = vunpack.c.l.s4 1983009808
        %v1087 = vunpack.c.0.s8 %v1086
        %v1088 = vlaneseq
        %v1089 = vshrl.u32 %v1088, 7
        %v1090 = vsub.s32 %v1087, %v1089
        %v1091 = vrot.slane %v1077, %v1090
        %v1092 = vcombine.high %v1084, %v1084
        %v1093 = vcombine.high %v1091, %v1091
        %v1094 = vcombine.high %v585, %v585
        %v1096 = vunpack.c.l.s4 1983009808
        %v1097 = vunpack.c.0.s8 %v1096
        %v1098 = vlaneseq
        %v1099 = vshrl.u32 %v1098, 7
        %v1100 = vsub.s32 %v1097, %v1099
        %v1101 = vrot.slane %v585, %v1100
        %v1103 = vunpack.c.l.s4 1983009808
        %v1104 = vunpack.c.0.s8 %v1103
        %v1105 = vlaneseq
        %v1106 = vshrl.u32 %v1105, 7
        %v1107 = vsub.s32 %v1104, %v1106
        %v1108 = vrot.slane %v1094, %v1107
        %v1109 = vcombine.high %v1101, %v1101
        %v1110 = vcombine.high %v1108, %v1108
        %v1111 = vcombine.high %v586, %v586
        %v1113 = vunpack.c.l.s4 1983009808
        %v1114 = vunpack.c.0.s8 %v1113
        %v1115 = vlaneseq
        %v1116 = vshrl.u32 %v1115, 7
        %v1117 = vsub.s32 %v1114, %v1116
        %v1118 = vrot.slane %v586, %v1117
        %v1120 = vunpack.c.l.s4 1983009808
        %v1121 = vunpack.c.0.s8 %v1120
        %v1122 = vlaneseq
        %v1123 = vshrl.u32 %v1122, 7
        %v1124 = vsub.s32 %v1121, %v1123
        %v1125 = vrot.slane %v1111, %v1124
        %v1126 = vcombine.high %v1118, %v1118
        %v1127 = vcombine.high %v1125, %v1125
        %v1128 = vcombine.high %v587, %v587
        %v1130 = vunpack.c.l.s4 1983009808
        %v1131 = vunpack.c.0.s8 %v1130
        %v1132 = vlaneseq
        %v1133 = vshrl.u32 %v1132, 7
        %v1134 = vsub.s32 %v1131, %v1133
        %v1135 = vrot.slane %v587, %v1134
        %v1137 = vunpack.c.l.s4 1983009808
        %v1138 = vunpack.c.0.s8 %v1137
        %v1139 = vlaneseq
        %v1140 = vshrl.u32 %v1139, 7
        %v1141 = vsub.s32 %v1138, %v1140
        %v1142 = vrot.slane %v1128, %v1141
        %v1143 = vcombine.high %v1135, %v1135
        %v1144 = vcombine.high %v1142, %v1142
        %v1145 = vcombine.high %v588, %v588
        %v1147 = vunpack.c.l.s4 1983009808
        %v1148 = vunpack.c.0.s8 %v1147
        %v1149 = vlaneseq
        %v1150 = vshrl.u32 %v1149, 7
        %v1151 = vsub.s32 %v1148, %v1150
        %v1152 = vrot.slane %v588, %v1151
        %v1154 = vunpack.c.l.s4 1983009808
        %v1155 = vunpack.c.0.s8 %v1154
        %v1156 = vlaneseq
        %v1157 = vshrl.u32 %v1156, 7
        %v1158 = vsub.s32 %v1155, %v1157
        %v1159 = vrot.slane %v1145, %v1158
        %v1160 = vcombine.high %v1152, %v1152
        %v1161 = vcombine.high %v1159, %v1159
        %v1162 = vcombine.high %v589, %v589
        %v1164 = vunpack.c.l.s4 1983009808
        %v1165 = vunpack.c.0.s8 %v1164
        %v1166 = vlaneseq
        %v1167 = vshrl.u32 %v1166, 7
        %v1168 = vsub.s32 %v1165, %v1167
        %v1169 = vrot.slane %v589, %v1168
        %v1171 = vunpack.c.l.s4 1983009808
        %v1172 = vunpack.c.0.s8 %v1171
        %v1173 = vlaneseq
        %v1174 = vshrl.u32 %v1173, 7
        %v1175 = vsub.s32 %v1172, %v1174
        %v1176 = vrot.slane %v1162, %v1175
        %v1177 = vcombine.high %v1169, %v1169
        %v1178 = vcombine.high %v1176, %v1176
        %v1179 = vcombine.high %v590, %v590
        %v1181 = vunpack.c.l.s4 1983009808
        %v1182 = vunpack.c.0.s8 %v1181
        %v1183 = vlaneseq
        %v1184 = vshrl.u32 %v1183, 7
        %v1185 = vsub.s32 %v1182, %v1184
        %v1186 = vrot.slane %v590, %v1185
        %v1188 = vunpack.c.l.s4 1983009808
        %v1189 = vunpack.c.0.s8 %v1188
        %v1190 = vlaneseq
        %v1191 = vshrl.u32 %v1190, 7
        %v1192 = vsub.s32 %v1189, %v1191
        %v1193 = vrot.slane %v1179, %v1192
        %v1194 = vcombine.high %v1186, %v1186
        %v1195 = vcombine.high %v1193, %v1193
        %v1196 = vcombine.high %v591, %v591
        %v1198 = vunpack.c.l.s4 1983009808
        %v1199 = vunpack.c.0.s8 %v1198
        %v1200 = vlaneseq
        %v1201 = vshrl.u32 %v1200, 7
        %v1202 = vsub.s32 %v1199, %v1201
        %v1203 = vrot.slane %v591, %v1202
        %v1205 = vunpack.c.l.s4 1983009808
        %v1206 = vunpack.c.0.s8 %v1205
        %v1207 = vlaneseq
        %v1208 = vshrl.u32 %v1207, 7
        %v1209 = vsub.s32 %v1206, %v1208
        %v1210 = vrot.slane %v1196, %v1209
        %v1211 = vcombine.high %v1203, %v1203
        %v1212 = vcombine.high %v1210, %v1210
        %v1213 = vcombine.high %v592, %v592
        %v1215 = vunpack.c.l.s4 1983009808
        %v1216 = vunpack.c.0.s8 %v1215
        %v1217 = vlaneseq
        %v1218 = vshrl.u32 %v1217, 7
        %v1219 = vsub.s32 %v1216, %v1218
        %v1220 = vrot.slane %v592, %v1219
        %v1222 = vunpack.c.l.s4 1983009808
        %v1223 = vunpack.c.0.s8 %v1222
        %v1224 = vlaneseq
        %v1225 = vshrl.u32 %v1224, 7
        %v1226 = vsub.s32 %v1223, %v1225
        %v1227 = vrot.slane %v1213, %v1226
        %v1228 = vcombine.high %v1220, %v1220
        %v1229 = vcombine.high %v1227, %v1227
        %v1230 = vcombine.high %v593, %v593
        %v1232 = vunpack.c.l.s4 1983009808
        %v1233 = vunpack.c.0.s8 %v1232
        %v1234 = vlaneseq
        %v1235 = vshrl.u32 %v1234, 7
        %v1236 = vsub.s32 %v1233, %v1235
        %v1237 = vrot.slane %v593, %v1236
        %v1239 = vunpack.c.l.s4 1983009808
        %v1240 = vunpack.c.0.s8 %v1239
        %v1241 = vlaneseq
        %v1242 = vshrl.u32 %v1241, 7
        %v1243 = vsub.s32 %v1240, %v1242
        %v1244 = vrot.slane %v1230, %v1243
        %v1245 = vcombine.high %v1237, %v1237
        %v1246 = vcombine.high %v1244, %v1244
        %v1247 = vcombine.high %v594, %v594
        %v1249 = vunpack.c.l.s4 1983009808
        %v1250 = vunpack.c.0.s8 %v1249
        %v1251 = vlaneseq
        %v1252 = vshrl.u32 %v1251, 7
        %v1253 = vsub.s32 %v1250, %v1252
        %v1254 = vrot.slane %v594, %v1253
        %v1256 = vunpack.c.l.s4 1983009808
        %v1257 = vunpack.c.0.s8 %v1256
        %v1258 = vlaneseq
        %v1259 = vshrl.u32 %v1258, 7
        %v1260 = vsub.s32 %v1257, %v1259
        %v1261 = vrot.slane %v1247, %v1260
        %v1262 = vcombine.high %v1254, %v1254
        %v1263 = vcombine.high %v1261, %v1261
        %v1265 = vunpack.c.l.s4 1983009808
        %v1266 = vunpack.c.0.s8 %v1265
        %v1267 = vlaneseq
        %v1268 = vshrl.u32 %v1267, 7
        %v1269 = vsub.s32 %v1266, %v1268
        %v1270 = vrot.slane %v595, %v1269
        %v1271 = vcombine.high %v1270, %v1270
        %v1422 = vpack.c.bf16 %v642, %v642
        %v1423 = vpack.c.bf16 %v650, %v650
        %v1424 = vpack.c.bf16 %v649, %v649
        %v1425 = vpack.c.bf16 %v651, %v651
        %v1426 = vpack.c.bf16 %v659, %v659
        %v1427 = vpack.c.bf16 %v667, %v667
        %v1428 = vpack.c.bf16 %v666, %v666
        %v1429 = vpack.c.bf16 %v668, %v668
        %v1430 = vpack.c.bf16 %v676, %v676
        %v1431 = vpack.c.bf16 %v684, %v684
        %v1432 = vpack.c.bf16 %v683, %v683
        %v1433 = vpack.c.bf16 %v685, %v685
        %v1434 = vpack.c.bf16 %v693, %v693
        %v1435 = vpack.c.bf16 %v701, %v701
        %v1436 = vpack.c.bf16 %v700, %v700
        %v1437 = vpack.c.bf16 %v702, %v702
        %v1438 = vpack.c.bf16 %v710, %v710
        %v1439 = vpack.c.bf16 %v718, %v718
        %v1440 = vpack.c.bf16 %v717, %v717
        %v1441 = vpack.c.bf16 %v719, %v719
        %v1442 = vpack.c.bf16 %v727, %v727
        %v1443 = vpack.c.bf16 %v735, %v735
        %v1444 = vpack.c.bf16 %v734, %v734
        %v1445 = vpack.c.bf16 %v736, %v736
        %v1446 = vpack.c.bf16 %v744, %v744
        %v1447 = vpack.c.bf16 %v752, %v752
        %v1448 = vpack.c.bf16 %v751, %v751
        %v1449 = vpack.c.bf16 %v753, %v753
        %v1450 = vpack.c.bf16 %v761, %v761
        %v1451 = vpack.c.bf16 %v769, %v769
        %v1452 = vpack.c.bf16 %v768, %v768
        %v1453 = vpack.c.bf16 %v770, %v770
        %v1454 = vpack.c.bf16 %v778, %v778
        %v1455 = vpack.c.bf16 %v786, %v786
        %v1456 = vpack.c.bf16 %v785, %v785
        %v1457 = vpack.c.bf16 %v787, %v787
        %v1458 = vpack.c.bf16 %v795, %v795
        %v1459 = vpack.c.bf16 %v803, %v803
        %v1460 = vpack.c.bf16 %v802, %v802
        %v1461 = vpack.c.bf16 %v804, %v804
        %v1462 = vpack.c.bf16 %v812, %v812
        %v1463 = vpack.c.bf16 %v820, %v820
        %v1464 = vpack.c.bf16 %v819, %v819
        %v1465 = vpack.c.bf16 %v821, %v821
        %v1466 = vpack.c.bf16 %v829, %v829
        %v1467 = vpack.c.bf16 %v837, %v837
        %v1468 = vpack.c.bf16 %v836, %v836
        %v1469 = vpack.c.bf16 %v838, %v838
        %v1470 = vpack.c.bf16 %v846, %v846
        %v1471 = vpack.c.bf16 %v854, %v854
        %v1472 = vpack.c.bf16 %v853, %v853
        %v1473 = vpack.c.bf16 %v855, %v855
        %v1474 = vpack.c.bf16 %v863, %v863
        %v1475 = vpack.c.bf16 %v871, %v871
        %v1476 = vpack.c.bf16 %v870, %v870
        %v1477 = vpack.c.bf16 %v872, %v872
        %v1478 = vpack.c.bf16 %v880, %v880
        %v1479 = vpack.c.bf16 %v888, %v888
        %v1480 = vpack.c.bf16 %v887, %v887
        %v1481 = vpack.c.bf16 %v889, %v889
        %v1482 = vpack.c.bf16 %v897, %v897
        %v1483 = vpack.c.bf16 %v905, %v905
        %v1484 = vpack.c.bf16 %v904, %v904
        %v1485 = vpack.c.bf16 %v906, %v906
        %v1486 = vpack.c.bf16 %v914, %v914
        %v1487 = vpack.c.bf16 %v922, %v922
        %v1488 = vpack.c.bf16 %v921, %v921
        %v1489 = vpack.c.bf16 %v923, %v923
        %v1490 = vpack.c.bf16 %v931, %v931
        %v1491 = vpack.c.bf16 %v939, %v939
        %v1492 = vpack.c.bf16 %v938, %v938
        %v1493 = vpack.c.bf16 %v940, %v940
        %v1494 = vpack.c.bf16 %v948, %v948
        %v1495 = vpack.c.bf16 %v956, %v956
        %v1496 = vpack.c.bf16 %v955, %v955
        %v1497 = vpack.c.bf16 %v957, %v957
        %v1498 = vpack.c.bf16 %v965, %v965
        %v1499 = vpack.c.bf16 %v973, %v973
        %v1500 = vpack.c.bf16 %v972, %v972
        %v1501 = vpack.c.bf16 %v974, %v974
        %v1502 = vpack.c.bf16 %v982, %v982
        %v1503 = vpack.c.bf16 %v990, %v990
        %v1504 = vpack.c.bf16 %v989, %v989
        %v1505 = vpack.c.bf16 %v991, %v991
        %v1506 = vpack.c.bf16 %v999, %v999
        %v1507 = vpack.c.bf16 %v1007, %v1007
        %v1508 = vpack.c.bf16 %v1006, %v1006
        %v1509 = vpack.c.bf16 %v1008, %v1008
        %v1510 = vpack.c.bf16 %v1016, %v1016
        %v1511 = vpack.c.bf16 %v1024, %v1024
        %v1512 = vpack.c.bf16 %v1023, %v1023
        %v1513 = vpack.c.bf16 %v1025, %v1025
        %v1514 = vpack.c.bf16 %v1033, %v1033
        %v1515 = vpack.c.bf16 %v1041, %v1041
        %v1516 = vpack.c.bf16 %v1040, %v1040
        %v1517 = vpack.c.bf16 %v1042, %v1042
        %v1518 = vpack.c.bf16 %v1050, %v1050
        %v1519 = vpack.c.bf16 %v1058, %v1058
        %v1520 = vpack.c.bf16 %v1057, %v1057
        %v1521 = vpack.c.bf16 %v1059, %v1059
        %v1522 = vpack.c.bf16 %v1067, %v1067
        %v1523 = vpack.c.bf16 %v1075, %v1075
        %v1524 = vpack.c.bf16 %v1074, %v1074
        %v1525 = vpack.c.bf16 %v1076, %v1076
        %v1526 = vpack.c.bf16 %v1084, %v1084
        %v1527 = vpack.c.bf16 %v1092, %v1092
        %v1528 = vpack.c.bf16 %v1091, %v1091
        %v1529 = vpack.c.bf16 %v1093, %v1093
        %v1530 = vpack.c.bf16 %v1101, %v1101
        %v1531 = vpack.c.bf16 %v1109, %v1109
        %v1532 = vpack.c.bf16 %v1108, %v1108
        %v1533 = vpack.c.bf16 %v1110, %v1110
        %v1534 = vpack.c.bf16 %v1118, %v1118
        %v1535 = vpack.c.bf16 %v1126, %v1126
        %v1536 = vpack.c.bf16 %v1125, %v1125
        %v1537 = vpack.c.bf16 %v1127, %v1127
        %v1538 = vpack.c.bf16 %v1135, %v1135
        %v1539 = vpack.c.bf16 %v1143, %v1143
        %v1540 = vpack.c.bf16 %v1142, %v1142
        %v1541 = vpack.c.bf16 %v1144, %v1144
        %v1542 = vpack.c.bf16 %v1152, %v1152
        %v1543 = vpack.c.bf16 %v1160, %v1160
        %v1544 = vpack.c.bf16 %v1159, %v1159
        %v1545 = vpack.c.bf16 %v1161, %v1161
        %v1546 = vpack.c.bf16 %v1169, %v1169
        %v1547 = vpack.c.bf16 %v1177, %v1177
        %v1548 = vpack.c.bf16 %v1176, %v1176
        %v1549 = vpack.c.bf16 %v1178, %v1178
        %v1550 = vpack.c.bf16 %v1186, %v1186
        %v1551 = vpack.c.bf16 %v1194, %v1194
        %v1552 = vpack.c.bf16 %v1193, %v1193
        %v1553 = vpack.c.bf16 %v1195, %v1195
        %v1554 = vpack.c.bf16 %v1203, %v1203
        %v1555 = vpack.c.bf16 %v1211, %v1211
        %v1556 = vpack.c.bf16 %v1210, %v1210
        %v1557 = vpack.c.bf16 %v1212, %v1212
        %v1558 = vpack.c.bf16 %v1220, %v1220
        %v1559 = vpack.c.bf16 %v1228, %v1228
        %v1560 = vpack.c.bf16 %v1227, %v1227
        %v1561 = vpack.c.bf16 %v1229, %v1229
        %v1562 = vpack.c.bf16 %v1237, %v1237
        %v1563 = vpack.c.bf16 %v1245, %v1245
        %v1564 = vpack.c.bf16 %v1244, %v1244
        %v1565 = vpack.c.bf16 %v1246, %v1246
        %v1566 = vpack.c.bf16 %v1254, %v1254
        %v1567 = vpack.c.bf16 %v1262, %v1262
        %v1568 = vpack.c.bf16 %v1261, %v1261
        %v1569 = vpack.c.bf16 %v1263, %v1263
        %v1570 = vpack.c.bf16 %v1270, %v1270
        %v1571 = vpack.c.bf16 %v1271, %v1271
        %v1572 = vld [vmem:[%s356] sm:$0xff]
        %v1573 = vld [vmem:[%s356 + $0x8] sm:$0xff]
        %v1574 = vld [vmem:[%s356 + $0x10] sm:$0xff]
        %v1575 = vld [vmem:[%s356 + $0x18] sm:$0xff]
        %v1576 = vld [vmem:[%s356 + $0x20] sm:$0xff]
        %v1577 = vld [vmem:[%s356 + $0x28] sm:$0xff]
        %v1578 = vld [vmem:[%s356 + $0x30] sm:$0xff]
        %v1579 = vld [vmem:[%s356 + $0x38] sm:$0xff]
        %v1580 = vld [vmem:[%s356 + $0x40] sm:$0xff]
        %v1581 = vld [vmem:[%s356 + $0x48] sm:$0xff]
        %v1582 = vld [vmem:[%s356 + $0x50] sm:$0xff]
        %v1583 = vld [vmem:[%s356 + $0x58] sm:$0xff]
        %v1584 = vld [vmem:[%s356 + $0x60] sm:$0xff]
        %v1585 = vld [vmem:[%s356 + $0x68] sm:$0xff]
        %v1586 = vld [vmem:[%s356 + $0x70] sm:$0xff]
        %v1587 = vld [vmem:[%s356 + $0x78] sm:$0xff]
        %v1588 = vld [vmem:[%s356 + $0x80] sm:$0xff]
        %v1589 = vld [vmem:[%s356 + $0x88] sm:$0xff]
        %v1590 = vld [vmem:[%s356 + $0x90] sm:$0xff]
        %v1591 = vld [vmem:[%s356 + $0x98] sm:$0xff]
        %v1592 = vld [vmem:[%s356 + $0xa0] sm:$0xff]
        %v1593 = vld [vmem:[%s356 + $0xa8] sm:$0xff]
        %v1594 = vld [vmem:[%s356 + $0xb0] sm:$0xff]
        %v1595 = vld [vmem:[%s356 + $0xb8] sm:$0xff]
        %v1596 = vld [vmem:[%s356 + $0xc0] sm:$0xff]
        %v1597 = vld [vmem:[%s356 + $0xc8] sm:$0xff]
        %v1598 = vld [vmem:[%s356 + $0xd0] sm:$0xff]
        %v1599 = vld [vmem:[%s356 + $0xd8] sm:$0xff]
        %v1600 = vld [vmem:[%s356 + $0xe0] sm:$0xff]
        %v1601 = vld [vmem:[%s356 + $0xe8] sm:$0xff]
        %v1602 = vld [vmem:[%s356 + $0xf0] sm:$0xff]
        %v1603 = vld [vmem:[%s356 + $0xf8] sm:$0xff]
        %v1604 = vld [vmem:[%s356 + $0x100] sm:$0xff]
        %v1605 = vld [vmem:[%s356 + $0x108] sm:$0xff]
        %v1606 = vld [vmem:[%s356 + $0x110] sm:$0xff]
        %v1607 = vld [vmem:[%s356 + $0x118] sm:$0xff]
        %v1608 = vld [vmem:[%s356 + $0x120] sm:$0xff]
        %v1609 = vld [vmem:[%s356 + $0x128] sm:$0xf]
        %v1610 = vld [vmem:[%s356 + $0x12c] sm:$0x55]
        %v1611 = vld [vmem:[%s356 + $0x134] sm:$0x55]
        %v1612 = vld [vmem:[%s356 + $0x13c] sm:$0x55]
        %v1613 = vld [vmem:[%s356 + $0x144] sm:$0x55]
        %v1614 = vld [vmem:[%s356 + $0x14c] sm:$0x55]
        %v1615 = vld [vmem:[%s356 + $0x154] sm:$0x55]
        %v1616 = vld [vmem:[%s356 + $0x15c] sm:$0x55]
        %v1617 = vld [vmem:[%s356 + $0x164] sm:$0x55]
        %v1618 = vld [vmem:[%s356 + $0x16c] sm:$0x55]
        %v1619 = vld [vmem:[%s356 + $0x174] sm:$0x55]
        %v1620 = vld [vmem:[%s356 + $0x17c] sm:$0x55]
        %v1621 = vld [vmem:[%s356 + $0x184] sm:$0x55]
        %v1622 = vld [vmem:[%s356 + $0x18c] sm:$0x55]
        %v1623 = vld [vmem:[%s356 + $0x194] sm:$0x55]
        %v1624 = vld [vmem:[%s356 + $0x19c] sm:$0x55]
        %v1625 = vld [vmem:[%s356 + $0x1a4] sm:$0x55]
        %v1626 = vld [vmem:[%s356 + $0x1ac] sm:$0x55]
        %v1627 = vld [vmem:[%s356 + $0x1b4] sm:$0x55]
        %v1628 = vld [vmem:[%s356 + $0x1bc] sm:$0x55]
        %v1629 = vld [vmem:[%s356 + $0x1c4] sm:$0x55]
        %v1630 = vld [vmem:[%s356 + $0x1cc] sm:$0x55]
        %v1631 = vld [vmem:[%s356 + $0x1d4] sm:$0x55]
        %v1632 = vld [vmem:[%s356 + $0x1dc] sm:$0x55]
        %v1633 = vld [vmem:[%s356 + $0x1e4] sm:$0x55]
        %v1634 = vld [vmem:[%s356 + $0x1ec] sm:$0x55]
        %v1635 = vld [vmem:[%s356 + $0x1f4] sm:$0x55]
        %v1636 = vld [vmem:[%s356 + $0x1fc] sm:$0x55]
        %v1637 = vld [vmem:[%s356 + $0x204] sm:$0x55]
        %v1638 = vld [vmem:[%s356 + $0x20c] sm:$0x55]
        %v1639 = vld [vmem:[%s356 + $0x214] sm:$0x55]
        %v1640 = vld [vmem:[%s356 + $0x21c] sm:$0x55]
        %v1641 = vld [vmem:[%s356 + $0x224] sm:$0x55]
        %v1642 = vld [vmem:[%s356 + $0x22c] sm:$0x55]
        %v1643 = vld [vmem:[%s356 + $0x234] sm:$0x55]
        %v1644 = vld [vmem:[%s356 + $0x23c] sm:$0x55]
        %v1645 = vld [vmem:[%s356 + $0x244] sm:$0x55]
        %v1646 = vld [vmem:[%s356 + $0x24c] sm:$0x55]
        %v1647 = vld [vmem:[%s356 + $0x254] sm:$0x5]
        %v1648 = vunpack.c.l.s8.bf16 %v1572
        %v1649 = vunpack.c.h.s8.bf16 %v1572
        %v1650 = vunpack.c.l.s8.bf16 %v1573
        %v1651 = vunpack.c.h.s8.bf16 %v1573
        %v1652 = vunpack.c.l.s8.bf16 %v1574
        %v1653 = vunpack.c.h.s8.bf16 %v1574
        %v1654 = vunpack.c.l.s8.bf16 %v1575
        %v1655 = vunpack.c.h.s8.bf16 %v1575
        %v1656 = vunpack.c.l.s8.bf16 %v1576
        %v1657 = vunpack.c.h.s8.bf16 %v1576
        %v1658 = vunpack.c.l.s8.bf16 %v1577
        %v1659 = vunpack.c.h.s8.bf16 %v1577
        %v1660 = vunpack.c.l.s8.bf16 %v1578
        %v1661 = vunpack.c.h.s8.bf16 %v1578
        %v1662 = vunpack.c.l.s8.bf16 %v1579
        %v1663 = vunpack.c.h.s8.bf16 %v1579
        %v1664 = vunpack.c.l.s8.bf16 %v1580
        %v1665 = vunpack.c.h.s8.bf16 %v1580
        %v1666 = vunpack.c.l.s8.bf16 %v1581
        %v1667 = vunpack.c.h.s8.bf16 %v1581
        %v1668 = vunpack.c.l.s8.bf16 %v1582
        %v1669 = vunpack.c.h.s8.bf16 %v1582
        %v1670 = vunpack.c.l.s8.bf16 %v1583
        %v1671 = vunpack.c.h.s8.bf16 %v1583
        %v1672 = vunpack.c.l.s8.bf16 %v1584
        %v1673 = vunpack.c.h.s8.bf16 %v1584
        %v1674 = vunpack.c.l.s8.bf16 %v1585
        %v1675 = vunpack.c.h.s8.bf16 %v1585
        %v1676 = vunpack.c.l.s8.bf16 %v1586
        %v1677 = vunpack.c.h.s8.bf16 %v1586
        %v1678 = vunpack.c.l.s8.bf16 %v1587
        %v1679 = vunpack.c.h.s8.bf16 %v1587
        %v1680 = vunpack.c.l.s8.bf16 %v1588
        %v1681 = vunpack.c.h.s8.bf16 %v1588
        %v1682 = vunpack.c.l.s8.bf16 %v1589
        %v1683 = vunpack.c.h.s8.bf16 %v1589
        %v1684 = vunpack.c.l.s8.bf16 %v1590
        %v1685 = vunpack.c.h.s8.bf16 %v1590
        %v1686 = vunpack.c.l.s8.bf16 %v1591
        %v1687 = vunpack.c.h.s8.bf16 %v1591
        %v1688 = vunpack.c.l.s8.bf16 %v1592
        %v1689 = vunpack.c.h.s8.bf16 %v1592
        %v1690 = vunpack.c.l.s8.bf16 %v1593
        %v1691 = vunpack.c.h.s8.bf16 %v1593
        %v1692 = vunpack.c.l.s8.bf16 %v1594
        %v1693 = vunpack.c.h.s8.bf16 %v1594
        %v1694 = vunpack.c.l.s8.bf16 %v1595
        %v1695 = vunpack.c.h.s8.bf16 %v1595
        %v1696 = vunpack.c.l.s8.bf16 %v1596
        %v1697 = vunpack.c.h.s8.bf16 %v1596
        %v1698 = vunpack.c.l.s8.bf16 %v1597
        %v1699 = vunpack.c.h.s8.bf16 %v1597
        %v1700 = vunpack.c.l.s8.bf16 %v1598
        %v1701 = vunpack.c.h.s8.bf16 %v1598
        %v1702 = vunpack.c.l.s8.bf16 %v1599
        %v1703 = vunpack.c.h.s8.bf16 %v1599
        %v1704 = vunpack.c.l.s8.bf16 %v1600
        %v1705 = vunpack.c.h.s8.bf16 %v1600
        %v1706 = vunpack.c.l.s8.bf16 %v1601
        %v1707 = vunpack.c.h.s8.bf16 %v1601
        %v1708 = vunpack.c.l.s8.bf16 %v1602
        %v1709 = vunpack.c.h.s8.bf16 %v1602
        %v1710 = vunpack.c.l.s8.bf16 %v1603
        %v1711 = vunpack.c.h.s8.bf16 %v1603
        %v1712 = vunpack.c.l.s8.bf16 %v1604
        %v1713 = vunpack.c.h.s8.bf16 %v1604
        %v1714 = vunpack.c.l.s8.bf16 %v1605
        %v1715 = vunpack.c.h.s8.bf16 %v1605
        %v1716 = vunpack.c.l.s8.bf16 %v1606
        %v1717 = vunpack.c.h.s8.bf16 %v1606
        %v1718 = vunpack.c.l.s8.bf16 %v1607
        %v1719 = vunpack.c.h.s8.bf16 %v1607
        %v1720 = vunpack.c.l.s8.bf16 %v1608
        %v1721 = vunpack.c.h.s8.bf16 %v1608
        %v1722 = vunpack.c.l.s8.bf16 %v1609
        %v1723 = vunpack.c.l.s8.bf16 %v1610
        %v1724 = vunpack.c.h.s8.bf16 %v1610
        %v1725 = vunpack.c.l.s8.bf16 %v1611
        %v1726 = vunpack.c.h.s8.bf16 %v1611
        %v1727 = vunpack.c.l.s8.bf16 %v1612
        %v1728 = vunpack.c.h.s8.bf16 %v1612
        %v1729 = vunpack.c.l.s8.bf16 %v1613
        %v1730 = vunpack.c.h.s8.bf16 %v1613
        %v1731 = vunpack.c.l.s8.bf16 %v1614
        %v1732 = vunpack.c.h.s8.bf16 %v1614
        %v1733 = vunpack.c.l.s8.bf16 %v1615
        %v1734 = vunpack.c.h.s8.bf16 %v1615
        %v1735 = vunpack.c.l.s8.bf16 %v1616
        %v1736 = vunpack.c.h.s8.bf16 %v1616
        %v1737 = vunpack.c.l.s8.bf16 %v1617
        %v1738 = vunpack.c.h.s8.bf16 %v1617
        %v1739 = vunpack.c.l.s8.bf16 %v1618
        %v1740 = vunpack.c.h.s8.bf16 %v1618
        %v1741 = vunpack.c.l.s8.bf16 %v1619
        %v1742 = vunpack.c.h.s8.bf16 %v1619
        %v1743 = vunpack.c.l.s8.bf16 %v1620
        %v1744 = vunpack.c.h.s8.bf16 %v1620
        %v1745 = vunpack.c.l.s8.bf16 %v1621
        %v1746 = vunpack.c.h.s8.bf16 %v1621
        %v1747 = vunpack.c.l.s8.bf16 %v1622
        %v1748 = vunpack.c.h.s8.bf16 %v1622
        %v1749 = vunpack.c.l.s8.bf16 %v1623
        %v1750 = vunpack.c.h.s8.bf16 %v1623
        %v1751 = vunpack.c.l.s8.bf16 %v1624
        %v1752 = vunpack.c.h.s8.bf16 %v1624
        %v1753 = vunpack.c.l.s8.bf16 %v1625
        %v1754 = vunpack.c.h.s8.bf16 %v1625
        %v1755 = vunpack.c.l.s8.bf16 %v1626
        %v1756 = vunpack.c.h.s8.bf16 %v1626
        %v1757 = vunpack.c.l.s8.bf16 %v1627
        %v1758 = vunpack.c.h.s8.bf16 %v1627
        %v1759 = vunpack.c.l.s8.bf16 %v1628
        %v1760 = vunpack.c.h.s8.bf16 %v1628
        %v1761 = vunpack.c.l.s8.bf16 %v1629
        %v1762 = vunpack.c.h.s8.bf16 %v1629
        %v1763 = vunpack.c.l.s8.bf16 %v1630
        %v1764 = vunpack.c.h.s8.bf16 %v1630
        %v1765 = vunpack.c.l.s8.bf16 %v1631
        %v1766 = vunpack.c.h.s8.bf16 %v1631
        %v1767 = vunpack.c.l.s8.bf16 %v1632
        %v1768 = vunpack.c.h.s8.bf16 %v1632
        %v1769 = vunpack.c.l.s8.bf16 %v1633
        %v1770 = vunpack.c.h.s8.bf16 %v1633
        %v1771 = vunpack.c.l.s8.bf16 %v1634
        %v1772 = vunpack.c.h.s8.bf16 %v1634
        %v1773 = vunpack.c.l.s8.bf16 %v1635
        %v1774 = vunpack.c.h.s8.bf16 %v1635
        %v1775 = vunpack.c.l.s8.bf16 %v1636
        %v1776 = vunpack.c.h.s8.bf16 %v1636
        %v1777 = vunpack.c.l.s8.bf16 %v1637
        %v1778 = vunpack.c.h.s8.bf16 %v1637
        %v1779 = vunpack.c.l.s8.bf16 %v1638
        %v1780 = vunpack.c.h.s8.bf16 %v1638
        %v1781 = vunpack.c.l.s8.bf16 %v1639
        %v1782 = vunpack.c.h.s8.bf16 %v1639
        %v1783 = vunpack.c.l.s8.bf16 %v1640
        %v1784 = vunpack.c.h.s8.bf16 %v1640
        %v1785 = vunpack.c.l.s8.bf16 %v1641
        %v1786 = vunpack.c.h.s8.bf16 %v1641
        %v1787 = vunpack.c.l.s8.bf16 %v1642
        %v1788 = vunpack.c.h.s8.bf16 %v1642
        %v1789 = vunpack.c.l.s8.bf16 %v1643
        %v1790 = vunpack.c.h.s8.bf16 %v1643
        %v1791 = vunpack.c.l.s8.bf16 %v1644
        %v1792 = vunpack.c.h.s8.bf16 %v1644
        %v1793 = vunpack.c.l.s8.bf16 %v1645
        %v1794 = vunpack.c.h.s8.bf16 %v1645
        %v1795 = vunpack.c.l.s8.bf16 %v1646
        %v1796 = vunpack.c.h.s8.bf16 %v1646
        %v1797 = vunpack.c.l.s8.bf16 %v1647
        %v1948 = vunpack.c.l.b16 %v1648
        %v1949 = vunpack.c.h.b16 %v1648
        %v1950 = vunpack.c.l.b16 %v1649
        %v1951 = vunpack.c.h.b16 %v1649
        %v1952 = vunpack.c.l.b16 %v1650
        %v1953 = vunpack.c.h.b16 %v1650
        %v1954 = vunpack.c.l.b16 %v1651
        %v1955 = vunpack.c.h.b16 %v1651
        %v1956 = vunpack.c.l.b16 %v1652
        %v1957 = vunpack.c.h.b16 %v1652
        %v1958 = vunpack.c.l.b16 %v1653
        %v1959 = vunpack.c.h.b16 %v1653
        %v1960 = vunpack.c.l.b16 %v1654
        %v1961 = vunpack.c.h.b16 %v1654
        %v1962 = vunpack.c.l.b16 %v1655
        %v1963 = vunpack.c.h.b16 %v1655
        %v1964 = vunpack.c.l.b16 %v1656
        %v1965 = vunpack.c.h.b16 %v1656
        %v1966 = vunpack.c.l.b16 %v1657
        %v1967 = vunpack.c.h.b16 %v1657
        %v1968 = vunpack.c.l.b16 %v1658
        %v1969 = vunpack.c.h.b16 %v1658
        %v1970 = vunpack.c.l.b16 %v1659
        %v1971 = vunpack.c.h.b16 %v1659
        %v1972 = vunpack.c.l.b16 %v1660
        %v1973 = vunpack.c.h.b16 %v1660
        %v1974 = vunpack.c.l.b16 %v1661
        %v1975 = vunpack.c.h.b16 %v1661
        %v1976 = vunpack.c.l.b16 %v1662
        %v1977 = vunpack.c.h.b16 %v1662
        %v1978 = vunpack.c.l.b16 %v1663
        %v1979 = vunpack.c.h.b16 %v1663
        %v1980 = vunpack.c.l.b16 %v1664
        %v1981 = vunpack.c.h.b16 %v1664
        %v1982 = vunpack.c.l.b16 %v1665
        %v1983 = vunpack.c.h.b16 %v1665
        %v1984 = vunpack.c.l.b16 %v1666
        %v1985 = vunpack.c.h.b16 %v1666
        %v1986 = vunpack.c.l.b16 %v1667
        %v1987 = vunpack.c.h.b16 %v1667
        %v1988 = vunpack.c.l.b16 %v1668
        %v1989 = vunpack.c.h.b16 %v1668
        %v1990 = vunpack.c.l.b16 %v1669
        %v1991 = vunpack.c.h.b16 %v1669
        %v1992 = vunpack.c.l.b16 %v1670
        %v1993 = vunpack.c.h.b16 %v1670
        %v1994 = vunpack.c.l.b16 %v1671
        %v1995 = vunpack.c.h.b16 %v1671
        %v1996 = vunpack.c.l.b16 %v1672
        %v1997 = vunpack.c.h.b16 %v1672
        %v1998 = vunpack.c.l.b16 %v1673
        %v1999 = vunpack.c.h.b16 %v1673
        %v2000 = vunpack.c.l.b16 %v1674
        %v2001 = vunpack.c.h.b16 %v1674
        %v2002 = vunpack.c.l.b16 %v1675
        %v2003 = vunpack.c.h.b16 %v1675
        %v2004 = vunpack.c.l.b16 %v1676
        %v2005 = vunpack.c.h.b16 %v1676
        %v2006 = vunpack.c.l.b16 %v1677
        %v2007 = vunpack.c.h.b16 %v1677
        %v2008 = vunpack.c.l.b16 %v1678
        %v2009 = vunpack.c.h.b16 %v1678
        %v2010 = vunpack.c.l.b16 %v1679
        %v2011 = vunpack.c.h.b16 %v1679
        %v2012 = vunpack.c.l.b16 %v1680
        %v2013 = vunpack.c.h.b16 %v1680
        %v2014 = vunpack.c.l.b16 %v1681
        %v2015 = vunpack.c.h.b16 %v1681
        %v2016 = vunpack.c.l.b16 %v1682
        %v2017 = vunpack.c.h.b16 %v1682
        %v2018 = vunpack.c.l.b16 %v1683
        %v2019 = vunpack.c.h.b16 %v1683
        %v2020 = vunpack.c.l.b16 %v1684
        %v2021 = vunpack.c.h.b16 %v1684
        %v2022 = vunpack.c.l.b16 %v1685
        %v2023 = vunpack.c.h.b16 %v1685
        %v2024 = vunpack.c.l.b16 %v1686
        %v2025 = vunpack.c.h.b16 %v1686
        %v2026 = vunpack.c.l.b16 %v1687
        %v2027 = vunpack.c.h.b16 %v1687
        %v2028 = vunpack.c.l.b16 %v1688
        %v2029 = vunpack.c.h.b16 %v1688
        %v2030 = vunpack.c.l.b16 %v1689
        %v2031 = vunpack.c.h.b16 %v1689
        %v2032 = vunpack.c.l.b16 %v1690
        %v2033 = vunpack.c.h.b16 %v1690
        %v2034 = vunpack.c.l.b16 %v1691
        %v2035 = vunpack.c.h.b16 %v1691
        %v2036 = vunpack.c.l.b16 %v1692
        %v2037 = vunpack.c.h.b16 %v1692
        %v2038 = vunpack.c.l.b16 %v1693
        %v2039 = vunpack.c.h.b16 %v1693
        %v2040 = vunpack.c.l.b16 %v1694
        %v2041 = vunpack.c.h.b16 %v1694
        %v2042 = vunpack.c.l.b16 %v1695
        %v2043 = vunpack.c.h.b16 %v1695
        %v2044 = vunpack.c.l.b16 %v1696
        %v2045 = vunpack.c.h.b16 %v1696
        %v2046 = vunpack.c.l.b16 %v1697
        %v2047 = vunpack.c.h.b16 %v1697
        %v2048 = vunpack.c.l.b16 %v1698
        %v2049 = vunpack.c.h.b16 %v1698
        %v2050 = vunpack.c.l.b16 %v1699
        %v2051 = vunpack.c.h.b16 %v1699
        %v2052 = vunpack.c.l.b16 %v1700
        %v2053 = vunpack.c.h.b16 %v1700
        %v2054 = vunpack.c.l.b16 %v1701
        %v2055 = vunpack.c.h.b16 %v1701
        %v2056 = vunpack.c.l.b16 %v1702
        %v2057 = vunpack.c.h.b16 %v1702
        %v2058 = vunpack.c.l.b16 %v1703
        %v2059 = vunpack.c.h.b16 %v1703
        %v2060 = vunpack.c.l.b16 %v1704
        %v2061 = vunpack.c.h.b16 %v1704
        %v2062 = vunpack.c.l.b16 %v1705
        %v2063 = vunpack.c.h.b16 %v1705
        %v2064 = vunpack.c.l.b16 %v1706
        %v2065 = vunpack.c.h.b16 %v1706
        %v2066 = vunpack.c.l.b16 %v1707
        %v2067 = vunpack.c.h.b16 %v1707
        %v2068 = vunpack.c.l.b16 %v1708
        %v2069 = vunpack.c.h.b16 %v1708
        %v2070 = vunpack.c.l.b16 %v1709
        %v2071 = vunpack.c.h.b16 %v1709
        %v2072 = vunpack.c.l.b16 %v1710
        %v2073 = vunpack.c.h.b16 %v1710
        %v2074 = vunpack.c.l.b16 %v1711
        %v2075 = vunpack.c.h.b16 %v1711
        %v2076 = vunpack.c.l.b16 %v1712
        %v2077 = vunpack.c.h.b16 %v1712
        %v2078 = vunpack.c.l.b16 %v1713
        %v2079 = vunpack.c.h.b16 %v1713
        %v2080 = vunpack.c.l.b16 %v1714
        %v2081 = vunpack.c.h.b16 %v1714
        %v2082 = vunpack.c.l.b16 %v1715
        %v2083 = vunpack.c.h.b16 %v1715
        %v2084 = vunpack.c.l.b16 %v1716
        %v2085 = vunpack.c.h.b16 %v1716
        %v2086 = vunpack.c.l.b16 %v1717
        %v2087 = vunpack.c.h.b16 %v1717
        %v2088 = vunpack.c.l.b16 %v1718
        %v2089 = vunpack.c.h.b16 %v1718
        %v2090 = vunpack.c.l.b16 %v1719
        %v2091 = vunpack.c.h.b16 %v1719
        %v2092 = vunpack.c.l.b16 %v1720
        %v2093 = vunpack.c.h.b16 %v1720
        %v2094 = vunpack.c.l.b16 %v1721
        %v2095 = vunpack.c.h.b16 %v1721
        %v2096 = vunpack.c.l.b16 %v1722
        %v2097 = vunpack.c.h.b16 %v1722
        %v2098 = vunpack.c.l.b16 %v1723
        %v2099 = vunpack.c.h.b16 %v1723
        %v2100 = vunpack.c.l.b16 %v1724
        %v2101 = vunpack.c.h.b16 %v1724
        %v2102 = vunpack.c.l.b16 %v1725
        %v2103 = vunpack.c.h.b16 %v1725
        %v2104 = vunpack.c.l.b16 %v1726
        %v2105 = vunpack.c.h.b16 %v1726
        %v2106 = vunpack.c.l.b16 %v1727
        %v2107 = vunpack.c.h.b16 %v1727
        %v2108 = vunpack.c.l.b16 %v1728
        %v2109 = vunpack.c.h.b16 %v1728
        %v2110 = vunpack.c.l.b16 %v1729
        %v2111 = vunpack.c.h.b16 %v1729
        %v2112 = vunpack.c.l.b16 %v1730
        %v2113 = vunpack.c.h.b16 %v1730
        %v2114 = vunpack.c.l.b16 %v1731
        %v2115 = vunpack.c.h.b16 %v1731
        %v2116 = vunpack.c.l.b16 %v1732
        %v2117 = vunpack.c.h.b16 %v1732
        %v2118 = vunpack.c.l.b16 %v1733
        %v2119 = vunpack.c.h.b16 %v1733
        %v2120 = vunpack.c.l.b16 %v1734
        %v2121 = vunpack.c.h.b16 %v1734
        %v2122 = vunpack.c.l.b16 %v1735
        %v2123 = vunpack.c.h.b16 %v1735
        %v2124 = vunpack.c.l.b16 %v1736
        %v2125 = vunpack.c.h.b16 %v1736
        %v2126 = vunpack.c.l.b16 %v1737
        %v2127 = vunpack.c.h.b16 %v1737
        %v2128 = vunpack.c.l.b16 %v1738
        %v2129 = vunpack.c.h.b16 %v1738
        %v2130 = vunpack.c.l.b16 %v1739
        %v2131 = vunpack.c.h.b16 %v1739
        %v2132 = vunpack.c.l.b16 %v1740
        %v2133 = vunpack.c.h.b16 %v1740
        %v2134 = vunpack.c.l.b16 %v1741
        %v2135 = vunpack.c.h.b16 %v1741
        %v2136 = vunpack.c.l.b16 %v1742
        %v2137 = vunpack.c.h.b16 %v1742
        %v2138 = vunpack.c.l.b16 %v1743
        %v2139 = vunpack.c.h.b16 %v1743
        %v2140 = vunpack.c.l.b16 %v1744
        %v2141 = vunpack.c.h.b16 %v1744
        %v2142 = vunpack.c.l.b16 %v1745
        %v2143 = vunpack.c.h.b16 %v1745
        %v2144 = vunpack.c.l.b16 %v1746
        %v2145 = vunpack.c.h.b16 %v1746
        %v2146 = vunpack.c.l.b16 %v1747
        %v2147 = vunpack.c.h.b16 %v1747
        %v2148 = vunpack.c.l.b16 %v1748
        %v2149 = vunpack.c.h.b16 %v1748
        %v2150 = vunpack.c.l.b16 %v1749
        %v2151 = vunpack.c.h.b16 %v1749
        %v2152 = vunpack.c.l.b16 %v1750
        %v2153 = vunpack.c.h.b16 %v1750
        %v2154 = vunpack.c.l.b16 %v1751
        %v2155 = vunpack.c.h.b16 %v1751
        %v2156 = vunpack.c.l.b16 %v1752
        %v2157 = vunpack.c.h.b16 %v1752
        %v2158 = vunpack.c.l.b16 %v1753
        %v2159 = vunpack.c.h.b16 %v1753
        %v2160 = vunpack.c.l.b16 %v1754
        %v2161 = vunpack.c.h.b16 %v1754
        %v2162 = vunpack.c.l.b16 %v1755
        %v2163 = vunpack.c.h.b16 %v1755
        %v2164 = vunpack.c.l.b16 %v1756
        %v2165 = vunpack.c.h.b16 %v1756
        %v2166 = vunpack.c.l.b16 %v1757
        %v2167 = vunpack.c.h.b16 %v1757
        %v2168 = vunpack.c.l.b16 %v1758
        %v2169 = vunpack.c.h.b16 %v1758
        %v2170 = vunpack.c.l.b16 %v1759
        %v2171 = vunpack.c.h.b16 %v1759
        %v2172 = vunpack.c.l.b16 %v1760
        %v2173 = vunpack.c.h.b16 %v1760
        %v2174 = vunpack.c.l.b16 %v1761
        %v2175 = vunpack.c.h.b16 %v1761
        %v2176 = vunpack.c.l.b16 %v1762
        %v2177 = vunpack.c.h.b16 %v1762
        %v2178 = vunpack.c.l.b16 %v1763
        %v2179 = vunpack.c.h.b16 %v1763
        %v2180 = vunpack.c.l.b16 %v1764
        %v2181 = vunpack.c.h.b16 %v1764
        %v2182 = vunpack.c.l.b16 %v1765
        %v2183 = vunpack.c.h.b16 %v1765
        %v2184 = vunpack.c.l.b16 %v1766
        %v2185 = vunpack.c.h.b16 %v1766
        %v2186 = vunpack.c.l.b16 %v1767
        %v2187 = vunpack.c.h.b16 %v1767
        %v2188 = vunpack.c.l.b16 %v1768
        %v2189 = vunpack.c.h.b16 %v1768
        %v2190 = vunpack.c.l.b16 %v1769
        %v2191 = vunpack.c.h.b16 %v1769
        %v2192 = vunpack.c.l.b16 %v1770
        %v2193 = vunpack.c.h.b16 %v1770
        %v2194 = vunpack.c.l.b16 %v1771
        %v2195 = vunpack.c.h.b16 %v1771
        %v2196 = vunpack.c.l.b16 %v1772
        %v2197 = vunpack.c.h.b16 %v1772
        %v2198 = vunpack.c.l.b16 %v1773
        %v2199 = vunpack.c.h.b16 %v1773
        %v2200 = vunpack.c.l.b16 %v1774
        %v2201 = vunpack.c.h.b16 %v1774
        %v2202 = vunpack.c.l.b16 %v1775
        %v2203 = vunpack.c.h.b16 %v1775
        %v2204 = vunpack.c.l.b16 %v1776
        %v2205 = vunpack.c.h.b16 %v1776
        %v2206 = vunpack.c.l.b16 %v1777
        %v2207 = vunpack.c.h.b16 %v1777
        %v2208 = vunpack.c.l.b16 %v1778
        %v2209 = vunpack.c.h.b16 %v1778
        %v2210 = vunpack.c.l.b16 %v1779
        %v2211 = vunpack.c.h.b16 %v1779
        %v2212 = vunpack.c.l.b16 %v1780
        %v2213 = vunpack.c.h.b16 %v1780
        %v2214 = vunpack.c.l.b16 %v1781
        %v2215 = vunpack.c.h.b16 %v1781
        %v2216 = vunpack.c.l.b16 %v1782
        %v2217 = vunpack.c.h.b16 %v1782
        %v2218 = vunpack.c.l.b16 %v1783
        %v2219 = vunpack.c.h.b16 %v1783
        %v2220 = vunpack.c.l.b16 %v1784
        %v2221 = vunpack.c.h.b16 %v1784
        %v2222 = vunpack.c.l.b16 %v1785
        %v2223 = vunpack.c.h.b16 %v1785
        %v2224 = vunpack.c.l.b16 %v1786
        %v2225 = vunpack.c.h.b16 %v1786
        %v2226 = vunpack.c.l.b16 %v1787
        %v2227 = vunpack.c.h.b16 %v1787
        %v2228 = vunpack.c.l.b16 %v1788
        %v2229 = vunpack.c.h.b16 %v1788
        %v2230 = vunpack.c.l.b16 %v1789
        %v2231 = vunpack.c.h.b16 %v1789
        %v2232 = vunpack.c.l.b16 %v1790
        %v2233 = vunpack.c.h.b16 %v1790
        %v2234 = vunpack.c.l.b16 %v1791
        %v2235 = vunpack.c.h.b16 %v1791
        %v2236 = vunpack.c.l.b16 %v1792
        %v2237 = vunpack.c.h.b16 %v1792
        %v2238 = vunpack.c.l.b16 %v1793
        %v2239 = vunpack.c.h.b16 %v1793
        %v2240 = vunpack.c.l.b16 %v1794
        %v2241 = vunpack.c.h.b16 %v1794
        %v2242 = vunpack.c.l.b16 %v1795
        %v2243 = vunpack.c.h.b16 %v1795
        %v2244 = vunpack.c.l.b16 %v1796
        %v2245 = vunpack.c.h.b16 %v1796
        %v2246 = vunpack.c.l.b16 %v1797
        %v2247 = vunpack.c.h.b16 %v1797
        %v2248 = vpack.c.b16 %v2098, %v1948
        %v2249 = vpack.c.b16 %v2099, %v1949
        %v2250 = vpack.c.b16 %v2100, %v1950
        %v2251 = vpack.c.b16 %v2101, %v1951
        %v2252 = vpack.c.b16 %v2102, %v1952
        %v2253 = vpack.c.b16 %v2103, %v1953
        %v2254 = vpack.c.b16 %v2104, %v1954
        %v2255 = vpack.c.b16 %v2105, %v1955
        %v2256 = vpack.c.b16 %v2106, %v1956
        %v2257 = vpack.c.b16 %v2107, %v1957
        %v2258 = vpack.c.b16 %v2108, %v1958
        %v2259 = vpack.c.b16 %v2109, %v1959
        %v2260 = vpack.c.b16 %v2110, %v1960
        %v2261 = vpack.c.b16 %v2111, %v1961
        %v2262 = vpack.c.b16 %v2112, %v1962
        %v2263 = vpack.c.b16 %v2113, %v1963
        %v2264 = vpack.c.b16 %v2114, %v1964
        %v2265 = vpack.c.b16 %v2115, %v1965
        %v2266 = vpack.c.b16 %v2116, %v1966
        %v2267 = vpack.c.b16 %v2117, %v1967
        %v2268 = vpack.c.b16 %v2118, %v1968
        %v2269 = vpack.c.b16 %v2119, %v1969
        %v2270 = vpack.c.b16 %v2120, %v1970
        %v2271 = vpack.c.b16 %v2121, %v1971
        %v2272 = vpack.c.b16 %v2122, %v1972
        %v2273 = vpack.c.b16 %v2123, %v1973
        %v2274 = vpack.c.b16 %v2124, %v1974
        %v2275 = vpack.c.b16 %v2125, %v1975
        %v2276 = vpack.c.b16 %v2126, %v1976
        %v2277 = vpack.c.b16 %v2127, %v1977
        %v2278 = vpack.c.b16 %v2128, %v1978
        %v2279 = vpack.c.b16 %v2129, %v1979
        %v2280 = vpack.c.b16 %v2130, %v1980
        %v2281 = vpack.c.b16 %v2131, %v1981
        %v2282 = vpack.c.b16 %v2132, %v1982
        %v2283 = vpack.c.b16 %v2133, %v1983
        %v2284 = vpack.c.b16 %v2134, %v1984
        %v2285 = vpack.c.b16 %v2135, %v1985
        %v2286 = vpack.c.b16 %v2136, %v1986
        %v2287 = vpack.c.b16 %v2137, %v1987
        %v2288 = vpack.c.b16 %v2138, %v1988
        %v2289 = vpack.c.b16 %v2139, %v1989
        %v2290 = vpack.c.b16 %v2140, %v1990
        %v2291 = vpack.c.b16 %v2141, %v1991
        %v2292 = vpack.c.b16 %v2142, %v1992
        %v2293 = vpack.c.b16 %v2143, %v1993
        %v2294 = vpack.c.b16 %v2144, %v1994
        %v2295 = vpack.c.b16 %v2145, %v1995
        %v2296 = vpack.c.b16 %v2146, %v1996
        %v2297 = vpack.c.b16 %v2147, %v1997
        %v2298 = vpack.c.b16 %v2148, %v1998
        %v2299 = vpack.c.b16 %v2149, %v1999
        %v2300 = vpack.c.b16 %v2150, %v2000
        %v2301 = vpack.c.b16 %v2151, %v2001
        %v2302 = vpack.c.b16 %v2152, %v2002
        %v2303 = vpack.c.b16 %v2153, %v2003
        %v2304 = vpack.c.b16 %v2154, %v2004
        %v2305 = vpack.c.b16 %v2155, %v2005
        %v2306 = vpack.c.b16 %v2156, %v2006
        %v2307 = vpack.c.b16 %v2157, %v2007
        %v2308 = vpack.c.b16 %v2158, %v2008
        %v2309 = vpack.c.b16 %v2159, %v2009
        %v2310 = vpack.c.b16 %v2160, %v2010
        %v2311 = vpack.c.b16 %v2161, %v2011
        %v2312 = vpack.c.b16 %v2162, %v2012
        %v2313 = vpack.c.b16 %v2163, %v2013
        %v2314 = vpack.c.b16 %v2164, %v2014
        %v2315 = vpack.c.b16 %v2165, %v2015
        %v2316 = vpack.c.b16 %v2166, %v2016
        %v2317 = vpack.c.b16 %v2167, %v2017
        %v2318 = vpack.c.b16 %v2168, %v2018
        %v2319 = vpack.c.b16 %v2169, %v2019
        %v2320 = vpack.c.b16 %v2170, %v2020
        %v2321 = vpack.c.b16 %v2171, %v2021
        %v2322 = vpack.c.b16 %v2172, %v2022
        %v2323 = vpack.c.b16 %v2173, %v2023
        %v2324 = vpack.c.b16 %v2174, %v2024
        %v2325 = vpack.c.b16 %v2175, %v2025
        %v2326 = vpack.c.b16 %v2176, %v2026
        %v2327 = vpack.c.b16 %v2177, %v2027
        %v2328 = vpack.c.b16 %v2178, %v2028
        %v2329 = vpack.c.b16 %v2179, %v2029
        %v2330 = vpack.c.b16 %v2180, %v2030
        %v2331 = vpack.c.b16 %v2181, %v2031
        %v2332 = vpack.c.b16 %v2182, %v2032
        %v2333 = vpack.c.b16 %v2183, %v2033
        %v2334 = vpack.c.b16 %v2184, %v2034
        %v2335 = vpack.c.b16 %v2185, %v2035
        %v2336 = vpack.c.b16 %v2186, %v2036
        %v2337 = vpack.c.b16 %v2187, %v2037
        %v2338 = vpack.c.b16 %v2188, %v2038
        %v2339 = vpack.c.b16 %v2189, %v2039
        %v2340 = vpack.c.b16 %v2190, %v2040
        %v2341 = vpack.c.b16 %v2191, %v2041
        %v2342 = vpack.c.b16 %v2192, %v2042
        %v2343 = vpack.c.b16 %v2193, %v2043
        %v2344 = vpack.c.b16 %v2194, %v2044
        %v2345 = vpack.c.b16 %v2195, %v2045
        %v2346 = vpack.c.b16 %v2196, %v2046
        %v2347 = vpack.c.b16 %v2197, %v2047
        %v2348 = vpack.c.b16 %v2198, %v2048
        %v2349 = vpack.c.b16 %v2199, %v2049
        %v2350 = vpack.c.b16 %v2200, %v2050
        %v2351 = vpack.c.b16 %v2201, %v2051
        %v2352 = vpack.c.b16 %v2202, %v2052
        %v2353 = vpack.c.b16 %v2203, %v2053
        %v2354 = vpack.c.b16 %v2204, %v2054
        %v2355 = vpack.c.b16 %v2205, %v2055
        %v2356 = vpack.c.b16 %v2206, %v2056
        %v2357 = vpack.c.b16 %v2207, %v2057
        %v2358 = vpack.c.b16 %v2208, %v2058
        %v2359 = vpack.c.b16 %v2209, %v2059
        %v2360 = vpack.c.b16 %v2210, %v2060
        %v2361 = vpack.c.b16 %v2211, %v2061
        %v2362 = vpack.c.b16 %v2212, %v2062
        %v2363 = vpack.c.b16 %v2213, %v2063
        %v2364 = vpack.c.b16 %v2214, %v2064
        %v2365 = vpack.c.b16 %v2215, %v2065
        %v2366 = vpack.c.b16 %v2216, %v2066
        %v2367 = vpack.c.b16 %v2217, %v2067
        %v2368 = vpack.c.b16 %v2218, %v2068
        %v2369 = vpack.c.b16 %v2219, %v2069
        %v2370 = vpack.c.b16 %v2220, %v2070
        %v2371 = vpack.c.b16 %v2221, %v2071
        %v2372 = vpack.c.b16 %v2222, %v2072
        %v2373 = vpack.c.b16 %v2223, %v2073
        %v2374 = vpack.c.b16 %v2224, %v2074
        %v2375 = vpack.c.b16 %v2225, %v2075
        %v2376 = vpack.c.b16 %v2226, %v2076
        %v2377 = vpack.c.b16 %v2227, %v2077
        %v2378 = vpack.c.b16 %v2228, %v2078
        %v2379 = vpack.c.b16 %v2229, %v2079
        %v2380 = vpack.c.b16 %v2230, %v2080
        %v2381 = vpack.c.b16 %v2231, %v2081
        %v2382 = vpack.c.b16 %v2232, %v2082
        %v2383 = vpack.c.b16 %v2233, %v2083
        %v2384 = vpack.c.b16 %v2234, %v2084
        %v2385 = vpack.c.b16 %v2235, %v2085
        %v2386 = vpack.c.b16 %v2236, %v2086
        %v2387 = vpack.c.b16 %v2237, %v2087
        %v2388 = vpack.c.b16 %v2238, %v2088
        %v2389 = vpack.c.b16 %v2239, %v2089
        %v2390 = vpack.c.b16 %v2240, %v2090
        %v2391 = vpack.c.b16 %v2241, %v2091
        %v2392 = vpack.c.b16 %v2242, %v2092
        %v2393 = vpack.c.b16 %v2243, %v2093
        %v2394 = vpack.c.b16 %v2244, %v2094
        %v2395 = vpack.c.b16 %v2245, %v2095
        %v2396 = vpack.c.b16 %v2246, %v2096
        %v2397 = vpack.c.b16 %v2247, %v2097
        %2548 = vmatprep.subr.bf16.mxu0 %v2249
        %2549 = vmatpush1.bf16.xpose.msra.mxu0 %v2248
        %2550 = vmatprep.subr.bf16.mxu0 0
        %2551 = vmatpush1.bf16.xpose.msra.mxu0 0
        %2552 = vmatprep.subr.bf16.mxu0 0
        %2553 = vmatpush1.bf16.xpose.msra.mxu0 0
        %2554 = vmatprep.subr.bf16.mxu0 0
        %2555 = vmatpush1.bf16.xpose.msra.mxu0 0
        %2556 = vmatprep.subr.bf16.mxu0 0
        %2557 = vmatpush1.bf16.xpose.msra.mxu0 0
        %2558 = vmatprep.subr.bf16.mxu0 0
        %2559 = vmatpush1.bf16.xpose.msra.mxu0 0
        %2560 = vmatprep.subr.bf16.mxu0 0
        %2561 = vmatpush1.bf16.xpose.msra.mxu0 0
        %2562 = vmatprep.subr.bf16.mxu0 0
        %2563 = vmatpush1.bf16.xpose.msra.mxu0 0
        %2564 = vmatprep.subr.bf16.mxu0 0
        %2565 = vmatpush1.bf16.xpose.msra.mxu0 0
        %2566 = vmatprep.subr.bf16.mxu0 0
        %2567 = vmatpush1.bf16.xpose.msra.mxu0 0
        %2568 = vmatprep.subr.bf16.mxu0 0
        %2569 = vmatpush1.bf16.xpose.msra.mxu0 0
        %2570 = vmatprep.subr.bf16.mxu0 0
        %2571 = vmatpush1.bf16.xpose.msra.mxu0 0
        %2572 = vmatprep.subr.bf16.mxu0 0
        %2573 = vmatpush1.bf16.xpose.msra.mxu0 0
        %2574 = vmatprep.subr.bf16.mxu0 0
        %2575 = vmatpush1.bf16.xpose.msra.mxu0 0
        %2576 = vmatprep.subr.bf16.mxu0 0
        %2577 = vmatpush1.bf16.xpose.msra.mxu0 0
        %2578 = vmatprep.subr.bf16.mxu0 0
        %2579 = vmatpush1.bf16.xpose.msra.mxu0 0
        %2580 = vmatprep.mubr.bf16.mxu0 %v1423
        %2581 = vmatmul.mubr.bf16.gmra.mrb[0].mxu0 %v1422
        %v2582 = vpop.f32.mrb[0].mxu0
        %v2583 = vadd.f32 0.0, %v2582
        %v2584 = vpop.f32.mrb[0].mxu0
        %v2585 = vpop.f32.mrb[0].mxu0
        %v2586 = vpop.f32.mrb[0].mxu0
        %2587 = vdwg.mxu0
        %2588 = vmatprep.subr.bf16.mxu0 %v2251
        %2589 = vmatpush1.bf16.xpose.msra.mxu0 %v2250
        %2590 = vmatprep.subr.bf16.mxu0 0
        %2591 = vmatpush1.bf16.xpose.msra.mxu0 0
        %2592 = vmatprep.subr.bf16.mxu0 0
        %2593 = vmatpush1.bf16.xpose.msra.mxu0 0
        %2594 = vmatprep.subr.bf16.mxu0 0
        %2595 = vmatpush1.bf16.xpose.msra.mxu0 0
        %2596 = vmatprep.subr.bf16.mxu0 0
        %2597 = vmatpush1.bf16.xpose.msra.mxu0 0
        %2598 = vmatprep.subr.bf16.mxu0 0
        %2599 = vmatpush1.bf16.xpose.msra.mxu0 0
        %2600 = vmatprep.subr.bf16.mxu0 0
        %2601 = vmatpush1.bf16.xpose.msra.mxu0 0
        %2602 = vmatprep.subr.bf16.mxu0 0
        %2603 = vmatpush1.bf16.xpose.msra.mxu0 0
        %2604 = vmatprep.subr.bf16.mxu0 0
        %2605 = vmatpush1.bf16.xpose.msra.mxu0 0
        %2606 = vmatprep.subr.bf16.mxu0 0
        %2607 = vmatpush1.bf16.xpose.msra.mxu0 0
        %2608 = vmatprep.subr.bf16.mxu0 0
        %2609 = vmatpush1.bf16.xpose.msra.mxu0 0
        %2610 = vmatprep.subr.bf16.mxu0 0
        %2611 = vmatpush1.bf16.xpose.msra.mxu0 0
        %2612 = vmatprep.subr.bf16.mxu0 0
        %2613 = vmatpush1.bf16.xpose.msra.mxu0 0
        %2614 = vmatprep.subr.bf16.mxu0 0
        %2615 = vmatpush1.bf16.xpose.msra.mxu0 0
        %2616 = vmatprep.subr.bf16.mxu0 0
        %2617 = vmatpush1.bf16.xpose.msra.mxu0 0
        %2618 = vmatprep.subr.bf16.mxu0 0
        %2619 = vmatpush1.bf16.xpose.msra.mxu0 0
        %2620 = vmatprep.mubr.bf16.mxu0 %v1425
        %2621 = vmatmul.mubr.bf16.gmra.mrb[0].mxu0 %v1424
        %v2622 = vpop.f32.mrb[0].mxu0
        %v2623 = vadd.f32 %v2583, %v2622
        %v2624 = vpop.f32.mrb[0].mxu0
        %v2625 = vpop.f32.mrb[0].mxu0
        %v2626 = vpop.f32.mrb[0].mxu0
        %2627 = vdwg.mxu0
        %2628 = vmatprep.subr.bf16.mxu0 %v2253
        %2629 = vmatpush1.bf16.xpose.msra.mxu0 %v2252
        %2630 = vmatprep.subr.bf16.mxu0 0
        %2631 = vmatpush1.bf16.xpose.msra.mxu0 0
        %2632 = vmatprep.subr.bf16.mxu0 0
        %2633 = vmatpush1.bf16.xpose.msra.mxu0 0
        %2634 = vmatprep.subr.bf16.mxu0 0
        %2635 = vmatpush1.bf16.xpose.msra.mxu0 0
        %2636 = vmatprep.subr.bf16.mxu0 0
        %2637 = vmatpush1.bf16.xpose.msra.mxu0 0
        %2638 = vmatprep.subr.bf16.mxu0 0
        %2639 = vmatpush1.bf16.xpose.msra.mxu0 0
        %2640 = vmatprep.subr.bf16.mxu0 0
        %2641 = vmatpush1.bf16.xpose.msra.mxu0 0
        %2642 = vmatprep.subr.bf16.mxu0 0
        %2643 = vmatpush1.bf16.xpose.msra.mxu0 0
        %2644 = vmatprep.subr.bf16.mxu0 0
        %2645 = vmatpush1.bf16.xpose.msra.mxu0 0
        %2646 = vmatprep.subr.bf16.mxu0 0
        %2647 = vmatpush1.bf16.xpose.msra.mxu0 0
        %2648 = vmatprep.subr.bf16.mxu0 0
        %2649 = vmatpush1.bf16.xpose.msra.mxu0 0
        %2650 = vmatprep.subr.bf16.mxu0 0
        %2651 = vmatpush1.bf16.xpose.msra.mxu0 0
        %2652 = vmatprep.subr.bf16.mxu0 0
        %2653 = vmatpush1.bf16.xpose.msra.mxu0 0
        %2654 = vmatprep.subr.bf16.mxu0 0
        %2655 = vmatpush1.bf16.xpose.msra.mxu0 0
        %2656 = vmatprep.subr.bf16.mxu0 0
        %2657 = vmatpush1.bf16.xpose.msra.mxu0 0
        %2658 = vmatprep.subr.bf16.mxu0 0
        %2659 = vmatpush1.bf16.xpose.msra.mxu0 0
        %2660 = vmatprep.mubr.bf16.mxu0 %v1427
        %2661 = vmatmul.mubr.bf16.gmra.mrb[0].mxu0 %v1426
        %v2662 = vpop.f32.mrb[0].mxu0
        %v2663 = vadd.f32 %v2623, %v2662
        %v2664 = vpop.f32.mrb[0].mxu0
        %v2665 = vpop.f32.mrb[0].mxu0
        %v2666 = vpop.f32.mrb[0].mxu0
        %2667 = vdwg.mxu0
        %2668 = vmatprep.subr.bf16.mxu0 %v2255
        %2669 = vmatpush1.bf16.xpose.msra.mxu0 %v2254
        %2670 = vmatprep.subr.bf16.mxu0 0
        %2671 = vmatpush1.bf16.xpose.msra.mxu0 0
        %2672 = vmatprep.subr.bf16.mxu0 0
        %2673 = vmatpush1.bf16.xpose.msra.mxu0 0
        %2674 = vmatprep.subr.bf16.mxu0 0
        %2675 = vmatpush1.bf16.xpose.msra.mxu0 0
        %2676 = vmatprep.subr.bf16.mxu0 0
        %2677 = vmatpush1.bf16.xpose.msra.mxu0 0
        %2678 = vmatprep.subr.bf16.mxu0 0
        %2679 = vmatpush1.bf16.xpose.msra.mxu0 0
        %2680 = vmatprep.subr.bf16.mxu0 0
        %2681 = vmatpush1.bf16.xpose.msra.mxu0 0
        %2682 = vmatprep.subr.bf16.mxu0 0
        %2683 = vmatpush1.bf16.xpose.msra.mxu0 0
        %2684 = vmatprep.subr.bf16.mxu0 0
        %2685 = vmatpush1.bf16.xpose.msra.mxu0 0
        %2686 = vmatprep.subr.bf16.mxu0 0
        %2687 = vmatpush1.bf16.xpose.msra.mxu0 0
        %2688 = vmatprep.subr.bf16.mxu0 0
        %2689 = vmatpush1.bf16.xpose.msra.mxu0 0
        %2690 = vmatprep.subr.bf16.mxu0 0
        %2691 = vmatpush1.bf16.xpose.msra.mxu0 0
        %2692 = vmatprep.subr.bf16.mxu0 0
        %2693 = vmatpush1.bf16.xpose.msra.mxu0 0
        %2694 = vmatprep.subr.bf16.mxu0 0
        %2695 = vmatpush1.bf16.xpose.msra.mxu0 0
        %2696 = vmatprep.subr.bf16.mxu0 0
        %2697 = vmatpush1.bf16.xpose.msra.mxu0 0
        %2698 = vmatprep.subr.bf16.mxu0 0
        %2699 = vmatpush1.bf16.xpose.msra.mxu0 0
        %2700 = vmatprep.mubr.bf16.mxu0 %v1429
        %2701 = vmatmul.mubr.bf16.gmra.mrb[0].mxu0 %v1428
        %v2702 = vpop.f32.mrb[0].mxu0
        %v2703 = vadd.f32 %v2663, %v2702
        %v2704 = vpop.f32.mrb[0].mxu0
        %v2705 = vpop.f32.mrb[0].mxu0
        %v2706 = vpop.f32.mrb[0].mxu0
        %2707 = vdwg.mxu0
        %2708 = vmatprep.subr.bf16.mxu0 %v2257
        %2709 = vmatpush1.bf16.xpose.msra.mxu0 %v2256
        %2710 = vmatprep.subr.bf16.mxu0 0
        %2711 = vmatpush1.bf16.xpose.msra.mxu0 0
        %2712 = vmatprep.subr.bf16.mxu0 0
        %2713 = vmatpush1.bf16.xpose.msra.mxu0 0
        %2714 = vmatprep.subr.bf16.mxu0 0
        %2715 = vmatpush1.bf16.xpose.msra.mxu0 0
        %2716 = vmatprep.subr.bf16.mxu0 0
        %2717 = vmatpush1.bf16.xpose.msra.mxu0 0
        %2718 = vmatprep.subr.bf16.mxu0 0
        %2719 = vmatpush1.bf16.xpose.msra.mxu0 0
        %2720 = vmatprep.subr.bf16.mxu0 0
        %2721 = vmatpush1.bf16.xpose.msra.mxu0 0
        %2722 = vmatprep.subr.bf16.mxu0 0
        %2723 = vmatpush1.bf16.xpose.msra.mxu0 0
        %2724 = vmatprep.subr.bf16.mxu0 0
        %2725 = vmatpush1.bf16.xpose.msra.mxu0 0
        %2726 = vmatprep.subr.bf16.mxu0 0
        %2727 = vmatpush1.bf16.xpose.msra.mxu0 0
        %2728 = vmatprep.subr.bf16.mxu0 0
        %2729 = vmatpush1.bf16.xpose.msra.mxu0 0
        %2730 = vmatprep.subr.bf16.mxu0 0
        %2731 = vmatpush1.bf16.xpose.msra.mxu0 0
        %2732 = vmatprep.subr.bf16.mxu0 0
        %2733 = vmatpush1.bf16.xpose.msra.mxu0 0
        %2734 = vmatprep.subr.bf16.mxu0 0
        %2735 = vmatpush1.bf16.xpose.msra.mxu0 0
        %2736 = vmatprep.subr.bf16.mxu0 0
        %2737 = vmatpush1.bf16.xpose.msra.mxu0 0
        %2738 = vmatprep.subr.bf16.mxu0 0
        %2739 = vmatpush1.bf16.xpose.msra.mxu0 0
        %2740 = vmatprep.mubr.bf16.mxu0 %v1431
        %2741 = vmatmul.mubr.bf16.gmra.mrb[0].mxu0 %v1430
        %v2742 = vpop.f32.mrb[0].mxu0
        %v2743 = vadd.f32 %v2703, %v2742
        %v2744 = vpop.f32.mrb[0].mxu0
        %v2745 = vpop.f32.mrb[0].mxu0
        %v2746 = vpop.f32.mrb[0].mxu0
        %2747 = vdwg.mxu0
        %2748 = vmatprep.subr.bf16.mxu0 %v2259
        %2749 = vmatpush1.bf16.xpose.msra.mxu0 %v2258
        %2750 = vmatprep.subr.bf16.mxu0 0
        %2751 = vmatpush1.bf16.xpose.msra.mxu0 0
        %2752 = vmatprep.subr.bf16.mxu0 0
        %2753 = vmatpush1.bf16.xpose.msra.mxu0 0
        %2754 = vmatprep.subr.bf16.mxu0 0
        %2755 = vmatpush1.bf16.xpose.msra.mxu0 0
        %2756 = vmatprep.subr.bf16.mxu0 0
        %2757 = vmatpush1.bf16.xpose.msra.mxu0 0
        %2758 = vmatprep.subr.bf16.mxu0 0
        %2759 = vmatpush1.bf16.xpose.msra.mxu0 0
        %2760 = vmatprep.subr.bf16.mxu0 0
        %2761 = vmatpush1.bf16.xpose.msra.mxu0 0
        %2762 = vmatprep.subr.bf16.mxu0 0
        %2763 = vmatpush1.bf16.xpose.msra.mxu0 0
        %2764 = vmatprep.subr.bf16.mxu0 0
        %2765 = vmatpush1.bf16.xpose.msra.mxu0 0
        %2766 = vmatprep.subr.bf16.mxu0 0
        %2767 = vmatpush1.bf16.xpose.msra.mxu0 0
        %2768 = vmatprep.subr.bf16.mxu0 0
        %2769 = vmatpush1.bf16.xpose.msra.mxu0 0
        %2770 = vmatprep.subr.bf16.mxu0 0
        %2771 = vmatpush1.bf16.xpose.msra.mxu0 0
        %2772 = vmatprep.subr.bf16.mxu0 0
        %2773 = vmatpush1.bf16.xpose.msra.mxu0 0
        %2774 = vmatprep.subr.bf16.mxu0 0
        %2775 = vmatpush1.bf16.xpose.msra.mxu0 0
        %2776 = vmatprep.subr.bf16.mxu0 0
        %2777 = vmatpush1.bf16.xpose.msra.mxu0 0
        %2778 = vmatprep.subr.bf16.mxu0 0
        %2779 = vmatpush1.bf16.xpose.msra.mxu0 0
        %2780 = vmatprep.mubr.bf16.mxu0 %v1433
        %2781 = vmatmul.mubr.bf16.gmra.mrb[0].mxu0 %v1432
        %v2782 = vpop.f32.mrb[0].mxu0
        %v2783 = vadd.f32 %v2743, %v2782
        %v2784 = vpop.f32.mrb[0].mxu0
        %v2785 = vpop.f32.mrb[0].mxu0
        %v2786 = vpop.f32.mrb[0].mxu0
        %2787 = vdwg.mxu0
        %2788 = vmatprep.subr.bf16.mxu0 %v2261
        %2789 = vmatpush1.bf16.xpose.msra.mxu0 %v2260
        %2790 = vmatprep.subr.bf16.mxu0 0
        %2791 = vmatpush1.bf16.xpose.msra.mxu0 0
        %2792 = vmatprep.subr.bf16.mxu0 0
        %2793 = vmatpush1.bf16.xpose.msra.mxu0 0
        %2794 = vmatprep.subr.bf16.mxu0 0
        %2795 = vmatpush1.bf16.xpose.msra.mxu0 0
        %2796 = vmatprep.subr.bf16.mxu0 0
        %2797 = vmatpush1.bf16.xpose.msra.mxu0 0
        %2798 = vmatprep.subr.bf16.mxu0 0
        %2799 = vmatpush1.bf16.xpose.msra.mxu0 0
        %2800 = vmatprep.subr.bf16.mxu0 0
        %2801 = vmatpush1.bf16.xpose.msra.mxu0 0
        %2802 = vmatprep.subr.bf16.mxu0 0
        %2803 = vmatpush1.bf16.xpose.msra.mxu0 0
        %2804 = vmatprep.subr.bf16.mxu0 0
        %2805 = vmatpush1.bf16.xpose.msra.mxu0 0
        %2806 = vmatprep.subr.bf16.mxu0 0
        %2807 = vmatpush1.bf16.xpose.msra.mxu0 0
        %2808 = vmatprep.subr.bf16.mxu0 0
        %2809 = vmatpush1.bf16.xpose.msra.mxu0 0
        %2810 = vmatprep.subr.bf16.mxu0 0
        %2811 = vmatpush1.bf16.xpose.msra.mxu0 0
        %2812 = vmatprep.subr.bf16.mxu0 0
        %2813 = vmatpush1.bf16.xpose.msra.mxu0 0
        %2814 = vmatprep.subr.bf16.mxu0 0
        %2815 = vmatpush1.bf16.xpose.msra.mxu0 0
        %2816 = vmatprep.subr.bf16.mxu0 0
        %2817 = vmatpush1.bf16.xpose.msra.mxu0 0
        %2818 = vmatprep.subr.bf16.mxu0 0
        %2819 = vmatpush1.bf16.xpose.msra.mxu0 0
        %2820 = vmatprep.mubr.bf16.mxu0 %v1435
        %2821 = vmatmul.mubr.bf16.gmra.mrb[0].mxu0 %v1434
        %v2822 = vpop.f32.mrb[0].mxu0
        %v2823 = vadd.f32 %v2783, %v2822
        %v2824 = vpop.f32.mrb[0].mxu0
        %v2825 = vpop.f32.mrb[0].mxu0
        %v2826 = vpop.f32.mrb[0].mxu0
        %2827 = vdwg.mxu0
        %2828 = vmatprep.subr.bf16.mxu0 %v2263
        %2829 = vmatpush1.bf16.xpose.msra.mxu0 %v2262
        %2830 = vmatprep.subr.bf16.mxu0 0
        %2831 = vmatpush1.bf16.xpose.msra.mxu0 0
        %2832 = vmatprep.subr.bf16.mxu0 0
        %2833 = vmatpush1.bf16.xpose.msra.mxu0 0
        %2834 = vmatprep.subr.bf16.mxu0 0
        %2835 = vmatpush1.bf16.xpose.msra.mxu0 0
        %2836 = vmatprep.subr.bf16.mxu0 0
        %2837 = vmatpush1.bf16.xpose.msra.mxu0 0
        %2838 = vmatprep.subr.bf16.mxu0 0
        %2839 = vmatpush1.bf16.xpose.msra.mxu0 0
        %2840 = vmatprep.subr.bf16.mxu0 0
        %2841 = vmatpush1.bf16.xpose.msra.mxu0 0
        %2842 = vmatprep.subr.bf16.mxu0 0
        %2843 = vmatpush1.bf16.xpose.msra.mxu0 0
        %2844 = vmatprep.subr.bf16.mxu0 0
        %2845 = vmatpush1.bf16.xpose.msra.mxu0 0
        %2846 = vmatprep.subr.bf16.mxu0 0
        %2847 = vmatpush1.bf16.xpose.msra.mxu0 0
        %2848 = vmatprep.subr.bf16.mxu0 0
        %2849 = vmatpush1.bf16.xpose.msra.mxu0 0
        %2850 = vmatprep.subr.bf16.mxu0 0
        %2851 = vmatpush1.bf16.xpose.msra.mxu0 0
        %2852 = vmatprep.subr.bf16.mxu0 0
        %2853 = vmatpush1.bf16.xpose.msra.mxu0 0
        %2854 = vmatprep.subr.bf16.mxu0 0
        %2855 = vmatpush1.bf16.xpose.msra.mxu0 0
        %2856 = vmatprep.subr.bf16.mxu0 0
        %2857 = vmatpush1.bf16.xpose.msra.mxu0 0
        %2858 = vmatprep.subr.bf16.mxu0 0
        %2859 = vmatpush1.bf16.xpose.msra.mxu0 0
        %2860 = vmatprep.mubr.bf16.mxu0 %v1437
        %2861 = vmatmul.mubr.bf16.gmra.mrb[0].mxu0 %v1436
        %v2862 = vpop.f32.mrb[0].mxu0
        %v2863 = vadd.f32 %v2823, %v2862
        %v2864 = vpop.f32.mrb[0].mxu0
        %v2865 = vpop.f32.mrb[0].mxu0
        %v2866 = vpop.f32.mrb[0].mxu0
        %2867 = vdwg.mxu0
        %2868 = vmatprep.subr.bf16.mxu0 %v2265
        %2869 = vmatpush1.bf16.xpose.msra.mxu0 %v2264
        %2870 = vmatprep.subr.bf16.mxu0 0
        %2871 = vmatpush1.bf16.xpose.msra.mxu0 0
        %2872 = vmatprep.subr.bf16.mxu0 0
        %2873 = vmatpush1.bf16.xpose.msra.mxu0 0
        %2874 = vmatprep.subr.bf16.mxu0 0
        %2875 = vmatpush1.bf16.xpose.msra.mxu0 0
        %2876 = vmatprep.subr.bf16.mxu0 0
        %2877 = vmatpush1.bf16.xpose.msra.mxu0 0
        %2878 = vmatprep.subr.bf16.mxu0 0
        %2879 = vmatpush1.bf16.xpose.msra.mxu0 0
        %2880 = vmatprep.subr.bf16.mxu0 0
        %2881 = vmatpush1.bf16.xpose.msra.mxu0 0
        %2882 = vmatprep.subr.bf16.mxu0 0
        %2883 = vmatpush1.bf16.xpose.msra.mxu0 0
        %2884 = vmatprep.subr.bf16.mxu0 0
        %2885 = vmatpush1.bf16.xpose.msra.mxu0 0
        %2886 = vmatprep.subr.bf16.mxu0 0
        %2887 = vmatpush1.bf16.xpose.msra.mxu0 0
        %2888 = vmatprep.subr.bf16.mxu0 0
        %2889 = vmatpush1.bf16.xpose.msra.mxu0 0
        %2890 = vmatprep.subr.bf16.mxu0 0
        %2891 = vmatpush1.bf16.xpose.msra.mxu0 0
        %2892 = vmatprep.subr.bf16.mxu0 0
        %2893 = vmatpush1.bf16.xpose.msra.mxu0 0
        %2894 = vmatprep.subr.bf16.mxu0 0
        %2895 = vmatpush1.bf16.xpose.msra.mxu0 0
        %2896 = vmatprep.subr.bf16.mxu0 0
        %2897 = vmatpush1.bf16.xpose.msra.mxu0 0
        %2898 = vmatprep.subr.bf16.mxu0 0
        %2899 = vmatpush1.bf16.xpose.msra.mxu0 0
        %2900 = vmatprep.mubr.bf16.mxu0 %v1439
        %2901 = vmatmul.mubr.bf16.gmra.mrb[0].mxu0 %v1438
        %v2902 = vpop.f32.mrb[0].mxu0
        %v2903 = vadd.f32 %v2863, %v2902
        %v2904 = vpop.f32.mrb[0].mxu0
        %v2905 = vpop.f32.mrb[0].mxu0
        %v2906 = vpop.f32.mrb[0].mxu0
        %2907 = vdwg.mxu0
        %2908 = vmatprep.subr.bf16.mxu0 %v2267
        %2909 = vmatpush1.bf16.xpose.msra.mxu0 %v2266
        %2910 = vmatprep.subr.bf16.mxu0 0
        %2911 = vmatpush1.bf16.xpose.msra.mxu0 0
        %2912 = vmatprep.subr.bf16.mxu0 0
        %2913 = vmatpush1.bf16.xpose.msra.mxu0 0
        %2914 = vmatprep.subr.bf16.mxu0 0
        %2915 = vmatpush1.bf16.xpose.msra.mxu0 0
        %2916 = vmatprep.subr.bf16.mxu0 0
        %2917 = vmatpush1.bf16.xpose.msra.mxu0 0
        %2918 = vmatprep.subr.bf16.mxu0 0
        %2919 = vmatpush1.bf16.xpose.msra.mxu0 0
        %2920 = vmatprep.subr.bf16.mxu0 0
        %2921 = vmatpush1.bf16.xpose.msra.mxu0 0
        %2922 = vmatprep.subr.bf16.mxu0 0
        %2923 = vmatpush1.bf16.xpose.msra.mxu0 0
        %2924 = vmatprep.subr.bf16.mxu0 0
        %2925 = vmatpush1.bf16.xpose.msra.mxu0 0
        %2926 = vmatprep.subr.bf16.mxu0 0
        %2927 = vmatpush1.bf16.xpose.msra.mxu0 0
        %2928 = vmatprep.subr.bf16.mxu0 0
        %2929 = vmatpush1.bf16.xpose.msra.mxu0 0
        %2930 = vmatprep.subr.bf16.mxu0 0
        %2931 = vmatpush1.bf16.xpose.msra.mxu0 0
        %2932 = vmatprep.subr.bf16.mxu0 0
        %2933 = vmatpush1.bf16.xpose.msra.mxu0 0
        %2934 = vmatprep.subr.bf16.mxu0 0
        %2935 = vmatpush1.bf16.xpose.msra.mxu0 0
        %2936 = vmatprep.subr.bf16.mxu0 0
        %2937 = vmatpush1.bf16.xpose.msra.mxu0 0
        %2938 = vmatprep.subr.bf16.mxu0 0
        %2939 = vmatpush1.bf16.xpose.msra.mxu0 0
        %2940 = vmatprep.mubr.bf16.mxu0 %v1441
        %2941 = vmatmul.mubr.bf16.gmra.mrb[0].mxu0 %v1440
        %v2942 = vpop.f32.mrb[0].mxu0
        %v2943 = vadd.f32 %v2903, %v2942
        %v2944 = vpop.f32.mrb[0].mxu0
        %v2945 = vpop.f32.mrb[0].mxu0
        %v2946 = vpop.f32.mrb[0].mxu0
        %2947 = vdwg.mxu0
        %2948 = vmatprep.subr.bf16.mxu0 %v2269
        %2949 = vmatpush1.bf16.xpose.msra.mxu0 %v2268
        %2950 = vmatprep.subr.bf16.mxu0 0
        %2951 = vmatpush1.bf16.xpose.msra.mxu0 0
        %2952 = vmatprep.subr.bf16.mxu0 0
        %2953 = vmatpush1.bf16.xpose.msra.mxu0 0
        %2954 = vmatprep.subr.bf16.mxu0 0
        %2955 = vmatpush1.bf16.xpose.msra.mxu0 0
        %2956 = vmatprep.subr.bf16.mxu0 0
        %2957 = vmatpush1.bf16.xpose.msra.mxu0 0
        %2958 = vmatprep.subr.bf16.mxu0 0
        %2959 = vmatpush1.bf16.xpose.msra.mxu0 0
        %2960 = vmatprep.subr.bf16.mxu0 0
        %2961 = vmatpush1.bf16.xpose.msra.mxu0 0
        %2962 = vmatprep.subr.bf16.mxu0 0
        %2963 = vmatpush1.bf16.xpose.msra.mxu0 0
        %2964 = vmatprep.subr.bf16.mxu0 0
        %2965 = vmatpush1.bf16.xpose.msra.mxu0 0
        %2966 = vmatprep.subr.bf16.mxu0 0
        %2967 = vmatpush1.bf16.xpose.msra.mxu0 0
        %2968 = vmatprep.subr.bf16.mxu0 0
        %2969 = vmatpush1.bf16.xpose.msra.mxu0 0
        %2970 = vmatprep.subr.bf16.mxu0 0
        %2971 = vmatpush1.bf16.xpose.msra.mxu0 0
        %2972 = vmatprep.subr.bf16.mxu0 0
        %2973 = vmatpush1.bf16.xpose.msra.mxu0 0
        %2974 = vmatprep.subr.bf16.mxu0 0
        %2975 = vmatpush1.bf16.xpose.msra.mxu0 0
        %2976 = vmatprep.subr.bf16.mxu0 0
        %2977 = vmatpush1.bf16.xpose.msra.mxu0 0
        %2978 = vmatprep.subr.bf16.mxu0 0
        %2979 = vmatpush1.bf16.xpose.msra.mxu0 0
        %2980 = vmatprep.mubr.bf16.mxu0 %v1443
        %2981 = vmatmul.mubr.bf16.gmra.mrb[0].mxu0 %v1442
        %v2982 = vpop.f32.mrb[0].mxu0
        %v2983 = vadd.f32 %v2943, %v2982
        %v2984 = vpop.f32.mrb[0].mxu0
        %v2985 = vpop.f32.mrb[0].mxu0
        %v2986 = vpop.f32.mrb[0].mxu0
        %2987 = vdwg.mxu0
        %2988 = vmatprep.subr.bf16.mxu0 %v2271
        %2989 = vmatpush1.bf16.xpose.msra.mxu0 %v2270
        %2990 = vmatprep.subr.bf16.mxu0 0
        %2991 = vmatpush1.bf16.xpose.msra.mxu0 0
        %2992 = vmatprep.subr.bf16.mxu0 0
        %2993 = vmatpush1.bf16.xpose.msra.mxu0 0
        %2994 = vmatprep.subr.bf16.mxu0 0
        %2995 = vmatpush1.bf16.xpose.msra.mxu0 0
        %2996 = vmatprep.subr.bf16.mxu0 0
        %2997 = vmatpush1.bf16.xpose.msra.mxu0 0
        %2998 = vmatprep.subr.bf16.mxu0 0
        %2999 = vmatpush1.bf16.xpose.msra.mxu0 0
        %3000 = vmatprep.subr.bf16.mxu0 0
        %3001 = vmatpush1.bf16.xpose.msra.mxu0 0
        %3002 = vmatprep.subr.bf16.mxu0 0
        %3003 = vmatpush1.bf16.xpose.msra.mxu0 0
        %3004 = vmatprep.subr.bf16.mxu0 0
        %3005 = vmatpush1.bf16.xpose.msra.mxu0 0
        %3006 = vmatprep.subr.bf16.mxu0 0
        %3007 = vmatpush1.bf16.xpose.msra.mxu0 0
        %3008 = vmatprep.subr.bf16.mxu0 0
        %3009 = vmatpush1.bf16.xpose.msra.mxu0 0
        %3010 = vmatprep.subr.bf16.mxu0 0
        %3011 = vmatpush1.bf16.xpose.msra.mxu0 0
        %3012 = vmatprep.subr.bf16.mxu0 0
        %3013 = vmatpush1.bf16.xpose.msra.mxu0 0
        %3014 = vmatprep.subr.bf16.mxu0 0
        %3015 = vmatpush1.bf16.xpose.msra.mxu0 0
        %3016 = vmatprep.subr.bf16.mxu0 0
        %3017 = vmatpush1.bf16.xpose.msra.mxu0 0
        %3018 = vmatprep.subr.bf16.mxu0 0
        %3019 = vmatpush1.bf16.xpose.msra.mxu0 0
        %3020 = vmatprep.mubr.bf16.mxu0 %v1445
        %3021 = vmatmul.mubr.bf16.gmra.mrb[0].mxu0 %v1444
        %v3022 = vpop.f32.mrb[0].mxu0
        %v3023 = vadd.f32 %v2983, %v3022
        %v3024 = vpop.f32.mrb[0].mxu0
        %v3025 = vpop.f32.mrb[0].mxu0
        %v3026 = vpop.f32.mrb[0].mxu0
        %3027 = vdwg.mxu0
        %3028 = vmatprep.subr.bf16.mxu0 %v2273
        %3029 = vmatpush1.bf16.xpose.msra.mxu0 %v2272
        %3030 = vmatprep.subr.bf16.mxu0 0
        %3031 = vmatpush1.bf16.xpose.msra.mxu0 0
        %3032 = vmatprep.subr.bf16.mxu0 0
        %3033 = vmatpush1.bf16.xpose.msra.mxu0 0
        %3034 = vmatprep.subr.bf16.mxu0 0
        %3035 = vmatpush1.bf16.xpose.msra.mxu0 0
        %3036 = vmatprep.subr.bf16.mxu0 0
        %3037 = vmatpush1.bf16.xpose.msra.mxu0 0
        %3038 = vmatprep.subr.bf16.mxu0 0
        %3039 = vmatpush1.bf16.xpose.msra.mxu0 0
        %3040 = vmatprep.subr.bf16.mxu0 0
        %3041 = vmatpush1.bf16.xpose.msra.mxu0 0
        %3042 = vmatprep.subr.bf16.mxu0 0
        %3043 = vmatpush1.bf16.xpose.msra.mxu0 0
        %3044 = vmatprep.subr.bf16.mxu0 0
        %3045 = vmatpush1.bf16.xpose.msra.mxu0 0
        %3046 = vmatprep.subr.bf16.mxu0 0
        %3047 = vmatpush1.bf16.xpose.msra.mxu0 0
        %3048 = vmatprep.subr.bf16.mxu0 0
        %3049 = vmatpush1.bf16.xpose.msra.mxu0 0
        %3050 = vmatprep.subr.bf16.mxu0 0
        %3051 = vmatpush1.bf16.xpose.msra.mxu0 0
        %3052 = vmatprep.subr.bf16.mxu0 0
        %3053 = vmatpush1.bf16.xpose.msra.mxu0 0
        %3054 = vmatprep.subr.bf16.mxu0 0
        %3055 = vmatpush1.bf16.xpose.msra.mxu0 0
        %3056 = vmatprep.subr.bf16.mxu0 0
        %3057 = vmatpush1.bf16.xpose.msra.mxu0 0
        %3058 = vmatprep.subr.bf16.mxu0 0
        %3059 = vmatpush1.bf16.xpose.msra.mxu0 0
        %3060 = vmatprep.mubr.bf16.mxu0 %v1447
        %3061 = vmatmul.mubr.bf16.gmra.mrb[0].mxu0 %v1446
        %v3062 = vpop.f32.mrb[0].mxu0
        %v3063 = vadd.f32 %v3023, %v3062
        %v3064 = vpop.f32.mrb[0].mxu0
        %v3065 = vpop.f32.mrb[0].mxu0
        %v3066 = vpop.f32.mrb[0].mxu0
        %3067 = vdwg.mxu0
        %3068 = vmatprep.subr.bf16.mxu0 %v2275
        %3069 = vmatpush1.bf16.xpose.msra.mxu0 %v2274
        %3070 = vmatprep.subr.bf16.mxu0 0
        %3071 = vmatpush1.bf16.xpose.msra.mxu0 0
        %3072 = vmatprep.subr.bf16.mxu0 0
        %3073 = vmatpush1.bf16.xpose.msra.mxu0 0
        %3074 = vmatprep.subr.bf16.mxu0 0
        %3075 = vmatpush1.bf16.xpose.msra.mxu0 0
        %3076 = vmatprep.subr.bf16.mxu0 0
        %3077 = vmatpush1.bf16.xpose.msra.mxu0 0
        %3078 = vmatprep.subr.bf16.mxu0 0
        %3079 = vmatpush1.bf16.xpose.msra.mxu0 0
        %3080 = vmatprep.subr.bf16.mxu0 0
        %3081 = vmatpush1.bf16.xpose.msra.mxu0 0
        %3082 = vmatprep.subr.bf16.mxu0 0
        %3083 = vmatpush1.bf16.xpose.msra.mxu0 0
        %3084 = vmatprep.subr.bf16.mxu0 0
        %3085 = vmatpush1.bf16.xpose.msra.mxu0 0
        %3086 = vmatprep.subr.bf16.mxu0 0
        %3087 = vmatpush1.bf16.xpose.msra.mxu0 0
        %3088 = vmatprep.subr.bf16.mxu0 0
        %3089 = vmatpush1.bf16.xpose.msra.mxu0 0
        %3090 = vmatprep.subr.bf16.mxu0 0
        %3091 = vmatpush1.bf16.xpose.msra.mxu0 0
        %3092 = vmatprep.subr.bf16.mxu0 0
        %3093 = vmatpush1.bf16.xpose.msra.mxu0 0
        %3094 = vmatprep.subr.bf16.mxu0 0
        %3095 = vmatpush1.bf16.xpose.msra.mxu0 0
        %3096 = vmatprep.subr.bf16.mxu0 0
        %3097 = vmatpush1.bf16.xpose.msra.mxu0 0
        %3098 = vmatprep.subr.bf16.mxu0 0
        %3099 = vmatpush1.bf16.xpose.msra.mxu0 0
        %3100 = vmatprep.mubr.bf16.mxu0 %v1449
        %3101 = vmatmul.mubr.bf16.gmra.mrb[0].mxu0 %v1448
        %v3102 = vpop.f32.mrb[0].mxu0
        %v3103 = vadd.f32 %v3063, %v3102
        %v3104 = vpop.f32.mrb[0].mxu0
        %v3105 = vpop.f32.mrb[0].mxu0
        %v3106 = vpop.f32.mrb[0].mxu0
        %3107 = vdwg.mxu0
        %3108 = vmatprep.subr.bf16.mxu0 %v2277
        %3109 = vmatpush1.bf16.xpose.msra.mxu0 %v2276
        %3110 = vmatprep.subr.bf16.mxu0 0
        %3111 = vmatpush1.bf16.xpose.msra.mxu0 0
        %3112 = vmatprep.subr.bf16.mxu0 0
        %3113 = vmatpush1.bf16.xpose.msra.mxu0 0
        %3114 = vmatprep.subr.bf16.mxu0 0
        %3115 = vmatpush1.bf16.xpose.msra.mxu0 0
        %3116 = vmatprep.subr.bf16.mxu0 0
        %3117 = vmatpush1.bf16.xpose.msra.mxu0 0
        %3118 = vmatprep.subr.bf16.mxu0 0
        %3119 = vmatpush1.bf16.xpose.msra.mxu0 0
        %3120 = vmatprep.subr.bf16.mxu0 0
        %3121 = vmatpush1.bf16.xpose.msra.mxu0 0
        %3122 = vmatprep.subr.bf16.mxu0 0
        %3123 = vmatpush1.bf16.xpose.msra.mxu0 0
        %3124 = vmatprep.subr.bf16.mxu0 0
        %3125 = vmatpush1.bf16.xpose.msra.mxu0 0
        %3126 = vmatprep.subr.bf16.mxu0 0
        %3127 = vmatpush1.bf16.xpose.msra.mxu0 0
        %3128 = vmatprep.subr.bf16.mxu0 0
        %3129 = vmatpush1.bf16.xpose.msra.mxu0 0
        %3130 = vmatprep.subr.bf16.mxu0 0
        %3131 = vmatpush1.bf16.xpose.msra.mxu0 0
        %3132 = vmatprep.subr.bf16.mxu0 0
        %3133 = vmatpush1.bf16.xpose.msra.mxu0 0
        %3134 = vmatprep.subr.bf16.mxu0 0
        %3135 = vmatpush1.bf16.xpose.msra.mxu0 0
        %3136 = vmatprep.subr.bf16.mxu0 0
        %3137 = vmatpush1.bf16.xpose.msra.mxu0 0
        %3138 = vmatprep.subr.bf16.mxu0 0
        %3139 = vmatpush1.bf16.xpose.msra.mxu0 0
        %3140 = vmatprep.mubr.bf16.mxu0 %v1451
        %3141 = vmatmul.mubr.bf16.gmra.mrb[0].mxu0 %v1450
        %v3142 = vpop.f32.mrb[0].mxu0
        %v3143 = vadd.f32 %v3103, %v3142
        %v3144 = vpop.f32.mrb[0].mxu0
        %v3145 = vpop.f32.mrb[0].mxu0
        %v3146 = vpop.f32.mrb[0].mxu0
        %3147 = vdwg.mxu0
        %3148 = vmatprep.subr.bf16.mxu0 %v2279
        %3149 = vmatpush1.bf16.xpose.msra.mxu0 %v2278
        %3150 = vmatprep.subr.bf16.mxu0 0
        %3151 = vmatpush1.bf16.xpose.msra.mxu0 0
        %3152 = vmatprep.subr.bf16.mxu0 0
        %3153 = vmatpush1.bf16.xpose.msra.mxu0 0
        %3154 = vmatprep.subr.bf16.mxu0 0
        %3155 = vmatpush1.bf16.xpose.msra.mxu0 0
        %3156 = vmatprep.subr.bf16.mxu0 0
        %3157 = vmatpush1.bf16.xpose.msra.mxu0 0
        %3158 = vmatprep.subr.bf16.mxu0 0
        %3159 = vmatpush1.bf16.xpose.msra.mxu0 0
        %3160 = vmatprep.subr.bf16.mxu0 0
        %3161 = vmatpush1.bf16.xpose.msra.mxu0 0
        %3162 = vmatprep.subr.bf16.mxu0 0
        %3163 = vmatpush1.bf16.xpose.msra.mxu0 0
        %3164 = vmatprep.subr.bf16.mxu0 0
        %3165 = vmatpush1.bf16.xpose.msra.mxu0 0
        %3166 = vmatprep.subr.bf16.mxu0 0
        %3167 = vmatpush1.bf16.xpose.msra.mxu0 0
        %3168 = vmatprep.subr.bf16.mxu0 0
        %3169 = vmatpush1.bf16.xpose.msra.mxu0 0
        %3170 = vmatprep.subr.bf16.mxu0 0
        %3171 = vmatpush1.bf16.xpose.msra.mxu0 0
        %3172 = vmatprep.subr.bf16.mxu0 0
        %3173 = vmatpush1.bf16.xpose.msra.mxu0 0
        %3174 = vmatprep.subr.bf16.mxu0 0
        %3175 = vmatpush1.bf16.xpose.msra.mxu0 0
        %3176 = vmatprep.subr.bf16.mxu0 0
        %3177 = vmatpush1.bf16.xpose.msra.mxu0 0
        %3178 = vmatprep.subr.bf16.mxu0 0
        %3179 = vmatpush1.bf16.xpose.msra.mxu0 0
        %3180 = vmatprep.mubr.bf16.mxu0 %v1453
        %3181 = vmatmul.mubr.bf16.gmra.mrb[0].mxu0 %v1452
        %v3182 = vpop.f32.mrb[0].mxu0
        %v3183 = vadd.f32 %v3143, %v3182
        %v3184 = vpop.f32.mrb[0].mxu0
        %v3185 = vpop.f32.mrb[0].mxu0
        %v3186 = vpop.f32.mrb[0].mxu0
        %3187 = vdwg.mxu0
        %3188 = vmatprep.subr.bf16.mxu0 %v2281
        %3189 = vmatpush1.bf16.xpose.msra.mxu0 %v2280
        %3190 = vmatprep.subr.bf16.mxu0 0
        %3191 = vmatpush1.bf16.xpose.msra.mxu0 0
        %3192 = vmatprep.subr.bf16.mxu0 0
        %3193 = vmatpush1.bf16.xpose.msra.mxu0 0
        %3194 = vmatprep.subr.bf16.mxu0 0
        %3195 = vmatpush1.bf16.xpose.msra.mxu0 0
        %3196 = vmatprep.subr.bf16.mxu0 0
        %3197 = vmatpush1.bf16.xpose.msra.mxu0 0
        %3198 = vmatprep.subr.bf16.mxu0 0
        %3199 = vmatpush1.bf16.xpose.msra.mxu0 0
        %3200 = vmatprep.subr.bf16.mxu0 0
        %3201 = vmatpush1.bf16.xpose.msra.mxu0 0
        %3202 = vmatprep.subr.bf16.mxu0 0
        %3203 = vmatpush1.bf16.xpose.msra.mxu0 0
        %3204 = vmatprep.subr.bf16.mxu0 0
        %3205 = vmatpush1.bf16.xpose.msra.mxu0 0
        %3206 = vmatprep.subr.bf16.mxu0 0
        %3207 = vmatpush1.bf16.xpose.msra.mxu0 0
        %3208 = vmatprep.subr.bf16.mxu0 0
        %3209 = vmatpush1.bf16.xpose.msra.mxu0 0
        %3210 = vmatprep.subr.bf16.mxu0 0
        %3211 = vmatpush1.bf16.xpose.msra.mxu0 0
        %3212 = vmatprep.subr.bf16.mxu0 0
        %3213 = vmatpush1.bf16.xpose.msra.mxu0 0
        %3214 = vmatprep.subr.bf16.mxu0 0
        %3215 = vmatpush1.bf16.xpose.msra.mxu0 0
        %3216 = vmatprep.subr.bf16.mxu0 0
        %3217 = vmatpush1.bf16.xpose.msra.mxu0 0
        %3218 = vmatprep.subr.bf16.mxu0 0
        %3219 = vmatpush1.bf16.xpose.msra.mxu0 0
        %3220 = vmatprep.mubr.bf16.mxu0 %v1455
        %3221 = vmatmul.mubr.bf16.gmra.mrb[0].mxu0 %v1454
        %v3222 = vpop.f32.mrb[0].mxu0
        %v3223 = vadd.f32 %v3183, %v3222
        %v3224 = vpop.f32.mrb[0].mxu0
        %v3225 = vpop.f32.mrb[0].mxu0
        %v3226 = vpop.f32.mrb[0].mxu0
        %3227 = vdwg.mxu0
        %3228 = vmatprep.subr.bf16.mxu0 %v2283
        %3229 = vmatpush1.bf16.xpose.msra.mxu0 %v2282
        %3230 = vmatprep.subr.bf16.mxu0 0
        %3231 = vmatpush1.bf16.xpose.msra.mxu0 0
        %3232 = vmatprep.subr.bf16.mxu0 0
        %3233 = vmatpush1.bf16.xpose.msra.mxu0 0
        %3234 = vmatprep.subr.bf16.mxu0 0
        %3235 = vmatpush1.bf16.xpose.msra.mxu0 0
        %3236 = vmatprep.subr.bf16.mxu0 0
        %3237 = vmatpush1.bf16.xpose.msra.mxu0 0
        %3238 = vmatprep.subr.bf16.mxu0 0
        %3239 = vmatpush1.bf16.xpose.msra.mxu0 0
        %3240 = vmatprep.subr.bf16.mxu0 0
        %3241 = vmatpush1.bf16.xpose.msra.mxu0 0
        %3242 = vmatprep.subr.bf16.mxu0 0
        %3243 = vmatpush1.bf16.xpose.msra.mxu0 0
        %3244 = vmatprep.subr.bf16.mxu0 0
        %3245 = vmatpush1.bf16.xpose.msra.mxu0 0
        %3246 = vmatprep.subr.bf16.mxu0 0
        %3247 = vmatpush1.bf16.xpose.msra.mxu0 0
        %3248 = vmatprep.subr.bf16.mxu0 0
        %3249 = vmatpush1.bf16.xpose.msra.mxu0 0
        %3250 = vmatprep.subr.bf16.mxu0 0
        %3251 = vmatpush1.bf16.xpose.msra.mxu0 0
        %3252 = vmatprep.subr.bf16.mxu0 0
        %3253 = vmatpush1.bf16.xpose.msra.mxu0 0
        %3254 = vmatprep.subr.bf16.mxu0 0
        %3255 = vmatpush1.bf16.xpose.msra.mxu0 0
        %3256 = vmatprep.subr.bf16.mxu0 0
        %3257 = vmatpush1.bf16.xpose.msra.mxu0 0
        %3258 = vmatprep.subr.bf16.mxu0 0
        %3259 = vmatpush1.bf16.xpose.msra.mxu0 0
        %3260 = vmatprep.mubr.bf16.mxu0 %v1457
        %3261 = vmatmul.mubr.bf16.gmra.mrb[0].mxu0 %v1456
        %v3262 = vpop.f32.mrb[0].mxu0
        %v3263 = vadd.f32 %v3223, %v3262
        %v3264 = vpop.f32.mrb[0].mxu0
        %v3265 = vpop.f32.mrb[0].mxu0
        %v3266 = vpop.f32.mrb[0].mxu0
        %3267 = vdwg.mxu0
        %3268 = vmatprep.subr.bf16.mxu0 %v2285
        %3269 = vmatpush1.bf16.xpose.msra.mxu0 %v2284
        %3270 = vmatprep.subr.bf16.mxu0 0
        %3271 = vmatpush1.bf16.xpose.msra.mxu0 0
        %3272 = vmatprep.subr.bf16.mxu0 0
        %3273 = vmatpush1.bf16.xpose.msra.mxu0 0
        %3274 = vmatprep.subr.bf16.mxu0 0
        %3275 = vmatpush1.bf16.xpose.msra.mxu0 0
        %3276 = vmatprep.subr.bf16.mxu0 0
        %3277 = vmatpush1.bf16.xpose.msra.mxu0 0
        %3278 = vmatprep.subr.bf16.mxu0 0
        %3279 = vmatpush1.bf16.xpose.msra.mxu0 0
        %3280 = vmatprep.subr.bf16.mxu0 0
        %3281 = vmatpush1.bf16.xpose.msra.mxu0 0
        %3282 = vmatprep.subr.bf16.mxu0 0
        %3283 = vmatpush1.bf16.xpose.msra.mxu0 0
        %3284 = vmatprep.subr.bf16.mxu0 0
        %3285 = vmatpush1.bf16.xpose.msra.mxu0 0
        %3286 = vmatprep.subr.bf16.mxu0 0
        %3287 = vmatpush1.bf16.xpose.msra.mxu0 0
        %3288 = vmatprep.subr.bf16.mxu0 0
        %3289 = vmatpush1.bf16.xpose.msra.mxu0 0
        %3290 = vmatprep.subr.bf16.mxu0 0
        %3291 = vmatpush1.bf16.xpose.msra.mxu0 0
        %3292 = vmatprep.subr.bf16.mxu0 0
        %3293 = vmatpush1.bf16.xpose.msra.mxu0 0
        %3294 = vmatprep.subr.bf16.mxu0 0
        %3295 = vmatpush1.bf16.xpose.msra.mxu0 0
        %3296 = vmatprep.subr.bf16.mxu0 0
        %3297 = vmatpush1.bf16.xpose.msra.mxu0 0
        %3298 = vmatprep.subr.bf16.mxu0 0
        %3299 = vmatpush1.bf16.xpose.msra.mxu0 0
        %3300 = vmatprep.mubr.bf16.mxu0 %v1459
        %3301 = vmatmul.mubr.bf16.gmra.mrb[0].mxu0 %v1458
        %v3302 = vpop.f32.mrb[0].mxu0
        %v3303 = vadd.f32 %v3263, %v3302
        %v3304 = vpop.f32.mrb[0].mxu0
        %v3305 = vpop.f32.mrb[0].mxu0
        %v3306 = vpop.f32.mrb[0].mxu0
        %3307 = vdwg.mxu0
        %3308 = vmatprep.subr.bf16.mxu0 %v2287
        %3309 = vmatpush1.bf16.xpose.msra.mxu0 %v2286
        %3310 = vmatprep.subr.bf16.mxu0 0
        %3311 = vmatpush1.bf16.xpose.msra.mxu0 0
        %3312 = vmatprep.subr.bf16.mxu0 0
        %3313 = vmatpush1.bf16.xpose.msra.mxu0 0
        %3314 = vmatprep.subr.bf16.mxu0 0
        %3315 = vmatpush1.bf16.xpose.msra.mxu0 0
        %3316 = vmatprep.subr.bf16.mxu0 0
        %3317 = vmatpush1.bf16.xpose.msra.mxu0 0
        %3318 = vmatprep.subr.bf16.mxu0 0
        %3319 = vmatpush1.bf16.xpose.msra.mxu0 0
        %3320 = vmatprep.subr.bf16.mxu0 0
        %3321 = vmatpush1.bf16.xpose.msra.mxu0 0
        %3322 = vmatprep.subr.bf16.mxu0 0
        %3323 = vmatpush1.bf16.xpose.msra.mxu0 0
        %3324 = vmatprep.subr.bf16.mxu0 0
        %3325 = vmatpush1.bf16.xpose.msra.mxu0 0
        %3326 = vmatprep.subr.bf16.mxu0 0
        %3327 = vmatpush1.bf16.xpose.msra.mxu0 0
        %3328 = vmatprep.subr.bf16.mxu0 0
        %3329 = vmatpush1.bf16.xpose.msra.mxu0 0
        %3330 = vmatprep.subr.bf16.mxu0 0
        %3331 = vmatpush1.bf16.xpose.msra.mxu0 0
        %3332 = vmatprep.subr.bf16.mxu0 0
        %3333 = vmatpush1.bf16.xpose.msra.mxu0 0
        %3334 = vmatprep.subr.bf16.mxu0 0
        %3335 = vmatpush1.bf16.xpose.msra.mxu0 0
        %3336 = vmatprep.subr.bf16.mxu0 0
        %3337 = vmatpush1.bf16.xpose.msra.mxu0 0
        %3338 = vmatprep.subr.bf16.mxu0 0
        %3339 = vmatpush1.bf16.xpose.msra.mxu0 0
        %3340 = vmatprep.mubr.bf16.mxu0 %v1461
        %3341 = vmatmul.mubr.bf16.gmra.mrb[0].mxu0 %v1460
        %v3342 = vpop.f32.mrb[0].mxu0
        %v3343 = vadd.f32 %v3303, %v3342
        %v3344 = vpop.f32.mrb[0].mxu0
        %v3345 = vpop.f32.mrb[0].mxu0
        %v3346 = vpop.f32.mrb[0].mxu0
        %3347 = vdwg.mxu0
        %3348 = vmatprep.subr.bf16.mxu0 %v2289
        %3349 = vmatpush1.bf16.xpose.msra.mxu0 %v2288
        %3350 = vmatprep.subr.bf16.mxu0 0
        %3351 = vmatpush1.bf16.xpose.msra.mxu0 0
        %3352 = vmatprep.subr.bf16.mxu0 0
        %3353 = vmatpush1.bf16.xpose.msra.mxu0 0
        %3354 = vmatprep.subr.bf16.mxu0 0
        %3355 = vmatpush1.bf16.xpose.msra.mxu0 0
        %3356 = vmatprep.subr.bf16.mxu0 0
        %3357 = vmatpush1.bf16.xpose.msra.mxu0 0
        %3358 = vmatprep.subr.bf16.mxu0 0
        %3359 = vmatpush1.bf16.xpose.msra.mxu0 0
        %3360 = vmatprep.subr.bf16.mxu0 0
        %3361 = vmatpush1.bf16.xpose.msra.mxu0 0
        %3362 = vmatprep.subr.bf16.mxu0 0
        %3363 = vmatpush1.bf16.xpose.msra.mxu0 0
        %3364 = vmatprep.subr.bf16.mxu0 0
        %3365 = vmatpush1.bf16.xpose.msra.mxu0 0
        %3366 = vmatprep.subr.bf16.mxu0 0
        %3367 = vmatpush1.bf16.xpose.msra.mxu0 0
        %3368 = vmatprep.subr.bf16.mxu0 0
        %3369 = vmatpush1.bf16.xpose.msra.mxu0 0
        %3370 = vmatprep.subr.bf16.mxu0 0
        %3371 = vmatpush1.bf16.xpose.msra.mxu0 0
        %3372 = vmatprep.subr.bf16.mxu0 0
        %3373 = vmatpush1.bf16.xpose.msra.mxu0 0
        %3374 = vmatprep.subr.bf16.mxu0 0
        %3375 = vmatpush1.bf16.xpose.msra.mxu0 0
        %3376 = vmatprep.subr.bf16.mxu0 0
        %3377 = vmatpush1.bf16.xpose.msra.mxu0 0
        %3378 = vmatprep.subr.bf16.mxu0 0
        %3379 = vmatpush1.bf16.xpose.msra.mxu0 0
        %3380 = vmatprep.mubr.bf16.mxu0 %v1463
        %3381 = vmatmul.mubr.bf16.gmra.mrb[0].mxu0 %v1462
        %v3382 = vpop.f32.mrb[0].mxu0
        %v3383 = vadd.f32 %v3343, %v3382
        %v3384 = vpop.f32.mrb[0].mxu0
        %v3385 = vpop.f32.mrb[0].mxu0
        %v3386 = vpop.f32.mrb[0].mxu0
        %3387 = vdwg.mxu0
        %3388 = vmatprep.subr.bf16.mxu0 %v2291
        %3389 = vmatpush1.bf16.xpose.msra.mxu0 %v2290
        %3390 = vmatprep.subr.bf16.mxu0 0
        %3391 = vmatpush1.bf16.xpose.msra.mxu0 0
        %3392 = vmatprep.subr.bf16.mxu0 0
        %3393 = vmatpush1.bf16.xpose.msra.mxu0 0
        %3394 = vmatprep.subr.bf16.mxu0 0
        %3395 = vmatpush1.bf16.xpose.msra.mxu0 0
        %3396 = vmatprep.subr.bf16.mxu0 0
        %3397 = vmatpush1.bf16.xpose.msra.mxu0 0
        %3398 = vmatprep.subr.bf16.mxu0 0
        %3399 = vmatpush1.bf16.xpose.msra.mxu0 0
        %3400 = vmatprep.subr.bf16.mxu0 0
        %3401 = vmatpush1.bf16.xpose.msra.mxu0 0
        %3402 = vmatprep.subr.bf16.mxu0 0
        %3403 = vmatpush1.bf16.xpose.msra.mxu0 0
        %3404 = vmatprep.subr.bf16.mxu0 0
        %3405 = vmatpush1.bf16.xpose.msra.mxu0 0
        %3406 = vmatprep.subr.bf16.mxu0 0
        %3407 = vmatpush1.bf16.xpose.msra.mxu0 0
        %3408 = vmatprep.subr.bf16.mxu0 0
        %3409 = vmatpush1.bf16.xpose.msra.mxu0 0
        %3410 = vmatprep.subr.bf16.mxu0 0
        %3411 = vmatpush1.bf16.xpose.msra.mxu0 0
        %3412 = vmatprep.subr.bf16.mxu0 0
        %3413 = vmatpush1.bf16.xpose.msra.mxu0 0
        %3414 = vmatprep.subr.bf16.mxu0 0
        %3415 = vmatpush1.bf16.xpose.msra.mxu0 0
        %3416 = vmatprep.subr.bf16.mxu0 0
        %3417 = vmatpush1.bf16.xpose.msra.mxu0 0
        %3418 = vmatprep.subr.bf16.mxu0 0
        %3419 = vmatpush1.bf16.xpose.msra.mxu0 0
        %3420 = vmatprep.mubr.bf16.mxu0 %v1465
        %3421 = vmatmul.mubr.bf16.gmra.mrb[0].mxu0 %v1464
        %v3422 = vpop.f32.mrb[0].mxu0
        %v3423 = vadd.f32 %v3383, %v3422
        %v3424 = vpop.f32.mrb[0].mxu0
        %v3425 = vpop.f32.mrb[0].mxu0
        %v3426 = vpop.f32.mrb[0].mxu0
        %3427 = vdwg.mxu0
        %3428 = vmatprep.subr.bf16.mxu0 %v2293
        %3429 = vmatpush1.bf16.xpose.msra.mxu0 %v2292
        %3430 = vmatprep.subr.bf16.mxu0 0
        %3431 = vmatpush1.bf16.xpose.msra.mxu0 0
        %3432 = vmatprep.subr.bf16.mxu0 0
        %3433 = vmatpush1.bf16.xpose.msra.mxu0 0
        %3434 = vmatprep.subr.bf16.mxu0 0
        %3435 = vmatpush1.bf16.xpose.msra.mxu0 0
        %3436 = vmatprep.subr.bf16.mxu0 0
        %3437 = vmatpush1.bf16.xpose.msra.mxu0 0
        %3438 = vmatprep.subr.bf16.mxu0 0
        %3439 = vmatpush1.bf16.xpose.msra.mxu0 0
        %3440 = vmatprep.subr.bf16.mxu0 0
        %3441 = vmatpush1.bf16.xpose.msra.mxu0 0
        %3442 = vmatprep.subr.bf16.mxu0 0
        %3443 = vmatpush1.bf16.xpose.msra.mxu0 0
        %3444 = vmatprep.subr.bf16.mxu0 0
        %3445 = vmatpush1.bf16.xpose.msra.mxu0 0
        %3446 = vmatprep.subr.bf16.mxu0 0
        %3447 = vmatpush1.bf16.xpose.msra.mxu0 0
        %3448 = vmatprep.subr.bf16.mxu0 0
        %3449 = vmatpush1.bf16.xpose.msra.mxu0 0
        %3450 = vmatprep.subr.bf16.mxu0 0
        %3451 = vmatpush1.bf16.xpose.msra.mxu0 0
        %3452 = vmatprep.subr.bf16.mxu0 0
        %3453 = vmatpush1.bf16.xpose.msra.mxu0 0
        %3454 = vmatprep.subr.bf16.mxu0 0
        %3455 = vmatpush1.bf16.xpose.msra.mxu0 0
        %3456 = vmatprep.subr.bf16.mxu0 0
        %3457 = vmatpush1.bf16.xpose.msra.mxu0 0
        %3458 = vmatprep.subr.bf16.mxu0 0
        %3459 = vmatpush1.bf16.xpose.msra.mxu0 0
        %3460 = vmatprep.mubr.bf16.mxu0 %v1467
        %3461 = vmatmul.mubr.bf16.gmra.mrb[0].mxu0 %v1466
        %v3462 = vpop.f32.mrb[0].mxu0
        %v3463 = vadd.f32 %v3423, %v3462
        %v3464 = vpop.f32.mrb[0].mxu0
        %v3465 = vpop.f32.mrb[0].mxu0
        %v3466 = vpop.f32.mrb[0].mxu0
        %3467 = vdwg.mxu0
        %3468 = vmatprep.subr.bf16.mxu0 %v2295
        %3469 = vmatpush1.bf16.xpose.msra.mxu0 %v2294
        %3470 = vmatprep.subr.bf16.mxu0 0
        %3471 = vmatpush1.bf16.xpose.msra.mxu0 0
        %3472 = vmatprep.subr.bf16.mxu0 0
        %3473 = vmatpush1.bf16.xpose.msra.mxu0 0
        %3474 = vmatprep.subr.bf16.mxu0 0
        %3475 = vmatpush1.bf16.xpose.msra.mxu0 0
        %3476 = vmatprep.subr.bf16.mxu0 0
        %3477 = vmatpush1.bf16.xpose.msra.mxu0 0
        %3478 = vmatprep.subr.bf16.mxu0 0
        %3479 = vmatpush1.bf16.xpose.msra.mxu0 0
        %3480 = vmatprep.subr.bf16.mxu0 0
        %3481 = vmatpush1.bf16.xpose.msra.mxu0 0
        %3482 = vmatprep.subr.bf16.mxu0 0
        %3483 = vmatpush1.bf16.xpose.msra.mxu0 0
        %3484 = vmatprep.subr.bf16.mxu0 0
        %3485 = vmatpush1.bf16.xpose.msra.mxu0 0
        %3486 = vmatprep.subr.bf16.mxu0 0
        %3487 = vmatpush1.bf16.xpose.msra.mxu0 0
        %3488 = vmatprep.subr.bf16.mxu0 0
        %3489 = vmatpush1.bf16.xpose.msra.mxu0 0
        %3490 = vmatprep.subr.bf16.mxu0 0
        %3491 = vmatpush1.bf16.xpose.msra.mxu0 0
        %3492 = vmatprep.subr.bf16.mxu0 0
        %3493 = vmatpush1.bf16.xpose.msra.mxu0 0
        %3494 = vmatprep.subr.bf16.mxu0 0
        %3495 = vmatpush1.bf16.xpose.msra.mxu0 0
        %3496 = vmatprep.subr.bf16.mxu0 0
        %3497 = vmatpush1.bf16.xpose.msra.mxu0 0
        %3498 = vmatprep.subr.bf16.mxu0 0
        %3499 = vmatpush1.bf16.xpose.msra.mxu0 0
        %3500 = vmatprep.mubr.bf16.mxu0 %v1469
        %3501 = vmatmul.mubr.bf16.gmra.mrb[0].mxu0 %v1468
        %v3502 = vpop.f32.mrb[0].mxu0
        %v3503 = vadd.f32 %v3463, %v3502
        %v3504 = vpop.f32.mrb[0].mxu0
        %v3505 = vpop.f32.mrb[0].mxu0
        %v3506 = vpop.f32.mrb[0].mxu0
        %3507 = vdwg.mxu0
        %3508 = vmatprep.subr.bf16.mxu0 %v2297
        %3509 = vmatpush1.bf16.xpose.msra.mxu0 %v2296
        %3510 = vmatprep.subr.bf16.mxu0 0
        %3511 = vmatpush1.bf16.xpose.msra.mxu0 0
        %3512 = vmatprep.subr.bf16.mxu0 0
        %3513 = vmatpush1.bf16.xpose.msra.mxu0 0
        %3514 = vmatprep.subr.bf16.mxu0 0
        %3515 = vmatpush1.bf16.xpose.msra.mxu0 0
        %3516 = vmatprep.subr.bf16.mxu0 0
        %3517 = vmatpush1.bf16.xpose.msra.mxu0 0
        %3518 = vmatprep.subr.bf16.mxu0 0
        %3519 = vmatpush1.bf16.xpose.msra.mxu0 0
        %3520 = vmatprep.subr.bf16.mxu0 0
        %3521 = vmatpush1.bf16.xpose.msra.mxu0 0
        %3522 = vmatprep.subr.bf16.mxu0 0
        %3523 = vmatpush1.bf16.xpose.msra.mxu0 0
        %3524 = vmatprep.subr.bf16.mxu0 0
        %3525 = vmatpush1.bf16.xpose.msra.mxu0 0
        %3526 = vmatprep.subr.bf16.mxu0 0
        %3527 = vmatpush1.bf16.xpose.msra.mxu0 0
        %3528 = vmatprep.subr.bf16.mxu0 0
        %3529 = vmatpush1.bf16.xpose.msra.mxu0 0
        %3530 = vmatprep.subr.bf16.mxu0 0
        %3531 = vmatpush1.bf16.xpose.msra.mxu0 0
        %3532 = vmatprep.subr.bf16.mxu0 0
        %3533 = vmatpush1.bf16.xpose.msra.mxu0 0
        %3534 = vmatprep.subr.bf16.mxu0 0
        %3535 = vmatpush1.bf16.xpose.msra.mxu0 0
        %3536 = vmatprep.subr.bf16.mxu0 0
        %3537 = vmatpush1.bf16.xpose.msra.mxu0 0
        %3538 = vmatprep.subr.bf16.mxu0 0
        %3539 = vmatpush1.bf16.xpose.msra.mxu0 0
        %3540 = vmatprep.mubr.bf16.mxu0 %v1471
        %3541 = vmatmul.mubr.bf16.gmra.mrb[0].mxu0 %v1470
        %v3542 = vpop.f32.mrb[0].mxu0
        %v3543 = vadd.f32 %v3503, %v3542
        %v3544 = vpop.f32.mrb[0].mxu0
        %v3545 = vpop.f32.mrb[0].mxu0
        %v3546 = vpop.f32.mrb[0].mxu0
        %3547 = vdwg.mxu0
        %3548 = vmatprep.subr.bf16.mxu0 %v2299
        %3549 = vmatpush1.bf16.xpose.msra.mxu0 %v2298
        %3550 = vmatprep.subr.bf16.mxu0 0
        %3551 = vmatpush1.bf16.xpose.msra.mxu0 0
        %3552 = vmatprep.subr.bf16.mxu0 0
        %3553 = vmatpush1.bf16.xpose.msra.mxu0 0
        %3554 = vmatprep.subr.bf16.mxu0 0
        %3555 = vmatpush1.bf16.xpose.msra.mxu0 0
        %3556 = vmatprep.subr.bf16.mxu0 0
        %3557 = vmatpush1.bf16.xpose.msra.mxu0 0
        %3558 = vmatprep.subr.bf16.mxu0 0
        %3559 = vmatpush1.bf16.xpose.msra.mxu0 0
        %3560 = vmatprep.subr.bf16.mxu0 0
        %3561 = vmatpush1.bf16.xpose.msra.mxu0 0
        %3562 = vmatprep.subr.bf16.mxu0 0
        %3563 = vmatpush1.bf16.xpose.msra.mxu0 0
        %3564 = vmatprep.subr.bf16.mxu0 0
        %3565 = vmatpush1.bf16.xpose.msra.mxu0 0
        %3566 = vmatprep.subr.bf16.mxu0 0
        %3567 = vmatpush1.bf16.xpose.msra.mxu0 0
        %3568 = vmatprep.subr.bf16.mxu0 0
        %3569 = vmatpush1.bf16.xpose.msra.mxu0 0
        %3570 = vmatprep.subr.bf16.mxu0 0
        %3571 = vmatpush1.bf16.xpose.msra.mxu0 0
        %3572 = vmatprep.subr.bf16.mxu0 0
        %3573 = vmatpush1.bf16.xpose.msra.mxu0 0
        %3574 = vmatprep.subr.bf16.mxu0 0
        %3575 = vmatpush1.bf16.xpose.msra.mxu0 0
        %3576 = vmatprep.subr.bf16.mxu0 0
        %3577 = vmatpush1.bf16.xpose.msra.mxu0 0
        %3578 = vmatprep.subr.bf16.mxu0 0
        %3579 = vmatpush1.bf16.xpose.msra.mxu0 0
        %3580 = vmatprep.mubr.bf16.mxu0 %v1473
        %3581 = vmatmul.mubr.bf16.gmra.mrb[0].mxu0 %v1472
        %v3582 = vpop.f32.mrb[0].mxu0
        %v3583 = vadd.f32 %v3543, %v3582
        %v3584 = vpop.f32.mrb[0].mxu0
        %v3585 = vpop.f32.mrb[0].mxu0
        %v3586 = vpop.f32.mrb[0].mxu0
        %3587 = vdwg.mxu0
        %3588 = vmatprep.subr.bf16.mxu0 %v2301
        %3589 = vmatpush1.bf16.xpose.msra.mxu0 %v2300
        %3590 = vmatprep.subr.bf16.mxu0 0
        %3591 = vmatpush1.bf16.xpose.msra.mxu0 0
        %3592 = vmatprep.subr.bf16.mxu0 0
        %3593 = vmatpush1.bf16.xpose.msra.mxu0 0
        %3594 = vmatprep.subr.bf16.mxu0 0
        %3595 = vmatpush1.bf16.xpose.msra.mxu0 0
        %3596 = vmatprep.subr.bf16.mxu0 0
        %3597 = vmatpush1.bf16.xpose.msra.mxu0 0
        %3598 = vmatprep.subr.bf16.mxu0 0
        %3599 = vmatpush1.bf16.xpose.msra.mxu0 0
        %3600 = vmatprep.subr.bf16.mxu0 0
        %3601 = vmatpush1.bf16.xpose.msra.mxu0 0
        %3602 = vmatprep.subr.bf16.mxu0 0
        %3603 = vmatpush1.bf16.xpose.msra.mxu0 0
        %3604 = vmatprep.subr.bf16.mxu0 0
        %3605 = vmatpush1.bf16.xpose.msra.mxu0 0
        %3606 = vmatprep.subr.bf16.mxu0 0
        %3607 = vmatpush1.bf16.xpose.msra.mxu0 0
        %3608 = vmatprep.subr.bf16.mxu0 0
        %3609 = vmatpush1.bf16.xpose.msra.mxu0 0
        %3610 = vmatprep.subr.bf16.mxu0 0
        %3611 = vmatpush1.bf16.xpose.msra.mxu0 0
        %3612 = vmatprep.subr.bf16.mxu0 0
        %3613 = vmatpush1.bf16.xpose.msra.mxu0 0
        %3614 = vmatprep.subr.bf16.mxu0 0
        %3615 = vmatpush1.bf16.xpose.msra.mxu0 0
        %3616 = vmatprep.subr.bf16.mxu0 0
        %3617 = vmatpush1.bf16.xpose.msra.mxu0 0
        %3618 = vmatprep.subr.bf16.mxu0 0
        %3619 = vmatpush1.bf16.xpose.msra.mxu0 0
        %3620 = vmatprep.mubr.bf16.mxu0 %v1475
        %3621 = vmatmul.mubr.bf16.gmra.mrb[0].mxu0 %v1474
        %v3622 = vpop.f32.mrb[0].mxu0
        %v3623 = vadd.f32 %v3583, %v3622
        %v3624 = vpop.f32.mrb[0].mxu0
        %v3625 = vpop.f32.mrb[0].mxu0
        %v3626 = vpop.f32.mrb[0].mxu0
        %3627 = vdwg.mxu0
        %3628 = vmatprep.subr.bf16.mxu0 %v2303
        %3629 = vmatpush1.bf16.xpose.msra.mxu0 %v2302
        %3630 = vmatprep.subr.bf16.mxu0 0
        %3631 = vmatpush1.bf16.xpose.msra.mxu0 0
        %3632 = vmatprep.subr.bf16.mxu0 0
        %3633 = vmatpush1.bf16.xpose.msra.mxu0 0
        %3634 = vmatprep.subr.bf16.mxu0 0
        %3635 = vmatpush1.bf16.xpose.msra.mxu0 0
        %3636 = vmatprep.subr.bf16.mxu0 0
        %3637 = vmatpush1.bf16.xpose.msra.mxu0 0
        %3638 = vmatprep.subr.bf16.mxu0 0
        %3639 = vmatpush1.bf16.xpose.msra.mxu0 0
        %3640 = vmatprep.subr.bf16.mxu0 0
        %3641 = vmatpush1.bf16.xpose.msra.mxu0 0
        %3642 = vmatprep.subr.bf16.mxu0 0
        %3643 = vmatpush1.bf16.xpose.msra.mxu0 0
        %3644 = vmatprep.subr.bf16.mxu0 0
        %3645 = vmatpush1.bf16.xpose.msra.mxu0 0
        %3646 = vmatprep.subr.bf16.mxu0 0
        %3647 = vmatpush1.bf16.xpose.msra.mxu0 0
        %3648 = vmatprep.subr.bf16.mxu0 0
        %3649 = vmatpush1.bf16.xpose.msra.mxu0 0
        %3650 = vmatprep.subr.bf16.mxu0 0
        %3651 = vmatpush1.bf16.xpose.msra.mxu0 0
        %3652 = vmatprep.subr.bf16.mxu0 0
        %3653 = vmatpush1.bf16.xpose.msra.mxu0 0
        %3654 = vmatprep.subr.bf16.mxu0 0
        %3655 = vmatpush1.bf16.xpose.msra.mxu0 0
        %3656 = vmatprep.subr.bf16.mxu0 0
        %3657 = vmatpush1.bf16.xpose.msra.mxu0 0
        %3658 = vmatprep.subr.bf16.mxu0 0
        %3659 = vmatpush1.bf16.xpose.msra.mxu0 0
        %3660 = vmatprep.mubr.bf16.mxu0 %v1477
        %3661 = vmatmul.mubr.bf16.gmra.mrb[0].mxu0 %v1476
        %v3662 = vpop.f32.mrb[0].mxu0
        %v3663 = vadd.f32 %v3623, %v3662
        %v3664 = vpop.f32.mrb[0].mxu0
        %v3665 = vpop.f32.mrb[0].mxu0
        %v3666 = vpop.f32.mrb[0].mxu0
        %3667 = vdwg.mxu0
        %3668 = vmatprep.subr.bf16.mxu0 %v2305
        %3669 = vmatpush1.bf16.xpose.msra.mxu0 %v2304
        %3670 = vmatprep.subr.bf16.mxu0 0
        %3671 = vmatpush1.bf16.xpose.msra.mxu0 0
        %3672 = vmatprep.subr.bf16.mxu0 0
        %3673 = vmatpush1.bf16.xpose.msra.mxu0 0
        %3674 = vmatprep.subr.bf16.mxu0 0
        %3675 = vmatpush1.bf16.xpose.msra.mxu0 0
        %3676 = vmatprep.subr.bf16.mxu0 0
        %3677 = vmatpush1.bf16.xpose.msra.mxu0 0
        %3678 = vmatprep.subr.bf16.mxu0 0
        %3679 = vmatpush1.bf16.xpose.msra.mxu0 0
        %3680 = vmatprep.subr.bf16.mxu0 0
        %3681 = vmatpush1.bf16.xpose.msra.mxu0 0
        %3682 = vmatprep.subr.bf16.mxu0 0
        %3683 = vmatpush1.bf16.xpose.msra.mxu0 0
        %3684 = vmatprep.subr.bf16.mxu0 0
        %3685 = vmatpush1.bf16.xpose.msra.mxu0 0
        %3686 = vmatprep.subr.bf16.mxu0 0
        %3687 = vmatpush1.bf16.xpose.msra.mxu0 0
        %3688 = vmatprep.subr.bf16.mxu0 0
        %3689 = vmatpush1.bf16.xpose.msra.mxu0 0
        %3690 = vmatprep.subr.bf16.mxu0 0
        %3691 = vmatpush1.bf16.xpose.msra.mxu0 0
        %3692 = vmatprep.subr.bf16.mxu0 0
        %3693 = vmatpush1.bf16.xpose.msra.mxu0 0
        %3694 = vmatprep.subr.bf16.mxu0 0
        %3695 = vmatpush1.bf16.xpose.msra.mxu0 0
        %3696 = vmatprep.subr.bf16.mxu0 0
        %3697 = vmatpush1.bf16.xpose.msra.mxu0 0
        %3698 = vmatprep.subr.bf16.mxu0 0
        %3699 = vmatpush1.bf16.xpose.msra.mxu0 0
        %3700 = vmatprep.mubr.bf16.mxu0 %v1479
        %3701 = vmatmul.mubr.bf16.gmra.mrb[0].mxu0 %v1478
        %v3702 = vpop.f32.mrb[0].mxu0
        %v3703 = vadd.f32 %v3663, %v3702
        %v3704 = vpop.f32.mrb[0].mxu0
        %v3705 = vpop.f32.mrb[0].mxu0
        %v3706 = vpop.f32.mrb[0].mxu0
        %3707 = vdwg.mxu0
        %3708 = vmatprep.subr.bf16.mxu0 %v2307
        %3709 = vmatpush1.bf16.xpose.msra.mxu0 %v2306
        %3710 = vmatprep.subr.bf16.mxu0 0
        %3711 = vmatpush1.bf16.xpose.msra.mxu0 0
        %3712 = vmatprep.subr.bf16.mxu0 0
        %3713 = vmatpush1.bf16.xpose.msra.mxu0 0
        %3714 = vmatprep.subr.bf16.mxu0 0
        %3715 = vmatpush1.bf16.xpose.msra.mxu0 0
        %3716 = vmatprep.subr.bf16.mxu0 0
        %3717 = vmatpush1.bf16.xpose.msra.mxu0 0
        %3718 = vmatprep.subr.bf16.mxu0 0
        %3719 = vmatpush1.bf16.xpose.msra.mxu0 0
        %3720 = vmatprep.subr.bf16.mxu0 0
        %3721 = vmatpush1.bf16.xpose.msra.mxu0 0
        %3722 = vmatprep.subr.bf16.mxu0 0
        %3723 = vmatpush1.bf16.xpose.msra.mxu0 0
        %3724 = vmatprep.subr.bf16.mxu0 0
        %3725 = vmatpush1.bf16.xpose.msra.mxu0 0
        %3726 = vmatprep.subr.bf16.mxu0 0
        %3727 = vmatpush1.bf16.xpose.msra.mxu0 0
        %3728 = vmatprep.subr.bf16.mxu0 0
        %3729 = vmatpush1.bf16.xpose.msra.mxu0 0
        %3730 = vmatprep.subr.bf16.mxu0 0
        %3731 = vmatpush1.bf16.xpose.msra.mxu0 0
        %3732 = vmatprep.subr.bf16.mxu0 0
        %3733 = vmatpush1.bf16.xpose.msra.mxu0 0
        %3734 = vmatprep.subr.bf16.mxu0 0
        %3735 = vmatpush1.bf16.xpose.msra.mxu0 0
        %3736 = vmatprep.subr.bf16.mxu0 0
        %3737 = vmatpush1.bf16.xpose.msra.mxu0 0
        %3738 = vmatprep.subr.bf16.mxu0 0
        %3739 = vmatpush1.bf16.xpose.msra.mxu0 0
        %3740 = vmatprep.mubr.bf16.mxu0 %v1481
        %3741 = vmatmul.mubr.bf16.gmra.mrb[0].mxu0 %v1480
        %v3742 = vpop.f32.mrb[0].mxu0
        %v3743 = vadd.f32 %v3703, %v3742
        %v3744 = vpop.f32.mrb[0].mxu0
        %v3745 = vpop.f32.mrb[0].mxu0
        %v3746 = vpop.f32.mrb[0].mxu0
        %3747 = vdwg.mxu0
        %3748 = vmatprep.subr.bf16.mxu0 %v2309
        %3749 = vmatpush1.bf16.xpose.msra.mxu0 %v2308
        %3750 = vmatprep.subr.bf16.mxu0 0
        %3751 = vmatpush1.bf16.xpose.msra.mxu0 0
        %3752 = vmatprep.subr.bf16.mxu0 0
        %3753 = vmatpush1.bf16.xpose.msra.mxu0 0
        %3754 = vmatprep.subr.bf16.mxu0 0
        %3755 = vmatpush1.bf16.xpose.msra.mxu0 0
        %3756 = vmatprep.subr.bf16.mxu0 0
        %3757 = vmatpush1.bf16.xpose.msra.mxu0 0
        %3758 = vmatprep.subr.bf16.mxu0 0
        %3759 = vmatpush1.bf16.xpose.msra.mxu0 0
        %3760 = vmatprep.subr.bf16.mxu0 0
        %3761 = vmatpush1.bf16.xpose.msra.mxu0 0
        %3762 = vmatprep.subr.bf16.mxu0 0
        %3763 = vmatpush1.bf16.xpose.msra.mxu0 0
        %3764 = vmatprep.subr.bf16.mxu0 0
        %3765 = vmatpush1.bf16.xpose.msra.mxu0 0
        %3766 = vmatprep.subr.bf16.mxu0 0
        %3767 = vmatpush1.bf16.xpose.msra.mxu0 0
        %3768 = vmatprep.subr.bf16.mxu0 0
        %3769 = vmatpush1.bf16.xpose.msra.mxu0 0
        %3770 = vmatprep.subr.bf16.mxu0 0
        %3771 = vmatpush1.bf16.xpose.msra.mxu0 0
        %3772 = vmatprep.subr.bf16.mxu0 0
        %3773 = vmatpush1.bf16.xpose.msra.mxu0 0
        %3774 = vmatprep.subr.bf16.mxu0 0
        %3775 = vmatpush1.bf16.xpose.msra.mxu0 0
        %3776 = vmatprep.subr.bf16.mxu0 0
        %3777 = vmatpush1.bf16.xpose.msra.mxu0 0
        %3778 = vmatprep.subr.bf16.mxu0 0
        %3779 = vmatpush1.bf16.xpose.msra.mxu0 0
        %3780 = vmatprep.mubr.bf16.mxu0 %v1483
        %3781 = vmatmul.mubr.bf16.gmra.mrb[0].mxu0 %v1482
        %v3782 = vpop.f32.mrb[0].mxu0
        %v3783 = vadd.f32 %v3743, %v3782
        %v3784 = vpop.f32.mrb[0].mxu0
        %v3785 = vpop.f32.mrb[0].mxu0
        %v3786 = vpop.f32.mrb[0].mxu0
        %3787 = vdwg.mxu0
        %3788 = vmatprep.subr.bf16.mxu0 %v2311
        %3789 = vmatpush1.bf16.xpose.msra.mxu0 %v2310
        %3790 = vmatprep.subr.bf16.mxu0 0
        %3791 = vmatpush1.bf16.xpose.msra.mxu0 0
        %3792 = vmatprep.subr.bf16.mxu0 0
        %3793 = vmatpush1.bf16.xpose.msra.mxu0 0
        %3794 = vmatprep.subr.bf16.mxu0 0
        %3795 = vmatpush1.bf16.xpose.msra.mxu0 0
        %3796 = vmatprep.subr.bf16.mxu0 0
        %3797 = vmatpush1.bf16.xpose.msra.mxu0 0
        %3798 = vmatprep.subr.bf16.mxu0 0
        %3799 = vmatpush1.bf16.xpose.msra.mxu0 0
        %3800 = vmatprep.subr.bf16.mxu0 0
        %3801 = vmatpush1.bf16.xpose.msra.mxu0 0
        %3802 = vmatprep.subr.bf16.mxu0 0
        %3803 = vmatpush1.bf16.xpose.msra.mxu0 0
        %3804 = vmatprep.subr.bf16.mxu0 0
        %3805 = vmatpush1.bf16.xpose.msra.mxu0 0
        %3806 = vmatprep.subr.bf16.mxu0 0
        %3807 = vmatpush1.bf16.xpose.msra.mxu0 0
        %3808 = vmatprep.subr.bf16.mxu0 0
        %3809 = vmatpush1.bf16.xpose.msra.mxu0 0
        %3810 = vmatprep.subr.bf16.mxu0 0
        %3811 = vmatpush1.bf16.xpose.msra.mxu0 0
        %3812 = vmatprep.subr.bf16.mxu0 0
        %3813 = vmatpush1.bf16.xpose.msra.mxu0 0
        %3814 = vmatprep.subr.bf16.mxu0 0
        %3815 = vmatpush1.bf16.xpose.msra.mxu0 0
        %3816 = vmatprep.subr.bf16.mxu0 0
        %3817 = vmatpush1.bf16.xpose.msra.mxu0 0
        %3818 = vmatprep.subr.bf16.mxu0 0
        %3819 = vmatpush1.bf16.xpose.msra.mxu0 0
        %3820 = vmatprep.mubr.bf16.mxu0 %v1485
        %3821 = vmatmul.mubr.bf16.gmra.mrb[0].mxu0 %v1484
        %v3822 = vpop.f32.mrb[0].mxu0
        %v3823 = vadd.f32 %v3783, %v3822
        %v3824 = vpop.f32.mrb[0].mxu0
        %v3825 = vpop.f32.mrb[0].mxu0
        %v3826 = vpop.f32.mrb[0].mxu0
        %3827 = vdwg.mxu0
        %3828 = vmatprep.subr.bf16.mxu0 %v2313
        %3829 = vmatpush1.bf16.xpose.msra.mxu0 %v2312
        %3830 = vmatprep.subr.bf16.mxu0 0
        %3831 = vmatpush1.bf16.xpose.msra.mxu0 0
        %3832 = vmatprep.subr.bf16.mxu0 0
        %3833 = vmatpush1.bf16.xpose.msra.mxu0 0
        %3834 = vmatprep.subr.bf16.mxu0 0
        %3835 = vmatpush1.bf16.xpose.msra.mxu0 0
        %3836 = vmatprep.subr.bf16.mxu0 0
        %3837 = vmatpush1.bf16.xpose.msra.mxu0 0
        %3838 = vmatprep.subr.bf16.mxu0 0
        %3839 = vmatpush1.bf16.xpose.msra.mxu0 0
        %3840 = vmatprep.subr.bf16.mxu0 0
        %3841 = vmatpush1.bf16.xpose.msra.mxu0 0
        %3842 = vmatprep.subr.bf16.mxu0 0
        %3843 = vmatpush1.bf16.xpose.msra.mxu0 0
        %3844 = vmatprep.subr.bf16.mxu0 0
        %3845 = vmatpush1.bf16.xpose.msra.mxu0 0
        %3846 = vmatprep.subr.bf16.mxu0 0
        %3847 = vmatpush1.bf16.xpose.msra.mxu0 0
        %3848 = vmatprep.subr.bf16.mxu0 0
        %3849 = vmatpush1.bf16.xpose.msra.mxu0 0
        %3850 = vmatprep.subr.bf16.mxu0 0
        %3851 = vmatpush1.bf16.xpose.msra.mxu0 0
        %3852 = vmatprep.subr.bf16.mxu0 0
        %3853 = vmatpush1.bf16.xpose.msra.mxu0 0
        %3854 = vmatprep.subr.bf16.mxu0 0
        %3855 = vmatpush1.bf16.xpose.msra.mxu0 0
        %3856 = vmatprep.subr.bf16.mxu0 0
        %3857 = vmatpush1.bf16.xpose.msra.mxu0 0
        %3858 = vmatprep.subr.bf16.mxu0 0
        %3859 = vmatpush1.bf16.xpose.msra.mxu0 0
        %3860 = vmatprep.mubr.bf16.mxu0 %v1487
        %3861 = vmatmul.mubr.bf16.gmra.mrb[0].mxu0 %v1486
        %v3862 = vpop.f32.mrb[0].mxu0
        %v3863 = vadd.f32 %v3823, %v3862
        %v3864 = vpop.f32.mrb[0].mxu0
        %v3865 = vpop.f32.mrb[0].mxu0
        %v3866 = vpop.f32.mrb[0].mxu0
        %3867 = vdwg.mxu0
        %3868 = vmatprep.subr.bf16.mxu0 %v2315
        %3869 = vmatpush1.bf16.xpose.msra.mxu0 %v2314
        %3870 = vmatprep.subr.bf16.mxu0 0
        %3871 = vmatpush1.bf16.xpose.msra.mxu0 0
        %3872 = vmatprep.subr.bf16.mxu0 0
        %3873 = vmatpush1.bf16.xpose.msra.mxu0 0
        %3874 = vmatprep.subr.bf16.mxu0 0
        %3875 = vmatpush1.bf16.xpose.msra.mxu0 0
        %3876 = vmatprep.subr.bf16.mxu0 0
        %3877 = vmatpush1.bf16.xpose.msra.mxu0 0
        %3878 = vmatprep.subr.bf16.mxu0 0
        %3879 = vmatpush1.bf16.xpose.msra.mxu0 0
        %3880 = vmatprep.subr.bf16.mxu0 0
        %3881 = vmatpush1.bf16.xpose.msra.mxu0 0
        %3882 = vmatprep.subr.bf16.mxu0 0
        %3883 = vmatpush1.bf16.xpose.msra.mxu0 0
        %3884 = vmatprep.subr.bf16.mxu0 0
        %3885 = vmatpush1.bf16.xpose.msra.mxu0 0
        %3886 = vmatprep.subr.bf16.mxu0 0
        %3887 = vmatpush1.bf16.xpose.msra.mxu0 0
        %3888 = vmatprep.subr.bf16.mxu0 0
        %3889 = vmatpush1.bf16.xpose.msra.mxu0 0
        %3890 = vmatprep.subr.bf16.mxu0 0
        %3891 = vmatpush1.bf16.xpose.msra.mxu0 0
        %3892 = vmatprep.subr.bf16.mxu0 0
        %3893 = vmatpush1.bf16.xpose.msra.mxu0 0
        %3894 = vmatprep.subr.bf16.mxu0 0
        %3895 = vmatpush1.bf16.xpose.msra.mxu0 0
        %3896 = vmatprep.subr.bf16.mxu0 0
        %3897 = vmatpush1.bf16.xpose.msra.mxu0 0
        %3898 = vmatprep.subr.bf16.mxu0 0
        %3899 = vmatpush1.bf16.xpose.msra.mxu0 0
        %3900 = vmatprep.mubr.bf16.mxu0 %v1489
        %3901 = vmatmul.mubr.bf16.gmra.mrb[0].mxu0 %v1488
        %v3902 = vpop.f32.mrb[0].mxu0
        %v3903 = vadd.f32 %v3863, %v3902
        %v3904 = vpop.f32.mrb[0].mxu0
        %v3905 = vpop.f32.mrb[0].mxu0
        %v3906 = vpop.f32.mrb[0].mxu0
        %3907 = vdwg.mxu0
        %3908 = vmatprep.subr.bf16.mxu0 %v2317
        %3909 = vmatpush1.bf16.xpose.msra.mxu0 %v2316
        %3910 = vmatprep.subr.bf16.mxu0 0
        %3911 = vmatpush1.bf16.xpose.msra.mxu0 0
        %3912 = vmatprep.subr.bf16.mxu0 0
        %3913 = vmatpush1.bf16.xpose.msra.mxu0 0
        %3914 = vmatprep.subr.bf16.mxu0 0
        %3915 = vmatpush1.bf16.xpose.msra.mxu0 0
        %3916 = vmatprep.subr.bf16.mxu0 0
        %3917 = vmatpush1.bf16.xpose.msra.mxu0 0
        %3918 = vmatprep.subr.bf16.mxu0 0
        %3919 = vmatpush1.bf16.xpose.msra.mxu0 0
        %3920 = vmatprep.subr.bf16.mxu0 0
        %3921 = vmatpush1.bf16.xpose.msra.mxu0 0
        %3922 = vmatprep.subr.bf16.mxu0 0
        %3923 = vmatpush1.bf16.xpose.msra.mxu0 0
        %3924 = vmatprep.subr.bf16.mxu0 0
        %3925 = vmatpush1.bf16.xpose.msra.mxu0 0
        %3926 = vmatprep.subr.bf16.mxu0 0
        %3927 = vmatpush1.bf16.xpose.msra.mxu0 0
        %3928 = vmatprep.subr.bf16.mxu0 0
        %3929 = vmatpush1.bf16.xpose.msra.mxu0 0
        %3930 = vmatprep.subr.bf16.mxu0 0
        %3931 = vmatpush1.bf16.xpose.msra.mxu0 0
        %3932 = vmatprep.subr.bf16.mxu0 0
        %3933 = vmatpush1.bf16.xpose.msra.mxu0 0
        %3934 = vmatprep.subr.bf16.mxu0 0
        %3935 = vmatpush1.bf16.xpose.msra.mxu0 0
        %3936 = vmatprep.subr.bf16.mxu0 0
        %3937 = vmatpush1.bf16.xpose.msra.mxu0 0
        %3938 = vmatprep.subr.bf16.mxu0 0
        %3939 = vmatpush1.bf16.xpose.msra.mxu0 0
        %3940 = vmatprep.mubr.bf16.mxu0 %v1491
        %3941 = vmatmul.mubr.bf16.gmra.mrb[0].mxu0 %v1490
        %v3942 = vpop.f32.mrb[0].mxu0
        %v3943 = vadd.f32 %v3903, %v3942
        %v3944 = vpop.f32.mrb[0].mxu0
        %v3945 = vpop.f32.mrb[0].mxu0
        %v3946 = vpop.f32.mrb[0].mxu0
        %3947 = vdwg.mxu0
        %3948 = vmatprep.subr.bf16.mxu0 %v2319
        %3949 = vmatpush1.bf16.xpose.msra.mxu0 %v2318
        %3950 = vmatprep.subr.bf16.mxu0 0
        %3951 = vmatpush1.bf16.xpose.msra.mxu0 0
        %3952 = vmatprep.subr.bf16.mxu0 0
        %3953 = vmatpush1.bf16.xpose.msra.mxu0 0
        %3954 = vmatprep.subr.bf16.mxu0 0
        %3955 = vmatpush1.bf16.xpose.msra.mxu0 0
        %3956 = vmatprep.subr.bf16.mxu0 0
        %3957 = vmatpush1.bf16.xpose.msra.mxu0 0
        %3958 = vmatprep.subr.bf16.mxu0 0
        %3959 = vmatpush1.bf16.xpose.msra.mxu0 0
        %3960 = vmatprep.subr.bf16.mxu0 0
        %3961 = vmatpush1.bf16.xpose.msra.mxu0 0
        %3962 = vmatprep.subr.bf16.mxu0 0
        %3963 = vmatpush1.bf16.xpose.msra.mxu0 0
        %3964 = vmatprep.subr.bf16.mxu0 0
        %3965 = vmatpush1.bf16.xpose.msra.mxu0 0
        %3966 = vmatprep.subr.bf16.mxu0 0
        %3967 = vmatpush1.bf16.xpose.msra.mxu0 0
        %3968 = vmatprep.subr.bf16.mxu0 0
        %3969 = vmatpush1.bf16.xpose.msra.mxu0 0
        %3970 = vmatprep.subr.bf16.mxu0 0
        %3971 = vmatpush1.bf16.xpose.msra.mxu0 0
        %3972 = vmatprep.subr.bf16.mxu0 0
        %3973 = vmatpush1.bf16.xpose.msra.mxu0 0
        %3974 = vmatprep.subr.bf16.mxu0 0
        %3975 = vmatpush1.bf16.xpose.msra.mxu0 0
        %3976 = vmatprep.subr.bf16.mxu0 0
        %3977 = vmatpush1.bf16.xpose.msra.mxu0 0
        %3978 = vmatprep.subr.bf16.mxu0 0
        %3979 = vmatpush1.bf16.xpose.msra.mxu0 0
        %3980 = vmatprep.mubr.bf16.mxu0 %v1493
        %3981 = vmatmul.mubr.bf16.gmra.mrb[0].mxu0 %v1492
        %v3982 = vpop.f32.mrb[0].mxu0
        %v3983 = vadd.f32 %v3943, %v3982
        %v3984 = vpop.f32.mrb[0].mxu0
        %v3985 = vpop.f32.mrb[0].mxu0
        %v3986 = vpop.f32.mrb[0].mxu0
        %3987 = vdwg.mxu0
        %3988 = vmatprep.subr.bf16.mxu0 %v2321
        %3989 = vmatpush1.bf16.xpose.msra.mxu0 %v2320
        %3990 = vmatprep.subr.bf16.mxu0 0
        %3991 = vmatpush1.bf16.xpose.msra.mxu0 0
        %3992 = vmatprep.subr.bf16.mxu0 0
        %3993 = vmatpush1.bf16.xpose.msra.mxu0 0
        %3994 = vmatprep.subr.bf16.mxu0 0
        %3995 = vmatpush1.bf16.xpose.msra.mxu0 0
        %3996 = vmatprep.subr.bf16.mxu0 0
        %3997 = vmatpush1.bf16.xpose.msra.mxu0 0
        %3998 = vmatprep.subr.bf16.mxu0 0
        %3999 = vmatpush1.bf16.xpose.msra.mxu0 0
        %4000 = vmatprep.subr.bf16.mxu0 0
        %4001 = vmatpush1.bf16.xpose.msra.mxu0 0
        %4002 = vmatprep.subr.bf16.mxu0 0
        %4003 = vmatpush1.bf16.xpose.msra.mxu0 0
        %4004 = vmatprep.subr.bf16.mxu0 0
        %4005 = vmatpush1.bf16.xpose.msra.mxu0 0
        %4006 = vmatprep.subr.bf16.mxu0 0
        %4007 = vmatpush1.bf16.xpose.msra.mxu0 0
        %4008 = vmatprep.subr.bf16.mxu0 0
        %4009 = vmatpush1.bf16.xpose.msra.mxu0 0
        %4010 = vmatprep.subr.bf16.mxu0 0
        %4011 = vmatpush1.bf16.xpose.msra.mxu0 0
        %4012 = vmatprep.subr.bf16.mxu0 0
        %4013 = vmatpush1.bf16.xpose.msra.mxu0 0
        %4014 = vmatprep.subr.bf16.mxu0 0
        %4015 = vmatpush1.bf16.xpose.msra.mxu0 0
        %4016 = vmatprep.subr.bf16.mxu0 0
        %4017 = vmatpush1.bf16.xpose.msra.mxu0 0
        %4018 = vmatprep.subr.bf16.mxu0 0
        %4019 = vmatpush1.bf16.xpose.msra.mxu0 0
        %4020 = vmatprep.mubr.bf16.mxu0 %v1495
        %4021 = vmatmul.mubr.bf16.gmra.mrb[0].mxu0 %v1494
        %v4022 = vpop.f32.mrb[0].mxu0
        %v4023 = vadd.f32 %v3983, %v4022
        %v4024 = vpop.f32.mrb[0].mxu0
        %v4025 = vpop.f32.mrb[0].mxu0
        %v4026 = vpop.f32.mrb[0].mxu0
        %4027 = vdwg.mxu0
        %4028 = vmatprep.subr.bf16.mxu0 %v2323
        %4029 = vmatpush1.bf16.xpose.msra.mxu0 %v2322
        %4030 = vmatprep.subr.bf16.mxu0 0
        %4031 = vmatpush1.bf16.xpose.msra.mxu0 0
        %4032 = vmatprep.subr.bf16.mxu0 0
        %4033 = vmatpush1.bf16.xpose.msra.mxu0 0
        %4034 = vmatprep.subr.bf16.mxu0 0
        %4035 = vmatpush1.bf16.xpose.msra.mxu0 0
        %4036 = vmatprep.subr.bf16.mxu0 0
        %4037 = vmatpush1.bf16.xpose.msra.mxu0 0
        %4038 = vmatprep.subr.bf16.mxu0 0
        %4039 = vmatpush1.bf16.xpose.msra.mxu0 0
        %4040 = vmatprep.subr.bf16.mxu0 0
        %4041 = vmatpush1.bf16.xpose.msra.mxu0 0
        %4042 = vmatprep.subr.bf16.mxu0 0
        %4043 = vmatpush1.bf16.xpose.msra.mxu0 0
        %4044 = vmatprep.subr.bf16.mxu0 0
        %4045 = vmatpush1.bf16.xpose.msra.mxu0 0
        %4046 = vmatprep.subr.bf16.mxu0 0
        %4047 = vmatpush1.bf16.xpose.msra.mxu0 0
        %4048 = vmatprep.subr.bf16.mxu0 0
        %4049 = vmatpush1.bf16.xpose.msra.mxu0 0
        %4050 = vmatprep.subr.bf16.mxu0 0
        %4051 = vmatpush1.bf16.xpose.msra.mxu0 0
        %4052 = vmatprep.subr.bf16.mxu0 0
        %4053 = vmatpush1.bf16.xpose.msra.mxu0 0
        %4054 = vmatprep.subr.bf16.mxu0 0
        %4055 = vmatpush1.bf16.xpose.msra.mxu0 0
        %4056 = vmatprep.subr.bf16.mxu0 0
        %4057 = vmatpush1.bf16.xpose.msra.mxu0 0
        %4058 = vmatprep.subr.bf16.mxu0 0
        %4059 = vmatpush1.bf16.xpose.msra.mxu0 0
        %4060 = vmatprep.mubr.bf16.mxu0 %v1497
        %4061 = vmatmul.mubr.bf16.gmra.mrb[0].mxu0 %v1496
        %v4062 = vpop.f32.mrb[0].mxu0
        %v4063 = vadd.f32 %v4023, %v4062
        %v4064 = vpop.f32.mrb[0].mxu0
        %v4065 = vpop.f32.mrb[0].mxu0
        %v4066 = vpop.f32.mrb[0].mxu0
        %4067 = vdwg.mxu0
        %4068 = vmatprep.subr.bf16.mxu0 %v2325
        %4069 = vmatpush1.bf16.xpose.msra.mxu0 %v2324
        %4070 = vmatprep.subr.bf16.mxu0 0
        %4071 = vmatpush1.bf16.xpose.msra.mxu0 0
        %4072 = vmatprep.subr.bf16.mxu0 0
        %4073 = vmatpush1.bf16.xpose.msra.mxu0 0
        %4074 = vmatprep.subr.bf16.mxu0 0
        %4075 = vmatpush1.bf16.xpose.msra.mxu0 0
        %4076 = vmatprep.subr.bf16.mxu0 0
        %4077 = vmatpush1.bf16.xpose.msra.mxu0 0
        %4078 = vmatprep.subr.bf16.mxu0 0
        %4079 = vmatpush1.bf16.xpose.msra.mxu0 0
        %4080 = vmatprep.subr.bf16.mxu0 0
        %4081 = vmatpush1.bf16.xpose.msra.mxu0 0
        %4082 = vmatprep.subr.bf16.mxu0 0
        %4083 = vmatpush1.bf16.xpose.msra.mxu0 0
        %4084 = vmatprep.subr.bf16.mxu0 0
        %4085 = vmatpush1.bf16.xpose.msra.mxu0 0
        %4086 = vmatprep.subr.bf16.mxu0 0
        %4087 = vmatpush1.bf16.xpose.msra.mxu0 0
        %4088 = vmatprep.subr.bf16.mxu0 0
        %4089 = vmatpush1.bf16.xpose.msra.mxu0 0
        %4090 = vmatprep.subr.bf16.mxu0 0
        %4091 = vmatpush1.bf16.xpose.msra.mxu0 0
        %4092 = vmatprep.subr.bf16.mxu0 0
        %4093 = vmatpush1.bf16.xpose.msra.mxu0 0
        %4094 = vmatprep.subr.bf16.mxu0 0
        %4095 = vmatpush1.bf16.xpose.msra.mxu0 0
        %4096 = vmatprep.subr.bf16.mxu0 0
        %4097 = vmatpush1.bf16.xpose.msra.mxu0 0
        %4098 = vmatprep.subr.bf16.mxu0 0
        %4099 = vmatpush1.bf16.xpose.msra.mxu0 0
        %4100 = vmatprep.mubr.bf16.mxu0 %v1499
        %4101 = vmatmul.mubr.bf16.gmra.mrb[0].mxu0 %v1498
        %v4102 = vpop.f32.mrb[0].mxu0
        %v4103 = vadd.f32 %v4063, %v4102
        %v4104 = vpop.f32.mrb[0].mxu0
        %v4105 = vpop.f32.mrb[0].mxu0
        %v4106 = vpop.f32.mrb[0].mxu0
        %4107 = vdwg.mxu0
        %4108 = vmatprep.subr.bf16.mxu0 %v2327
        %4109 = vmatpush1.bf16.xpose.msra.mxu0 %v2326
        %4110 = vmatprep.subr.bf16.mxu0 0
        %4111 = vmatpush1.bf16.xpose.msra.mxu0 0
        %4112 = vmatprep.subr.bf16.mxu0 0
        %4113 = vmatpush1.bf16.xpose.msra.mxu0 0
        %4114 = vmatprep.subr.bf16.mxu0 0
        %4115 = vmatpush1.bf16.xpose.msra.mxu0 0
        %4116 = vmatprep.subr.bf16.mxu0 0
        %4117 = vmatpush1.bf16.xpose.msra.mxu0 0
        %4118 = vmatprep.subr.bf16.mxu0 0
        %4119 = vmatpush1.bf16.xpose.msra.mxu0 0
        %4120 = vmatprep.subr.bf16.mxu0 0
        %4121 = vmatpush1.bf16.xpose.msra.mxu0 0
        %4122 = vmatprep.subr.bf16.mxu0 0
        %4123 = vmatpush1.bf16.xpose.msra.mxu0 0
        %4124 = vmatprep.subr.bf16.mxu0 0
        %4125 = vmatpush1.bf16.xpose.msra.mxu0 0
        %4126 = vmatprep.subr.bf16.mxu0 0
        %4127 = vmatpush1.bf16.xpose.msra.mxu0 0
        %4128 = vmatprep.subr.bf16.mxu0 0
        %4129 = vmatpush1.bf16.xpose.msra.mxu0 0
        %4130 = vmatprep.subr.bf16.mxu0 0
        %4131 = vmatpush1.bf16.xpose.msra.mxu0 0
        %4132 = vmatprep.subr.bf16.mxu0 0
        %4133 = vmatpush1.bf16.xpose.msra.mxu0 0
        %4134 = vmatprep.subr.bf16.mxu0 0
        %4135 = vmatpush1.bf16.xpose.msra.mxu0 0
        %4136 = vmatprep.subr.bf16.mxu0 0
        %4137 = vmatpush1.bf16.xpose.msra.mxu0 0
        %4138 = vmatprep.subr.bf16.mxu0 0
        %4139 = vmatpush1.bf16.xpose.msra.mxu0 0
        %4140 = vmatprep.mubr.bf16.mxu0 %v1501
        %4141 = vmatmul.mubr.bf16.gmra.mrb[0].mxu0 %v1500
        %v4142 = vpop.f32.mrb[0].mxu0
        %v4143 = vadd.f32 %v4103, %v4142
        %v4144 = vpop.f32.mrb[0].mxu0
        %v4145 = vpop.f32.mrb[0].mxu0
        %v4146 = vpop.f32.mrb[0].mxu0
        %4147 = vdwg.mxu0
        %4148 = vmatprep.subr.bf16.mxu0 %v2329
        %4149 = vmatpush1.bf16.xpose.msra.mxu0 %v2328
        %4150 = vmatprep.subr.bf16.mxu0 0
        %4151 = vmatpush1.bf16.xpose.msra.mxu0 0
        %4152 = vmatprep.subr.bf16.mxu0 0
        %4153 = vmatpush1.bf16.xpose.msra.mxu0 0
        %4154 = vmatprep.subr.bf16.mxu0 0
        %4155 = vmatpush1.bf16.xpose.msra.mxu0 0
        %4156 = vmatprep.subr.bf16.mxu0 0
        %4157 = vmatpush1.bf16.xpose.msra.mxu0 0
        %4158 = vmatprep.subr.bf16.mxu0 0
        %4159 = vmatpush1.bf16.xpose.msra.mxu0 0
        %4160 = vmatprep.subr.bf16.mxu0 0
        %4161 = vmatpush1.bf16.xpose.msra.mxu0 0
        %4162 = vmatprep.subr.bf16.mxu0 0
        %4163 = vmatpush1.bf16.xpose.msra.mxu0 0
        %4164 = vmatprep.subr.bf16.mxu0 0
        %4165 = vmatpush1.bf16.xpose.msra.mxu0 0
        %4166 = vmatprep.subr.bf16.mxu0 0
        %4167 = vmatpush1.bf16.xpose.msra.mxu0 0
        %4168 = vmatprep.subr.bf16.mxu0 0
        %4169 = vmatpush1.bf16.xpose.msra.mxu0 0
        %4170 = vmatprep.subr.bf16.mxu0 0
        %4171 = vmatpush1.bf16.xpose.msra.mxu0 0
        %4172 = vmatprep.subr.bf16.mxu0 0
        %4173 = vmatpush1.bf16.xpose.msra.mxu0 0
        %4174 = vmatprep.subr.bf16.mxu0 0
        %4175 = vmatpush1.bf16.xpose.msra.mxu0 0
        %4176 = vmatprep.subr.bf16.mxu0 0
        %4177 = vmatpush1.bf16.xpose.msra.mxu0 0
        %4178 = vmatprep.subr.bf16.mxu0 0
        %4179 = vmatpush1.bf16.xpose.msra.mxu0 0
        %4180 = vmatprep.mubr.bf16.mxu0 %v1503
        %4181 = vmatmul.mubr.bf16.gmra.mrb[0].mxu0 %v1502
        %v4182 = vpop.f32.mrb[0].mxu0
        %v4183 = vadd.f32 %v4143, %v4182
        %v4184 = vpop.f32.mrb[0].mxu0
        %v4185 = vpop.f32.mrb[0].mxu0
        %v4186 = vpop.f32.mrb[0].mxu0
        %4187 = vdwg.mxu0
        %4188 = vmatprep.subr.bf16.mxu0 %v2331
        %4189 = vmatpush1.bf16.xpose.msra.mxu0 %v2330
        %4190 = vmatprep.subr.bf16.mxu0 0
        %4191 = vmatpush1.bf16.xpose.msra.mxu0 0
        %4192 = vmatprep.subr.bf16.mxu0 0
        %4193 = vmatpush1.bf16.xpose.msra.mxu0 0
        %4194 = vmatprep.subr.bf16.mxu0 0
        %4195 = vmatpush1.bf16.xpose.msra.mxu0 0
        %4196 = vmatprep.subr.bf16.mxu0 0
        %4197 = vmatpush1.bf16.xpose.msra.mxu0 0
        %4198 = vmatprep.subr.bf16.mxu0 0
        %4199 = vmatpush1.bf16.xpose.msra.mxu0 0
        %4200 = vmatprep.subr.bf16.mxu0 0
        %4201 = vmatpush1.bf16.xpose.msra.mxu0 0
        %4202 = vmatprep.subr.bf16.mxu0 0
        %4203 = vmatpush1.bf16.xpose.msra.mxu0 0
        %4204 = vmatprep.subr.bf16.mxu0 0
        %4205 = vmatpush1.bf16.xpose.msra.mxu0 0
        %4206 = vmatprep.subr.bf16.mxu0 0
        %4207 = vmatpush1.bf16.xpose.msra.mxu0 0
        %4208 = vmatprep.subr.bf16.mxu0 0
        %4209 = vmatpush1.bf16.xpose.msra.mxu0 0
        %4210 = vmatprep.subr.bf16.mxu0 0
        %4211 = vmatpush1.bf16.xpose.msra.mxu0 0
        %4212 = vmatprep.subr.bf16.mxu0 0
        %4213 = vmatpush1.bf16.xpose.msra.mxu0 0
        %4214 = vmatprep.subr.bf16.mxu0 0
        %4215 = vmatpush1.bf16.xpose.msra.mxu0 0
        %4216 = vmatprep.subr.bf16.mxu0 0
        %4217 = vmatpush1.bf16.xpose.msra.mxu0 0
        %4218 = vmatprep.subr.bf16.mxu0 0
        %4219 = vmatpush1.bf16.xpose.msra.mxu0 0
        %4220 = vmatprep.mubr.bf16.mxu0 %v1505
        %4221 = vmatmul.mubr.bf16.gmra.mrb[0].mxu0 %v1504
        %v4222 = vpop.f32.mrb[0].mxu0
        %v4223 = vadd.f32 %v4183, %v4222
        %v4224 = vpop.f32.mrb[0].mxu0
        %v4225 = vpop.f32.mrb[0].mxu0
        %v4226 = vpop.f32.mrb[0].mxu0
        %4227 = vdwg.mxu0
        %4228 = vmatprep.subr.bf16.mxu0 %v2333
        %4229 = vmatpush1.bf16.xpose.msra.mxu0 %v2332
        %4230 = vmatprep.subr.bf16.mxu0 0
        %4231 = vmatpush1.bf16.xpose.msra.mxu0 0
        %4232 = vmatprep.subr.bf16.mxu0 0
        %4233 = vmatpush1.bf16.xpose.msra.mxu0 0
        %4234 = vmatprep.subr.bf16.mxu0 0
        %4235 = vmatpush1.bf16.xpose.msra.mxu0 0
        %4236 = vmatprep.subr.bf16.mxu0 0
        %4237 = vmatpush1.bf16.xpose.msra.mxu0 0
        %4238 = vmatprep.subr.bf16.mxu0 0
        %4239 = vmatpush1.bf16.xpose.msra.mxu0 0
        %4240 = vmatprep.subr.bf16.mxu0 0
        %4241 = vmatpush1.bf16.xpose.msra.mxu0 0
        %4242 = vmatprep.subr.bf16.mxu0 0
        %4243 = vmatpush1.bf16.xpose.msra.mxu0 0
        %4244 = vmatprep.subr.bf16.mxu0 0
        %4245 = vmatpush1.bf16.xpose.msra.mxu0 0
        %4246 = vmatprep.subr.bf16.mxu0 0
        %4247 = vmatpush1.bf16.xpose.msra.mxu0 0
        %4248 = vmatprep.subr.bf16.mxu0 0
        %4249 = vmatpush1.bf16.xpose.msra.mxu0 0
        %4250 = vmatprep.subr.bf16.mxu0 0
        %4251 = vmatpush1.bf16.xpose.msra.mxu0 0
        %4252 = vmatprep.subr.bf16.mxu0 0
        %4253 = vmatpush1.bf16.xpose.msra.mxu0 0
        %4254 = vmatprep.subr.bf16.mxu0 0
        %4255 = vmatpush1.bf16.xpose.msra.mxu0 0
        %4256 = vmatprep.subr.bf16.mxu0 0
        %4257 = vmatpush1.bf16.xpose.msra.mxu0 0
        %4258 = vmatprep.subr.bf16.mxu0 0
        %4259 = vmatpush1.bf16.xpose.msra.mxu0 0
        %4260 = vmatprep.mubr.bf16.mxu0 %v1507
        %4261 = vmatmul.mubr.bf16.gmra.mrb[0].mxu0 %v1506
        %v4262 = vpop.f32.mrb[0].mxu0
        %v4263 = vadd.f32 %v4223, %v4262
        %v4264 = vpop.f32.mrb[0].mxu0
        %v4265 = vpop.f32.mrb[0].mxu0
        %v4266 = vpop.f32.mrb[0].mxu0
        %4267 = vdwg.mxu0
        %4268 = vmatprep.subr.bf16.mxu0 %v2335
        %4269 = vmatpush1.bf16.xpose.msra.mxu0 %v2334
        %4270 = vmatprep.subr.bf16.mxu0 0
        %4271 = vmatpush1.bf16.xpose.msra.mxu0 0
        %4272 = vmatprep.subr.bf16.mxu0 0
        %4273 = vmatpush1.bf16.xpose.msra.mxu0 0
        %4274 = vmatprep.subr.bf16.mxu0 0
        %4275 = vmatpush1.bf16.xpose.msra.mxu0 0
        %4276 = vmatprep.subr.bf16.mxu0 0
        %4277 = vmatpush1.bf16.xpose.msra.mxu0 0
        %4278 = vmatprep.subr.bf16.mxu0 0
        %4279 = vmatpush1.bf16.xpose.msra.mxu0 0
        %4280 = vmatprep.subr.bf16.mxu0 0
        %4281 = vmatpush1.bf16.xpose.msra.mxu0 0
        %4282 = vmatprep.subr.bf16.mxu0 0
        %4283 = vmatpush1.bf16.xpose.msra.mxu0 0
        %4284 = vmatprep.subr.bf16.mxu0 0
        %4285 = vmatpush1.bf16.xpose.msra.mxu0 0
        %4286 = vmatprep.subr.bf16.mxu0 0
        %4287 = vmatpush1.bf16.xpose.msra.mxu0 0
        %4288 = vmatprep.subr.bf16.mxu0 0
        %4289 = vmatpush1.bf16.xpose.msra.mxu0 0
        %4290 = vmatprep.subr.bf16.mxu0 0
        %4291 = vmatpush1.bf16.xpose.msra.mxu0 0
        %4292 = vmatprep.subr.bf16.mxu0 0
        %4293 = vmatpush1.bf16.xpose.msra.mxu0 0
        %4294 = vmatprep.subr.bf16.mxu0 0
        %4295 = vmatpush1.bf16.xpose.msra.mxu0 0
        %4296 = vmatprep.subr.bf16.mxu0 0
        %4297 = vmatpush1.bf16.xpose.msra.mxu0 0
        %4298 = vmatprep.subr.bf16.mxu0 0
        %4299 = vmatpush1.bf16.xpose.msra.mxu0 0
        %4300 = vmatprep.mubr.bf16.mxu0 %v1509
        %4301 = vmatmul.mubr.bf16.gmra.mrb[0].mxu0 %v1508
        %v4302 = vpop.f32.mrb[0].mxu0
        %v4303 = vadd.f32 %v4263, %v4302
        %v4304 = vpop.f32.mrb[0].mxu0
        %v4305 = vpop.f32.mrb[0].mxu0
        %v4306 = vpop.f32.mrb[0].mxu0
        %4307 = vdwg.mxu0
        %4308 = vmatprep.subr.bf16.mxu0 %v2337
        %4309 = vmatpush1.bf16.xpose.msra.mxu0 %v2336
        %4310 = vmatprep.subr.bf16.mxu0 0
        %4311 = vmatpush1.bf16.xpose.msra.mxu0 0
        %4312 = vmatprep.subr.bf16.mxu0 0
        %4313 = vmatpush1.bf16.xpose.msra.mxu0 0
        %4314 = vmatprep.subr.bf16.mxu0 0
        %4315 = vmatpush1.bf16.xpose.msra.mxu0 0
        %4316 = vmatprep.subr.bf16.mxu0 0
        %4317 = vmatpush1.bf16.xpose.msra.mxu0 0
        %4318 = vmatprep.subr.bf16.mxu0 0
        %4319 = vmatpush1.bf16.xpose.msra.mxu0 0
        %4320 = vmatprep.subr.bf16.mxu0 0
        %4321 = vmatpush1.bf16.xpose.msra.mxu0 0
        %4322 = vmatprep.subr.bf16.mxu0 0
        %4323 = vmatpush1.bf16.xpose.msra.mxu0 0
        %4324 = vmatprep.subr.bf16.mxu0 0
        %4325 = vmatpush1.bf16.xpose.msra.mxu0 0
        %4326 = vmatprep.subr.bf16.mxu0 0
        %4327 = vmatpush1.bf16.xpose.msra.mxu0 0
        %4328 = vmatprep.subr.bf16.mxu0 0
        %4329 = vmatpush1.bf16.xpose.msra.mxu0 0
        %4330 = vmatprep.subr.bf16.mxu0 0
        %4331 = vmatpush1.bf16.xpose.msra.mxu0 0
        %4332 = vmatprep.subr.bf16.mxu0 0
        %4333 = vmatpush1.bf16.xpose.msra.mxu0 0
        %4334 = vmatprep.subr.bf16.mxu0 0
        %4335 = vmatpush1.bf16.xpose.msra.mxu0 0
        %4336 = vmatprep.subr.bf16.mxu0 0
        %4337 = vmatpush1.bf16.xpose.msra.mxu0 0
        %4338 = vmatprep.subr.bf16.mxu0 0
        %4339 = vmatpush1.bf16.xpose.msra.mxu0 0
        %4340 = vmatprep.mubr.bf16.mxu0 %v1511
        %4341 = vmatmul.mubr.bf16.gmra.mrb[0].mxu0 %v1510
        %v4342 = vpop.f32.mrb[0].mxu0
        %v4343 = vadd.f32 %v4303, %v4342
        %v4344 = vpop.f32.mrb[0].mxu0
        %v4345 = vpop.f32.mrb[0].mxu0
        %v4346 = vpop.f32.mrb[0].mxu0
        %4347 = vdwg.mxu0
        %4348 = vmatprep.subr.bf16.mxu0 %v2339
        %4349 = vmatpush1.bf16.xpose.msra.mxu0 %v2338
        %4350 = vmatprep.subr.bf16.mxu0 0
        %4351 = vmatpush1.bf16.xpose.msra.mxu0 0
        %4352 = vmatprep.subr.bf16.mxu0 0
        %4353 = vmatpush1.bf16.xpose.msra.mxu0 0
        %4354 = vmatprep.subr.bf16.mxu0 0
        %4355 = vmatpush1.bf16.xpose.msra.mxu0 0
        %4356 = vmatprep.subr.bf16.mxu0 0
        %4357 = vmatpush1.bf16.xpose.msra.mxu0 0
        %4358 = vmatprep.subr.bf16.mxu0 0
        %4359 = vmatpush1.bf16.xpose.msra.mxu0 0
        %4360 = vmatprep.subr.bf16.mxu0 0
        %4361 = vmatpush1.bf16.xpose.msra.mxu0 0
        %4362 = vmatprep.subr.bf16.mxu0 0
        %4363 = vmatpush1.bf16.xpose.msra.mxu0 0
        %4364 = vmatprep.subr.bf16.mxu0 0
        %4365 = vmatpush1.bf16.xpose.msra.mxu0 0
        %4366 = vmatprep.subr.bf16.mxu0 0
        %4367 = vmatpush1.bf16.xpose.msra.mxu0 0
        %4368 = vmatprep.subr.bf16.mxu0 0
        %4369 = vmatpush1.bf16.xpose.msra.mxu0 0
        %4370 = vmatprep.subr.bf16.mxu0 0
        %4371 = vmatpush1.bf16.xpose.msra.mxu0 0
        %4372 = vmatprep.subr.bf16.mxu0 0
        %4373 = vmatpush1.bf16.xpose.msra.mxu0 0
        %4374 = vmatprep.subr.bf16.mxu0 0
        %4375 = vmatpush1.bf16.xpose.msra.mxu0 0
        %4376 = vmatprep.subr.bf16.mxu0 0
        %4377 = vmatpush1.bf16.xpose.msra.mxu0 0
        %4378 = vmatprep.subr.bf16.mxu0 0
        %4379 = vmatpush1.bf16.xpose.msra.mxu0 0
        %4380 = vmatprep.mubr.bf16.mxu0 %v1513
        %4381 = vmatmul.mubr.bf16.gmra.mrb[0].mxu0 %v1512
        %v4382 = vpop.f32.mrb[0].mxu0
        %v4383 = vadd.f32 %v4343, %v4382
        %v4384 = vpop.f32.mrb[0].mxu0
        %v4385 = vpop.f32.mrb[0].mxu0
        %v4386 = vpop.f32.mrb[0].mxu0
        %4387 = vdwg.mxu0
        %4388 = vmatprep.subr.bf16.mxu0 %v2341
        %4389 = vmatpush1.bf16.xpose.msra.mxu0 %v2340
        %4390 = vmatprep.subr.bf16.mxu0 0
        %4391 = vmatpush1.bf16.xpose.msra.mxu0 0
        %4392 = vmatprep.subr.bf16.mxu0 0
        %4393 = vmatpush1.bf16.xpose.msra.mxu0 0
        %4394 = vmatprep.subr.bf16.mxu0 0
        %4395 = vmatpush1.bf16.xpose.msra.mxu0 0
        %4396 = vmatprep.subr.bf16.mxu0 0
        %4397 = vmatpush1.bf16.xpose.msra.mxu0 0
        %4398 = vmatprep.subr.bf16.mxu0 0
        %4399 = vmatpush1.bf16.xpose.msra.mxu0 0
        %4400 = vmatprep.subr.bf16.mxu0 0
        %4401 = vmatpush1.bf16.xpose.msra.mxu0 0
        %4402 = vmatprep.subr.bf16.mxu0 0
        %4403 = vmatpush1.bf16.xpose.msra.mxu0 0
        %4404 = vmatprep.subr.bf16.mxu0 0
        %4405 = vmatpush1.bf16.xpose.msra.mxu0 0
        %4406 = vmatprep.subr.bf16.mxu0 0
        %4407 = vmatpush1.bf16.xpose.msra.mxu0 0
        %4408 = vmatprep.subr.bf16.mxu0 0
        %4409 = vmatpush1.bf16.xpose.msra.mxu0 0
        %4410 = vmatprep.subr.bf16.mxu0 0
        %4411 = vmatpush1.bf16.xpose.msra.mxu0 0
        %4412 = vmatprep.subr.bf16.mxu0 0
        %4413 = vmatpush1.bf16.xpose.msra.mxu0 0
        %4414 = vmatprep.subr.bf16.mxu0 0
        %4415 = vmatpush1.bf16.xpose.msra.mxu0 0
        %4416 = vmatprep.subr.bf16.mxu0 0
        %4417 = vmatpush1.bf16.xpose.msra.mxu0 0
        %4418 = vmatprep.subr.bf16.mxu0 0
        %4419 = vmatpush1.bf16.xpose.msra.mxu0 0
        %4420 = vmatprep.mubr.bf16.mxu0 %v1515
        %4421 = vmatmul.mubr.bf16.gmra.mrb[0].mxu0 %v1514
        %v4422 = vpop.f32.mrb[0].mxu0
        %v4423 = vadd.f32 %v4383, %v4422
        %v4424 = vpop.f32.mrb[0].mxu0
        %v4425 = vpop.f32.mrb[0].mxu0
        %v4426 = vpop.f32.mrb[0].mxu0
        %4427 = vdwg.mxu0
        %4428 = vmatprep.subr.bf16.mxu0 %v2343
        %4429 = vmatpush1.bf16.xpose.msra.mxu0 %v2342
        %4430 = vmatprep.subr.bf16.mxu0 0
        %4431 = vmatpush1.bf16.xpose.msra.mxu0 0
        %4432 = vmatprep.subr.bf16.mxu0 0
        %4433 = vmatpush1.bf16.xpose.msra.mxu0 0
        %4434 = vmatprep.subr.bf16.mxu0 0
        %4435 = vmatpush1.bf16.xpose.msra.mxu0 0
        %4436 = vmatprep.subr.bf16.mxu0 0
        %4437 = vmatpush1.bf16.xpose.msra.mxu0 0
        %4438 = vmatprep.subr.bf16.mxu0 0
        %4439 = vmatpush1.bf16.xpose.msra.mxu0 0
        %4440 = vmatprep.subr.bf16.mxu0 0
        %4441 = vmatpush1.bf16.xpose.msra.mxu0 0
        %4442 = vmatprep.subr.bf16.mxu0 0
        %4443 = vmatpush1.bf16.xpose.msra.mxu0 0
        %4444 = vmatprep.subr.bf16.mxu0 0
        %4445 = vmatpush1.bf16.xpose.msra.mxu0 0
        %4446 = vmatprep.subr.bf16.mxu0 0
        %4447 = vmatpush1.bf16.xpose.msra.mxu0 0
        %4448 = vmatprep.subr.bf16.mxu0 0
        %4449 = vmatpush1.bf16.xpose.msra.mxu0 0
        %4450 = vmatprep.subr.bf16.mxu0 0
        %4451 = vmatpush1.bf16.xpose.msra.mxu0 0
        %4452 = vmatprep.subr.bf16.mxu0 0
        %4453 = vmatpush1.bf16.xpose.msra.mxu0 0
        %4454 = vmatprep.subr.bf16.mxu0 0
        %4455 = vmatpush1.bf16.xpose.msra.mxu0 0
        %4456 = vmatprep.subr.bf16.mxu0 0
        %4457 = vmatpush1.bf16.xpose.msra.mxu0 0
        %4458 = vmatprep.subr.bf16.mxu0 0
        %4459 = vmatpush1.bf16.xpose.msra.mxu0 0
        %4460 = vmatprep.mubr.bf16.mxu0 %v1517
        %4461 = vmatmul.mubr.bf16.gmra.mrb[0].mxu0 %v1516
        %v4462 = vpop.f32.mrb[0].mxu0
        %v4463 = vadd.f32 %v4423, %v4462
        %v4464 = vpop.f32.mrb[0].mxu0
        %v4465 = vpop.f32.mrb[0].mxu0
        %v4466 = vpop.f32.mrb[0].mxu0
        %4467 = vdwg.mxu0
        %4468 = vmatprep.subr.bf16.mxu0 %v2345
        %4469 = vmatpush1.bf16.xpose.msra.mxu0 %v2344
        %4470 = vmatprep.subr.bf16.mxu0 0
        %4471 = vmatpush1.bf16.xpose.msra.mxu0 0
        %4472 = vmatprep.subr.bf16.mxu0 0
        %4473 = vmatpush1.bf16.xpose.msra.mxu0 0
        %4474 = vmatprep.subr.bf16.mxu0 0
        %4475 = vmatpush1.bf16.xpose.msra.mxu0 0
        %4476 = vmatprep.subr.bf16.mxu0 0
        %4477 = vmatpush1.bf16.xpose.msra.mxu0 0
        %4478 = vmatprep.subr.bf16.mxu0 0
        %4479 = vmatpush1.bf16.xpose.msra.mxu0 0
        %4480 = vmatprep.subr.bf16.mxu0 0
        %4481 = vmatpush1.bf16.xpose.msra.mxu0 0
        %4482 = vmatprep.subr.bf16.mxu0 0
        %4483 = vmatpush1.bf16.xpose.msra.mxu0 0
        %4484 = vmatprep.subr.bf16.mxu0 0
        %4485 = vmatpush1.bf16.xpose.msra.mxu0 0
        %4486 = vmatprep.subr.bf16.mxu0 0
        %4487 = vmatpush1.bf16.xpose.msra.mxu0 0
        %4488 = vmatprep.subr.bf16.mxu0 0
        %4489 = vmatpush1.bf16.xpose.msra.mxu0 0
        %4490 = vmatprep.subr.bf16.mxu0 0
        %4491 = vmatpush1.bf16.xpose.msra.mxu0 0
        %4492 = vmatprep.subr.bf16.mxu0 0
        %4493 = vmatpush1.bf16.xpose.msra.mxu0 0
        %4494 = vmatprep.subr.bf16.mxu0 0
        %4495 = vmatpush1.bf16.xpose.msra.mxu0 0
        %4496 = vmatprep.subr.bf16.mxu0 0
        %4497 = vmatpush1.bf16.xpose.msra.mxu0 0
        %4498 = vmatprep.subr.bf16.mxu0 0
        %4499 = vmatpush1.bf16.xpose.msra.mxu0 0
        %4500 = vmatprep.mubr.bf16.mxu0 %v1519
        %4501 = vmatmul.mubr.bf16.gmra.mrb[0].mxu0 %v1518
        %v4502 = vpop.f32.mrb[0].mxu0
        %v4503 = vadd.f32 %v4463, %v4502
        %v4504 = vpop.f32.mrb[0].mxu0
        %v4505 = vpop.f32.mrb[0].mxu0
        %v4506 = vpop.f32.mrb[0].mxu0
        %4507 = vdwg.mxu0
        %4508 = vmatprep.subr.bf16.mxu0 %v2347
        %4509 = vmatpush1.bf16.xpose.msra.mxu0 %v2346
        %4510 = vmatprep.subr.bf16.mxu0 0
        %4511 = vmatpush1.bf16.xpose.msra.mxu0 0
        %4512 = vmatprep.subr.bf16.mxu0 0
        %4513 = vmatpush1.bf16.xpose.msra.mxu0 0
        %4514 = vmatprep.subr.bf16.mxu0 0
        %4515 = vmatpush1.bf16.xpose.msra.mxu0 0
        %4516 = vmatprep.subr.bf16.mxu0 0
        %4517 = vmatpush1.bf16.xpose.msra.mxu0 0
        %4518 = vmatprep.subr.bf16.mxu0 0
        %4519 = vmatpush1.bf16.xpose.msra.mxu0 0
        %4520 = vmatprep.subr.bf16.mxu0 0
        %4521 = vmatpush1.bf16.xpose.msra.mxu0 0
        %4522 = vmatprep.subr.bf16.mxu0 0
        %4523 = vmatpush1.bf16.xpose.msra.mxu0 0
        %4524 = vmatprep.subr.bf16.mxu0 0
        %4525 = vmatpush1.bf16.xpose.msra.mxu0 0
        %4526 = vmatprep.subr.bf16.mxu0 0
        %4527 = vmatpush1.bf16.xpose.msra.mxu0 0
        %4528 = vmatprep.subr.bf16.mxu0 0
        %4529 = vmatpush1.bf16.xpose.msra.mxu0 0
        %4530 = vmatprep.subr.bf16.mxu0 0
        %4531 = vmatpush1.bf16.xpose.msra.mxu0 0
        %4532 = vmatprep.subr.bf16.mxu0 0
        %4533 = vmatpush1.bf16.xpose.msra.mxu0 0
        %4534 = vmatprep.subr.bf16.mxu0 0
        %4535 = vmatpush1.bf16.xpose.msra.mxu0 0
        %4536 = vmatprep.subr.bf16.mxu0 0
        %4537 = vmatpush1.bf16.xpose.msra.mxu0 0
        %4538 = vmatprep.subr.bf16.mxu0 0
        %4539 = vmatpush1.bf16.xpose.msra.mxu0 0
        %4540 = vmatprep.mubr.bf16.mxu0 %v1521
        %4541 = vmatmul.mubr.bf16.gmra.mrb[0].mxu0 %v1520
        %v4542 = vpop.f32.mrb[0].mxu0
        %v4543 = vadd.f32 %v4503, %v4542
        %v4544 = vpop.f32.mrb[0].mxu0
        %v4545 = vpop.f32.mrb[0].mxu0
        %v4546 = vpop.f32.mrb[0].mxu0
        %4547 = vdwg.mxu0
        %4548 = vmatprep.subr.bf16.mxu0 %v2349
        %4549 = vmatpush1.bf16.xpose.msra.mxu0 %v2348
        %4550 = vmatprep.subr.bf16.mxu0 0
        %4551 = vmatpush1.bf16.xpose.msra.mxu0 0
        %4552 = vmatprep.subr.bf16.mxu0 0
        %4553 = vmatpush1.bf16.xpose.msra.mxu0 0
        %4554 = vmatprep.subr.bf16.mxu0 0
        %4555 = vmatpush1.bf16.xpose.msra.mxu0 0
        %4556 = vmatprep.subr.bf16.mxu0 0
        %4557 = vmatpush1.bf16.xpose.msra.mxu0 0
        %4558 = vmatprep.subr.bf16.mxu0 0
        %4559 = vmatpush1.bf16.xpose.msra.mxu0 0
        %4560 = vmatprep.subr.bf16.mxu0 0
        %4561 = vmatpush1.bf16.xpose.msra.mxu0 0
        %4562 = vmatprep.subr.bf16.mxu0 0
        %4563 = vmatpush1.bf16.xpose.msra.mxu0 0
        %4564 = vmatprep.subr.bf16.mxu0 0
        %4565 = vmatpush1.bf16.xpose.msra.mxu0 0
        %4566 = vmatprep.subr.bf16.mxu0 0
        %4567 = vmatpush1.bf16.xpose.msra.mxu0 0
        %4568 = vmatprep.subr.bf16.mxu0 0
        %4569 = vmatpush1.bf16.xpose.msra.mxu0 0
        %4570 = vmatprep.subr.bf16.mxu0 0
        %4571 = vmatpush1.bf16.xpose.msra.mxu0 0
        %4572 = vmatprep.subr.bf16.mxu0 0
        %4573 = vmatpush1.bf16.xpose.msra.mxu0 0
        %4574 = vmatprep.subr.bf16.mxu0 0
        %4575 = vmatpush1.bf16.xpose.msra.mxu0 0
        %4576 = vmatprep.subr.bf16.mxu0 0
        %4577 = vmatpush1.bf16.xpose.msra.mxu0 0
        %4578 = vmatprep.subr.bf16.mxu0 0
        %4579 = vmatpush1.bf16.xpose.msra.mxu0 0
        %4580 = vmatprep.mubr.bf16.mxu0 %v1523
        %4581 = vmatmul.mubr.bf16.gmra.mrb[0].mxu0 %v1522
        %v4582 = vpop.f32.mrb[0].mxu0
        %v4583 = vadd.f32 %v4543, %v4582
        %v4584 = vpop.f32.mrb[0].mxu0
        %v4585 = vpop.f32.mrb[0].mxu0
        %v4586 = vpop.f32.mrb[0].mxu0
        %4587 = vdwg.mxu0
        %4588 = vmatprep.subr.bf16.mxu0 %v2351
        %4589 = vmatpush1.bf16.xpose.msra.mxu0 %v2350
        %4590 = vmatprep.subr.bf16.mxu0 0
        %4591 = vmatpush1.bf16.xpose.msra.mxu0 0
        %4592 = vmatprep.subr.bf16.mxu0 0
        %4593 = vmatpush1.bf16.xpose.msra.mxu0 0
        %4594 = vmatprep.subr.bf16.mxu0 0
        %4595 = vmatpush1.bf16.xpose.msra.mxu0 0
        %4596 = vmatprep.subr.bf16.mxu0 0
        %4597 = vmatpush1.bf16.xpose.msra.mxu0 0
        %4598 = vmatprep.subr.bf16.mxu0 0
        %4599 = vmatpush1.bf16.xpose.msra.mxu0 0
        %4600 = vmatprep.subr.bf16.mxu0 0
        %4601 = vmatpush1.bf16.xpose.msra.mxu0 0
        %4602 = vmatprep.subr.bf16.mxu0 0
        %4603 = vmatpush1.bf16.xpose.msra.mxu0 0
        %4604 = vmatprep.subr.bf16.mxu0 0
        %4605 = vmatpush1.bf16.xpose.msra.mxu0 0
        %4606 = vmatprep.subr.bf16.mxu0 0
        %4607 = vmatpush1.bf16.xpose.msra.mxu0 0
        %4608 = vmatprep.subr.bf16.mxu0 0
        %4609 = vmatpush1.bf16.xpose.msra.mxu0 0
        %4610 = vmatprep.subr.bf16.mxu0 0
        %4611 = vmatpush1.bf16.xpose.msra.mxu0 0
        %4612 = vmatprep.subr.bf16.mxu0 0
        %4613 = vmatpush1.bf16.xpose.msra.mxu0 0
        %4614 = vmatprep.subr.bf16.mxu0 0
        %4615 = vmatpush1.bf16.xpose.msra.mxu0 0
        %4616 = vmatprep.subr.bf16.mxu0 0
        %4617 = vmatpush1.bf16.xpose.msra.mxu0 0
        %4618 = vmatprep.subr.bf16.mxu0 0
        %4619 = vmatpush1.bf16.xpose.msra.mxu0 0
        %4620 = vmatprep.mubr.bf16.mxu0 %v1525
        %4621 = vmatmul.mubr.bf16.gmra.mrb[0].mxu0 %v1524
        %v4622 = vpop.f32.mrb[0].mxu0
        %v4623 = vadd.f32 %v4583, %v4622
        %v4624 = vpop.f32.mrb[0].mxu0
        %v4625 = vpop.f32.mrb[0].mxu0
        %v4626 = vpop.f32.mrb[0].mxu0
        %4627 = vdwg.mxu0
        %4628 = vmatprep.subr.bf16.mxu0 %v2353
        %4629 = vmatpush1.bf16.xpose.msra.mxu0 %v2352
        %4630 = vmatprep.subr.bf16.mxu0 0
        %4631 = vmatpush1.bf16.xpose.msra.mxu0 0
        %4632 = vmatprep.subr.bf16.mxu0 0
        %4633 = vmatpush1.bf16.xpose.msra.mxu0 0
        %4634 = vmatprep.subr.bf16.mxu0 0
        %4635 = vmatpush1.bf16.xpose.msra.mxu0 0
        %4636 = vmatprep.subr.bf16.mxu0 0
        %4637 = vmatpush1.bf16.xpose.msra.mxu0 0
        %4638 = vmatprep.subr.bf16.mxu0 0
        %4639 = vmatpush1.bf16.xpose.msra.mxu0 0
        %4640 = vmatprep.subr.bf16.mxu0 0
        %4641 = vmatpush1.bf16.xpose.msra.mxu0 0
        %4642 = vmatprep.subr.bf16.mxu0 0
        %4643 = vmatpush1.bf16.xpose.msra.mxu0 0
        %4644 = vmatprep.subr.bf16.mxu0 0
        %4645 = vmatpush1.bf16.xpose.msra.mxu0 0
        %4646 = vmatprep.subr.bf16.mxu0 0
        %4647 = vmatpush1.bf16.xpose.msra.mxu0 0
        %4648 = vmatprep.subr.bf16.mxu0 0
        %4649 = vmatpush1.bf16.xpose.msra.mxu0 0
        %4650 = vmatprep.subr.bf16.mxu0 0
        %4651 = vmatpush1.bf16.xpose.msra.mxu0 0
        %4652 = vmatprep.subr.bf16.mxu0 0
        %4653 = vmatpush1.bf16.xpose.msra.mxu0 0
        %4654 = vmatprep.subr.bf16.mxu0 0
        %4655 = vmatpush1.bf16.xpose.msra.mxu0 0
        %4656 = vmatprep.subr.bf16.mxu0 0
        %4657 = vmatpush1.bf16.xpose.msra.mxu0 0
        %4658 = vmatprep.subr.bf16.mxu0 0
        %4659 = vmatpush1.bf16.xpose.msra.mxu0 0
        %4660 = vmatprep.mubr.bf16.mxu0 %v1527
        %4661 = vmatmul.mubr.bf16.gmra.mrb[0].mxu0 %v1526
        %v4662 = vpop.f32.mrb[0].mxu0
        %v4663 = vadd.f32 %v4623, %v4662
        %v4664 = vpop.f32.mrb[0].mxu0
        %v4665 = vpop.f32.mrb[0].mxu0
        %v4666 = vpop.f32.mrb[0].mxu0
        %4667 = vdwg.mxu0
        %4668 = vmatprep.subr.bf16.mxu0 %v2355
        %4669 = vmatpush1.bf16.xpose.msra.mxu0 %v2354
        %4670 = vmatprep.subr.bf16.mxu0 0
        %4671 = vmatpush1.bf16.xpose.msra.mxu0 0
        %4672 = vmatprep.subr.bf16.mxu0 0
        %4673 = vmatpush1.bf16.xpose.msra.mxu0 0
        %4674 = vmatprep.subr.bf16.mxu0 0
        %4675 = vmatpush1.bf16.xpose.msra.mxu0 0
        %4676 = vmatprep.subr.bf16.mxu0 0
        %4677 = vmatpush1.bf16.xpose.msra.mxu0 0
        %4678 = vmatprep.subr.bf16.mxu0 0
        %4679 = vmatpush1.bf16.xpose.msra.mxu0 0
        %4680 = vmatprep.subr.bf16.mxu0 0
        %4681 = vmatpush1.bf16.xpose.msra.mxu0 0
        %4682 = vmatprep.subr.bf16.mxu0 0
        %4683 = vmatpush1.bf16.xpose.msra.mxu0 0
        %4684 = vmatprep.subr.bf16.mxu0 0
        %4685 = vmatpush1.bf16.xpose.msra.mxu0 0
        %4686 = vmatprep.subr.bf16.mxu0 0
        %4687 = vmatpush1.bf16.xpose.msra.mxu0 0
        %4688 = vmatprep.subr.bf16.mxu0 0
        %4689 = vmatpush1.bf16.xpose.msra.mxu0 0
        %4690 = vmatprep.subr.bf16.mxu0 0
        %4691 = vmatpush1.bf16.xpose.msra.mxu0 0
        %4692 = vmatprep.subr.bf16.mxu0 0
        %4693 = vmatpush1.bf16.xpose.msra.mxu0 0
        %4694 = vmatprep.subr.bf16.mxu0 0
        %4695 = vmatpush1.bf16.xpose.msra.mxu0 0
        %4696 = vmatprep.subr.bf16.mxu0 0
        %4697 = vmatpush1.bf16.xpose.msra.mxu0 0
        %4698 = vmatprep.subr.bf16.mxu0 0
        %4699 = vmatpush1.bf16.xpose.msra.mxu0 0
        %4700 = vmatprep.mubr.bf16.mxu0 %v1529
        %4701 = vmatmul.mubr.bf16.gmra.mrb[0].mxu0 %v1528
        %v4702 = vpop.f32.mrb[0].mxu0
        %v4703 = vadd.f32 %v4663, %v4702
        %v4704 = vpop.f32.mrb[0].mxu0
        %v4705 = vpop.f32.mrb[0].mxu0
        %v4706 = vpop.f32.mrb[0].mxu0
        %4707 = vdwg.mxu0
        %4708 = vmatprep.subr.bf16.mxu0 %v2357
        %4709 = vmatpush1.bf16.xpose.msra.mxu0 %v2356
        %4710 = vmatprep.subr.bf16.mxu0 0
        %4711 = vmatpush1.bf16.xpose.msra.mxu0 0
        %4712 = vmatprep.subr.bf16.mxu0 0
        %4713 = vmatpush1.bf16.xpose.msra.mxu0 0
        %4714 = vmatprep.subr.bf16.mxu0 0
        %4715 = vmatpush1.bf16.xpose.msra.mxu0 0
        %4716 = vmatprep.subr.bf16.mxu0 0
        %4717 = vmatpush1.bf16.xpose.msra.mxu0 0
        %4718 = vmatprep.subr.bf16.mxu0 0
        %4719 = vmatpush1.bf16.xpose.msra.mxu0 0
        %4720 = vmatprep.subr.bf16.mxu0 0
        %4721 = vmatpush1.bf16.xpose.msra.mxu0 0
        %4722 = vmatprep.subr.bf16.mxu0 0
        %4723 = vmatpush1.bf16.xpose.msra.mxu0 0
        %4724 = vmatprep.subr.bf16.mxu0 0
        %4725 = vmatpush1.bf16.xpose.msra.mxu0 0
        %4726 = vmatprep.subr.bf16.mxu0 0
        %4727 = vmatpush1.bf16.xpose.msra.mxu0 0
        %4728 = vmatprep.subr.bf16.mxu0 0
        %4729 = vmatpush1.bf16.xpose.msra.mxu0 0
        %4730 = vmatprep.subr.bf16.mxu0 0
        %4731 = vmatpush1.bf16.xpose.msra.mxu0 0
        %4732 = vmatprep.subr.bf16.mxu0 0
        %4733 = vmatpush1.bf16.xpose.msra.mxu0 0
        %4734 = vmatprep.subr.bf16.mxu0 0
        %4735 = vmatpush1.bf16.xpose.msra.mxu0 0
        %4736 = vmatprep.subr.bf16.mxu0 0
        %4737 = vmatpush1.bf16.xpose.msra.mxu0 0
        %4738 = vmatprep.subr.bf16.mxu0 0
        %4739 = vmatpush1.bf16.xpose.msra.mxu0 0
        %4740 = vmatprep.mubr.bf16.mxu0 %v1531
        %4741 = vmatmul.mubr.bf16.gmra.mrb[0].mxu0 %v1530
        %v4742 = vpop.f32.mrb[0].mxu0
        %v4743 = vadd.f32 %v4703, %v4742
        %v4744 = vpop.f32.mrb[0].mxu0
        %v4745 = vpop.f32.mrb[0].mxu0
        %v4746 = vpop.f32.mrb[0].mxu0
        %4747 = vdwg.mxu0
        %4748 = vmatprep.subr.bf16.mxu0 %v2359
        %4749 = vmatpush1.bf16.xpose.msra.mxu0 %v2358
        %4750 = vmatprep.subr.bf16.mxu0 0
        %4751 = vmatpush1.bf16.xpose.msra.mxu0 0
        %4752 = vmatprep.subr.bf16.mxu0 0
        %4753 = vmatpush1.bf16.xpose.msra.mxu0 0
        %4754 = vmatprep.subr.bf16.mxu0 0
        %4755 = vmatpush1.bf16.xpose.msra.mxu0 0
        %4756 = vmatprep.subr.bf16.mxu0 0
        %4757 = vmatpush1.bf16.xpose.msra.mxu0 0
        %4758 = vmatprep.subr.bf16.mxu0 0
        %4759 = vmatpush1.bf16.xpose.msra.mxu0 0
        %4760 = vmatprep.subr.bf16.mxu0 0
        %4761 = vmatpush1.bf16.xpose.msra.mxu0 0
        %4762 = vmatprep.subr.bf16.mxu0 0
        %4763 = vmatpush1.bf16.xpose.msra.mxu0 0
        %4764 = vmatprep.subr.bf16.mxu0 0
        %4765 = vmatpush1.bf16.xpose.msra.mxu0 0
        %4766 = vmatprep.subr.bf16.mxu0 0
        %4767 = vmatpush1.bf16.xpose.msra.mxu0 0
        %4768 = vmatprep.subr.bf16.mxu0 0
        %4769 = vmatpush1.bf16.xpose.msra.mxu0 0
        %4770 = vmatprep.subr.bf16.mxu0 0
        %4771 = vmatpush1.bf16.xpose.msra.mxu0 0
        %4772 = vmatprep.subr.bf16.mxu0 0
        %4773 = vmatpush1.bf16.xpose.msra.mxu0 0
        %4774 = vmatprep.subr.bf16.mxu0 0
        %4775 = vmatpush1.bf16.xpose.msra.mxu0 0
        %4776 = vmatprep.subr.bf16.mxu0 0
        %4777 = vmatpush1.bf16.xpose.msra.mxu0 0
        %4778 = vmatprep.subr.bf16.mxu0 0
        %4779 = vmatpush1.bf16.xpose.msra.mxu0 0
        %4780 = vmatprep.mubr.bf16.mxu0 %v1533
        %4781 = vmatmul.mubr.bf16.gmra.mrb[0].mxu0 %v1532
        %v4782 = vpop.f32.mrb[0].mxu0
        %v4783 = vadd.f32 %v4743, %v4782
        %v4784 = vpop.f32.mrb[0].mxu0
        %v4785 = vpop.f32.mrb[0].mxu0
        %v4786 = vpop.f32.mrb[0].mxu0
        %4787 = vdwg.mxu0
        %4788 = vmatprep.subr.bf16.mxu0 %v2361
        %4789 = vmatpush1.bf16.xpose.msra.mxu0 %v2360
        %4790 = vmatprep.subr.bf16.mxu0 0
        %4791 = vmatpush1.bf16.xpose.msra.mxu0 0
        %4792 = vmatprep.subr.bf16.mxu0 0
        %4793 = vmatpush1.bf16.xpose.msra.mxu0 0
        %4794 = vmatprep.subr.bf16.mxu0 0
        %4795 = vmatpush1.bf16.xpose.msra.mxu0 0
        %4796 = vmatprep.subr.bf16.mxu0 0
        %4797 = vmatpush1.bf16.xpose.msra.mxu0 0
        %4798 = vmatprep.subr.bf16.mxu0 0
        %4799 = vmatpush1.bf16.xpose.msra.mxu0 0
        %4800 = vmatprep.subr.bf16.mxu0 0
        %4801 = vmatpush1.bf16.xpose.msra.mxu0 0
        %4802 = vmatprep.subr.bf16.mxu0 0
        %4803 = vmatpush1.bf16.xpose.msra.mxu0 0
        %4804 = vmatprep.subr.bf16.mxu0 0
        %4805 = vmatpush1.bf16.xpose.msra.mxu0 0
        %4806 = vmatprep.subr.bf16.mxu0 0
        %4807 = vmatpush1.bf16.xpose.msra.mxu0 0
        %4808 = vmatprep.subr.bf16.mxu0 0
        %4809 = vmatpush1.bf16.xpose.msra.mxu0 0
        %4810 = vmatprep.subr.bf16.mxu0 0
        %4811 = vmatpush1.bf16.xpose.msra.mxu0 0
        %4812 = vmatprep.subr.bf16.mxu0 0
        %4813 = vmatpush1.bf16.xpose.msra.mxu0 0
        %4814 = vmatprep.subr.bf16.mxu0 0
        %4815 = vmatpush1.bf16.xpose.msra.mxu0 0
        %4816 = vmatprep.subr.bf16.mxu0 0
        %4817 = vmatpush1.bf16.xpose.msra.mxu0 0
        %4818 = vmatprep.subr.bf16.mxu0 0
        %4819 = vmatpush1.bf16.xpose.msra.mxu0 0
        %4820 = vmatprep.mubr.bf16.mxu0 %v1535
        %4821 = vmatmul.mubr.bf16.gmra.mrb[0].mxu0 %v1534
        %v4822 = vpop.f32.mrb[0].mxu0
        %v4823 = vadd.f32 %v4783, %v4822
        %v4824 = vpop.f32.mrb[0].mxu0
        %v4825 = vpop.f32.mrb[0].mxu0
        %v4826 = vpop.f32.mrb[0].mxu0
        %4827 = vdwg.mxu0
        %4828 = vmatprep.subr.bf16.mxu0 %v2363
        %4829 = vmatpush1.bf16.xpose.msra.mxu0 %v2362
        %4830 = vmatprep.subr.bf16.mxu0 0
        %4831 = vmatpush1.bf16.xpose.msra.mxu0 0
        %4832 = vmatprep.subr.bf16.mxu0 0
        %4833 = vmatpush1.bf16.xpose.msra.mxu0 0
        %4834 = vmatprep.subr.bf16.mxu0 0
        %4835 = vmatpush1.bf16.xpose.msra.mxu0 0
        %4836 = vmatprep.subr.bf16.mxu0 0
        %4837 = vmatpush1.bf16.xpose.msra.mxu0 0
        %4838 = vmatprep.subr.bf16.mxu0 0
        %4839 = vmatpush1.bf16.xpose.msra.mxu0 0
        %4840 = vmatprep.subr.bf16.mxu0 0
        %4841 = vmatpush1.bf16.xpose.msra.mxu0 0
        %4842 = vmatprep.subr.bf16.mxu0 0
        %4843 = vmatpush1.bf16.xpose.msra.mxu0 0
        %4844 = vmatprep.subr.bf16.mxu0 0
        %4845 = vmatpush1.bf16.xpose.msra.mxu0 0
        %4846 = vmatprep.subr.bf16.mxu0 0
        %4847 = vmatpush1.bf16.xpose.msra.mxu0 0
        %4848 = vmatprep.subr.bf16.mxu0 0
        %4849 = vmatpush1.bf16.xpose.msra.mxu0 0
        %4850 = vmatprep.subr.bf16.mxu0 0
        %4851 = vmatpush1.bf16.xpose.msra.mxu0 0
        %4852 = vmatprep.subr.bf16.mxu0 0
        %4853 = vmatpush1.bf16.xpose.msra.mxu0 0
        %4854 = vmatprep.subr.bf16.mxu0 0
        %4855 = vmatpush1.bf16.xpose.msra.mxu0 0
        %4856 = vmatprep.subr.bf16.mxu0 0
        %4857 = vmatpush1.bf16.xpose.msra.mxu0 0
        %4858 = vmatprep.subr.bf16.mxu0 0
        %4859 = vmatpush1.bf16.xpose.msra.mxu0 0
        %4860 = vmatprep.mubr.bf16.mxu0 %v1537
        %4861 = vmatmul.mubr.bf16.gmra.mrb[0].mxu0 %v1536
        %v4862 = vpop.f32.mrb[0].mxu0
        %v4863 = vadd.f32 %v4823, %v4862
        %v4864 = vpop.f32.mrb[0].mxu0
        %v4865 = vpop.f32.mrb[0].mxu0
        %v4866 = vpop.f32.mrb[0].mxu0
        %4867 = vdwg.mxu0
        %4868 = vmatprep.subr.bf16.mxu0 %v2365
        %4869 = vmatpush1.bf16.xpose.msra.mxu0 %v2364
        %4870 = vmatprep.subr.bf16.mxu0 0
        %4871 = vmatpush1.bf16.xpose.msra.mxu0 0
        %4872 = vmatprep.subr.bf16.mxu0 0
        %4873 = vmatpush1.bf16.xpose.msra.mxu0 0
        %4874 = vmatprep.subr.bf16.mxu0 0
        %4875 = vmatpush1.bf16.xpose.msra.mxu0 0
        %4876 = vmatprep.subr.bf16.mxu0 0
        %4877 = vmatpush1.bf16.xpose.msra.mxu0 0
        %4878 = vmatprep.subr.bf16.mxu0 0
        %4879 = vmatpush1.bf16.xpose.msra.mxu0 0
        %4880 = vmatprep.subr.bf16.mxu0 0
        %4881 = vmatpush1.bf16.xpose.msra.mxu0 0
        %4882 = vmatprep.subr.bf16.mxu0 0
        %4883 = vmatpush1.bf16.xpose.msra.mxu0 0
        %4884 = vmatprep.subr.bf16.mxu0 0
        %4885 = vmatpush1.bf16.xpose.msra.mxu0 0
        %4886 = vmatprep.subr.bf16.mxu0 0
        %4887 = vmatpush1.bf16.xpose.msra.mxu0 0
        %4888 = vmatprep.subr.bf16.mxu0 0
        %4889 = vmatpush1.bf16.xpose.msra.mxu0 0
        %4890 = vmatprep.subr.bf16.mxu0 0
        %4891 = vmatpush1.bf16.xpose.msra.mxu0 0
        %4892 = vmatprep.subr.bf16.mxu0 0
        %4893 = vmatpush1.bf16.xpose.msra.mxu0 0
        %4894 = vmatprep.subr.bf16.mxu0 0
        %4895 = vmatpush1.bf16.xpose.msra.mxu0 0
        %4896 = vmatprep.subr.bf16.mxu0 0
        %4897 = vmatpush1.bf16.xpose.msra.mxu0 0
        %4898 = vmatprep.subr.bf16.mxu0 0
        %4899 = vmatpush1.bf16.xpose.msra.mxu0 0
        %4900 = vmatprep.mubr.bf16.mxu0 %v1539
        %4901 = vmatmul.mubr.bf16.gmra.mrb[0].mxu0 %v1538
        %v4902 = vpop.f32.mrb[0].mxu0
        %v4903 = vadd.f32 %v4863, %v4902
        %v4904 = vpop.f32.mrb[0].mxu0
        %v4905 = vpop.f32.mrb[0].mxu0
        %v4906 = vpop.f32.mrb[0].mxu0
        %4907 = vdwg.mxu0
        %4908 = vmatprep.subr.bf16.mxu0 %v2367
        %4909 = vmatpush1.bf16.xpose.msra.mxu0 %v2366
        %4910 = vmatprep.subr.bf16.mxu0 0
        %4911 = vmatpush1.bf16.xpose.msra.mxu0 0
        %4912 = vmatprep.subr.bf16.mxu0 0
        %4913 = vmatpush1.bf16.xpose.msra.mxu0 0
        %4914 = vmatprep.subr.bf16.mxu0 0
        %4915 = vmatpush1.bf16.xpose.msra.mxu0 0
        %4916 = vmatprep.subr.bf16.mxu0 0
        %4917 = vmatpush1.bf16.xpose.msra.mxu0 0
        %4918 = vmatprep.subr.bf16.mxu0 0
        %4919 = vmatpush1.bf16.xpose.msra.mxu0 0
        %4920 = vmatprep.subr.bf16.mxu0 0
        %4921 = vmatpush1.bf16.xpose.msra.mxu0 0
        %4922 = vmatprep.subr.bf16.mxu0 0
        %4923 = vmatpush1.bf16.xpose.msra.mxu0 0
        %4924 = vmatprep.subr.bf16.mxu0 0
        %4925 = vmatpush1.bf16.xpose.msra.mxu0 0
        %4926 = vmatprep.subr.bf16.mxu0 0
        %4927 = vmatpush1.bf16.xpose.msra.mxu0 0
        %4928 = vmatprep.subr.bf16.mxu0 0
        %4929 = vmatpush1.bf16.xpose.msra.mxu0 0
        %4930 = vmatprep.subr.bf16.mxu0 0
        %4931 = vmatpush1.bf16.xpose.msra.mxu0 0
        %4932 = vmatprep.subr.bf16.mxu0 0
        %4933 = vmatpush1.bf16.xpose.msra.mxu0 0
        %4934 = vmatprep.subr.bf16.mxu0 0
        %4935 = vmatpush1.bf16.xpose.msra.mxu0 0
        %4936 = vmatprep.subr.bf16.mxu0 0
        %4937 = vmatpush1.bf16.xpose.msra.mxu0 0
        %4938 = vmatprep.subr.bf16.mxu0 0
        %4939 = vmatpush1.bf16.xpose.msra.mxu0 0
        %4940 = vmatprep.mubr.bf16.mxu0 %v1541
        %4941 = vmatmul.mubr.bf16.gmra.mrb[0].mxu0 %v1540
        %v4942 = vpop.f32.mrb[0].mxu0
        %v4943 = vadd.f32 %v4903, %v4942
        %v4944 = vpop.f32.mrb[0].mxu0
        %v4945 = vpop.f32.mrb[0].mxu0
        %v4946 = vpop.f32.mrb[0].mxu0
        %4947 = vdwg.mxu0
        %4948 = vmatprep.subr.bf16.mxu0 %v2369
        %4949 = vmatpush1.bf16.xpose.msra.mxu0 %v2368
        %4950 = vmatprep.subr.bf16.mxu0 0
        %4951 = vmatpush1.bf16.xpose.msra.mxu0 0
        %4952 = vmatprep.subr.bf16.mxu0 0
        %4953 = vmatpush1.bf16.xpose.msra.mxu0 0
        %4954 = vmatprep.subr.bf16.mxu0 0
        %4955 = vmatpush1.bf16.xpose.msra.mxu0 0
        %4956 = vmatprep.subr.bf16.mxu0 0
        %4957 = vmatpush1.bf16.xpose.msra.mxu0 0
        %4958 = vmatprep.subr.bf16.mxu0 0
        %4959 = vmatpush1.bf16.xpose.msra.mxu0 0
        %4960 = vmatprep.subr.bf16.mxu0 0
        %4961 = vmatpush1.bf16.xpose.msra.mxu0 0
        %4962 = vmatprep.subr.bf16.mxu0 0
        %4963 = vmatpush1.bf16.xpose.msra.mxu0 0
        %4964 = vmatprep.subr.bf16.mxu0 0
        %4965 = vmatpush1.bf16.xpose.msra.mxu0 0
        %4966 = vmatprep.subr.bf16.mxu0 0
        %4967 = vmatpush1.bf16.xpose.msra.mxu0 0
        %4968 = vmatprep.subr.bf16.mxu0 0
        %4969 = vmatpush1.bf16.xpose.msra.mxu0 0
        %4970 = vmatprep.subr.bf16.mxu0 0
        %4971 = vmatpush1.bf16.xpose.msra.mxu0 0
        %4972 = vmatprep.subr.bf16.mxu0 0
        %4973 = vmatpush1.bf16.xpose.msra.mxu0 0
        %4974 = vmatprep.subr.bf16.mxu0 0
        %4975 = vmatpush1.bf16.xpose.msra.mxu0 0
        %4976 = vmatprep.subr.bf16.mxu0 0
        %4977 = vmatpush1.bf16.xpose.msra.mxu0 0
        %4978 = vmatprep.subr.bf16.mxu0 0
        %4979 = vmatpush1.bf16.xpose.msra.mxu0 0
        %4980 = vmatprep.mubr.bf16.mxu0 %v1543
        %4981 = vmatmul.mubr.bf16.gmra.mrb[0].mxu0 %v1542
        %v4982 = vpop.f32.mrb[0].mxu0
        %v4983 = vadd.f32 %v4943, %v4982
        %v4984 = vpop.f32.mrb[0].mxu0
        %v4985 = vpop.f32.mrb[0].mxu0
        %v4986 = vpop.f32.mrb[0].mxu0
        %4987 = vdwg.mxu0
        %4988 = vmatprep.subr.bf16.mxu0 %v2371
        %4989 = vmatpush1.bf16.xpose.msra.mxu0 %v2370
        %4990 = vmatprep.subr.bf16.mxu0 0
        %4991 = vmatpush1.bf16.xpose.msra.mxu0 0
        %4992 = vmatprep.subr.bf16.mxu0 0
        %4993 = vmatpush1.bf16.xpose.msra.mxu0 0
        %4994 = vmatprep.subr.bf16.mxu0 0
        %4995 = vmatpush1.bf16.xpose.msra.mxu0 0
        %4996 = vmatprep.subr.bf16.mxu0 0
        %4997 = vmatpush1.bf16.xpose.msra.mxu0 0
        %4998 = vmatprep.subr.bf16.mxu0 0
        %4999 = vmatpush1.bf16.xpose.msra.mxu0 0
        %5000 = vmatprep.subr.bf16.mxu0 0
        %5001 = vmatpush1.bf16.xpose.msra.mxu0 0
        %5002 = vmatprep.subr.bf16.mxu0 0
        %5003 = vmatpush1.bf16.xpose.msra.mxu0 0
        %5004 = vmatprep.subr.bf16.mxu0 0
        %5005 = vmatpush1.bf16.xpose.msra.mxu0 0
        %5006 = vmatprep.subr.bf16.mxu0 0
        %5007 = vmatpush1.bf16.xpose.msra.mxu0 0
        %5008 = vmatprep.subr.bf16.mxu0 0
        %5009 = vmatpush1.bf16.xpose.msra.mxu0 0
        %5010 = vmatprep.subr.bf16.mxu0 0
        %5011 = vmatpush1.bf16.xpose.msra.mxu0 0
        %5012 = vmatprep.subr.bf16.mxu0 0
        %5013 = vmatpush1.bf16.xpose.msra.mxu0 0
        %5014 = vmatprep.subr.bf16.mxu0 0
        %5015 = vmatpush1.bf16.xpose.msra.mxu0 0
        %5016 = vmatprep.subr.bf16.mxu0 0
        %5017 = vmatpush1.bf16.xpose.msra.mxu0 0
        %5018 = vmatprep.subr.bf16.mxu0 0
        %5019 = vmatpush1.bf16.xpose.msra.mxu0 0
        %5020 = vmatprep.mubr.bf16.mxu0 %v1545
        %5021 = vmatmul.mubr.bf16.gmra.mrb[0].mxu0 %v1544
        %v5022 = vpop.f32.mrb[0].mxu0
        %v5023 = vadd.f32 %v4983, %v5022
        %v5024 = vpop.f32.mrb[0].mxu0
        %v5025 = vpop.f32.mrb[0].mxu0
        %v5026 = vpop.f32.mrb[0].mxu0
        %5027 = vdwg.mxu0
        %5028 = vmatprep.subr.bf16.mxu0 %v2373
        %5029 = vmatpush1.bf16.xpose.msra.mxu0 %v2372
        %5030 = vmatprep.subr.bf16.mxu0 0
        %5031 = vmatpush1.bf16.xpose.msra.mxu0 0
        %5032 = vmatprep.subr.bf16.mxu0 0
        %5033 = vmatpush1.bf16.xpose.msra.mxu0 0
        %5034 = vmatprep.subr.bf16.mxu0 0
        %5035 = vmatpush1.bf16.xpose.msra.mxu0 0
        %5036 = vmatprep.subr.bf16.mxu0 0
        %5037 = vmatpush1.bf16.xpose.msra.mxu0 0
        %5038 = vmatprep.subr.bf16.mxu0 0
        %5039 = vmatpush1.bf16.xpose.msra.mxu0 0
        %5040 = vmatprep.subr.bf16.mxu0 0
        %5041 = vmatpush1.bf16.xpose.msra.mxu0 0
        %5042 = vmatprep.subr.bf16.mxu0 0
        %5043 = vmatpush1.bf16.xpose.msra.mxu0 0
        %5044 = vmatprep.subr.bf16.mxu0 0
        %5045 = vmatpush1.bf16.xpose.msra.mxu0 0
        %5046 = vmatprep.subr.bf16.mxu0 0
        %5047 = vmatpush1.bf16.xpose.msra.mxu0 0
        %5048 = vmatprep.subr.bf16.mxu0 0
        %5049 = vmatpush1.bf16.xpose.msra.mxu0 0
        %5050 = vmatprep.subr.bf16.mxu0 0
        %5051 = vmatpush1.bf16.xpose.msra.mxu0 0
        %5052 = vmatprep.subr.bf16.mxu0 0
        %5053 = vmatpush1.bf16.xpose.msra.mxu0 0
        %5054 = vmatprep.subr.bf16.mxu0 0
        %5055 = vmatpush1.bf16.xpose.msra.mxu0 0
        %5056 = vmatprep.subr.bf16.mxu0 0
        %5057 = vmatpush1.bf16.xpose.msra.mxu0 0
        %5058 = vmatprep.subr.bf16.mxu0 0
        %5059 = vmatpush1.bf16.xpose.msra.mxu0 0
        %5060 = vmatprep.mubr.bf16.mxu0 %v1547
        %5061 = vmatmul.mubr.bf16.gmra.mrb[0].mxu0 %v1546
        %v5062 = vpop.f32.mrb[0].mxu0
        %v5063 = vadd.f32 %v5023, %v5062
        %v5064 = vpop.f32.mrb[0].mxu0
        %v5065 = vpop.f32.mrb[0].mxu0
        %v5066 = vpop.f32.mrb[0].mxu0
        %5067 = vdwg.mxu0
        %5068 = vmatprep.subr.bf16.mxu0 %v2375
        %5069 = vmatpush1.bf16.xpose.msra.mxu0 %v2374
        %5070 = vmatprep.subr.bf16.mxu0 0
        %5071 = vmatpush1.bf16.xpose.msra.mxu0 0
        %5072 = vmatprep.subr.bf16.mxu0 0
        %5073 = vmatpush1.bf16.xpose.msra.mxu0 0
        %5074 = vmatprep.subr.bf16.mxu0 0
        %5075 = vmatpush1.bf16.xpose.msra.mxu0 0
        %5076 = vmatprep.subr.bf16.mxu0 0
        %5077 = vmatpush1.bf16.xpose.msra.mxu0 0
        %5078 = vmatprep.subr.bf16.mxu0 0
        %5079 = vmatpush1.bf16.xpose.msra.mxu0 0
        %5080 = vmatprep.subr.bf16.mxu0 0
        %5081 = vmatpush1.bf16.xpose.msra.mxu0 0
        %5082 = vmatprep.subr.bf16.mxu0 0
        %5083 = vmatpush1.bf16.xpose.msra.mxu0 0
        %5084 = vmatprep.subr.bf16.mxu0 0
        %5085 = vmatpush1.bf16.xpose.msra.mxu0 0
        %5086 = vmatprep.subr.bf16.mxu0 0
        %5087 = vmatpush1.bf16.xpose.msra.mxu0 0
        %5088 = vmatprep.subr.bf16.mxu0 0
        %5089 = vmatpush1.bf16.xpose.msra.mxu0 0
        %5090 = vmatprep.subr.bf16.mxu0 0
        %5091 = vmatpush1.bf16.xpose.msra.mxu0 0
        %5092 = vmatprep.subr.bf16.mxu0 0
        %5093 = vmatpush1.bf16.xpose.msra.mxu0 0
        %5094 = vmatprep.subr.bf16.mxu0 0
        %5095 = vmatpush1.bf16.xpose.msra.mxu0 0
        %5096 = vmatprep.subr.bf16.mxu0 0
        %5097 = vmatpush1.bf16.xpose.msra.mxu0 0
        %5098 = vmatprep.subr.bf16.mxu0 0
        %5099 = vmatpush1.bf16.xpose.msra.mxu0 0
        %5100 = vmatprep.mubr.bf16.mxu0 %v1549
        %5101 = vmatmul.mubr.bf16.gmra.mrb[0].mxu0 %v1548
        %v5102 = vpop.f32.mrb[0].mxu0
        %v5103 = vadd.f32 %v5063, %v5102
        %v5104 = vpop.f32.mrb[0].mxu0
        %v5105 = vpop.f32.mrb[0].mxu0
        %v5106 = vpop.f32.mrb[0].mxu0
        %5107 = vdwg.mxu0
        %5108 = vmatprep.subr.bf16.mxu0 %v2377
        %5109 = vmatpush1.bf16.xpose.msra.mxu0 %v2376
        %5110 = vmatprep.subr.bf16.mxu0 0
        %5111 = vmatpush1.bf16.xpose.msra.mxu0 0
        %5112 = vmatprep.subr.bf16.mxu0 0
        %5113 = vmatpush1.bf16.xpose.msra.mxu0 0
        %5114 = vmatprep.subr.bf16.mxu0 0
        %5115 = vmatpush1.bf16.xpose.msra.mxu0 0
        %5116 = vmatprep.subr.bf16.mxu0 0
        %5117 = vmatpush1.bf16.xpose.msra.mxu0 0
        %5118 = vmatprep.subr.bf16.mxu0 0
        %5119 = vmatpush1.bf16.xpose.msra.mxu0 0
        %5120 = vmatprep.subr.bf16.mxu0 0
        %5121 = vmatpush1.bf16.xpose.msra.mxu0 0
        %5122 = vmatprep.subr.bf16.mxu0 0
        %5123 = vmatpush1.bf16.xpose.msra.mxu0 0
        %5124 = vmatprep.subr.bf16.mxu0 0
        %5125 = vmatpush1.bf16.xpose.msra.mxu0 0
        %5126 = vmatprep.subr.bf16.mxu0 0
        %5127 = vmatpush1.bf16.xpose.msra.mxu0 0
        %5128 = vmatprep.subr.bf16.mxu0 0
        %5129 = vmatpush1.bf16.xpose.msra.mxu0 0
        %5130 = vmatprep.subr.bf16.mxu0 0
        %5131 = vmatpush1.bf16.xpose.msra.mxu0 0
        %5132 = vmatprep.subr.bf16.mxu0 0
        %5133 = vmatpush1.bf16.xpose.msra.mxu0 0
        %5134 = vmatprep.subr.bf16.mxu0 0
        %5135 = vmatpush1.bf16.xpose.msra.mxu0 0
        %5136 = vmatprep.subr.bf16.mxu0 0
        %5137 = vmatpush1.bf16.xpose.msra.mxu0 0
        %5138 = vmatprep.subr.bf16.mxu0 0
        %5139 = vmatpush1.bf16.xpose.msra.mxu0 0
        %5140 = vmatprep.mubr.bf16.mxu0 %v1551
        %5141 = vmatmul.mubr.bf16.gmra.mrb[0].mxu0 %v1550
        %v5142 = vpop.f32.mrb[0].mxu0
        %v5143 = vadd.f32 %v5103, %v5142
        %v5144 = vpop.f32.mrb[0].mxu0
        %v5145 = vpop.f32.mrb[0].mxu0
        %v5146 = vpop.f32.mrb[0].mxu0
        %5147 = vdwg.mxu0
        %5148 = vmatprep.subr.bf16.mxu0 %v2379
        %5149 = vmatpush1.bf16.xpose.msra.mxu0 %v2378
        %5150 = vmatprep.subr.bf16.mxu0 0
        %5151 = vmatpush1.bf16.xpose.msra.mxu0 0
        %5152 = vmatprep.subr.bf16.mxu0 0
        %5153 = vmatpush1.bf16.xpose.msra.mxu0 0
        %5154 = vmatprep.subr.bf16.mxu0 0
        %5155 = vmatpush1.bf16.xpose.msra.mxu0 0
        %5156 = vmatprep.subr.bf16.mxu0 0
        %5157 = vmatpush1.bf16.xpose.msra.mxu0 0
        %5158 = vmatprep.subr.bf16.mxu0 0
        %5159 = vmatpush1.bf16.xpose.msra.mxu0 0
        %5160 = vmatprep.subr.bf16.mxu0 0
        %5161 = vmatpush1.bf16.xpose.msra.mxu0 0
        %5162 = vmatprep.subr.bf16.mxu0 0
        %5163 = vmatpush1.bf16.xpose.msra.mxu0 0
        %5164 = vmatprep.subr.bf16.mxu0 0
        %5165 = vmatpush1.bf16.xpose.msra.mxu0 0
        %5166 = vmatprep.subr.bf16.mxu0 0
        %5167 = vmatpush1.bf16.xpose.msra.mxu0 0
        %5168 = vmatprep.subr.bf16.mxu0 0
        %5169 = vmatpush1.bf16.xpose.msra.mxu0 0
        %5170 = vmatprep.subr.bf16.mxu0 0
        %5171 = vmatpush1.bf16.xpose.msra.mxu0 0
        %5172 = vmatprep.subr.bf16.mxu0 0
        %5173 = vmatpush1.bf16.xpose.msra.mxu0 0
        %5174 = vmatprep.subr.bf16.mxu0 0
        %5175 = vmatpush1.bf16.xpose.msra.mxu0 0
        %5176 = vmatprep.subr.bf16.mxu0 0
        %5177 = vmatpush1.bf16.xpose.msra.mxu0 0
        %5178 = vmatprep.subr.bf16.mxu0 0
        %5179 = vmatpush1.bf16.xpose.msra.mxu0 0
        %5180 = vmatprep.mubr.bf16.mxu0 %v1553
        %5181 = vmatmul.mubr.bf16.gmra.mrb[0].mxu0 %v1552
        %v5182 = vpop.f32.mrb[0].mxu0
        %v5183 = vadd.f32 %v5143, %v5182
        %v5184 = vpop.f32.mrb[0].mxu0
        %v5185 = vpop.f32.mrb[0].mxu0
        %v5186 = vpop.f32.mrb[0].mxu0
        %5187 = vdwg.mxu0
        %5188 = vmatprep.subr.bf16.mxu0 %v2381
        %5189 = vmatpush1.bf16.xpose.msra.mxu0 %v2380
        %5190 = vmatprep.subr.bf16.mxu0 0
        %5191 = vmatpush1.bf16.xpose.msra.mxu0 0
        %5192 = vmatprep.subr.bf16.mxu0 0
        %5193 = vmatpush1.bf16.xpose.msra.mxu0 0
        %5194 = vmatprep.subr.bf16.mxu0 0
        %5195 = vmatpush1.bf16.xpose.msra.mxu0 0
        %5196 = vmatprep.subr.bf16.mxu0 0
        %5197 = vmatpush1.bf16.xpose.msra.mxu0 0
        %5198 = vmatprep.subr.bf16.mxu0 0
        %5199 = vmatpush1.bf16.xpose.msra.mxu0 0
        %5200 = vmatprep.subr.bf16.mxu0 0
        %5201 = vmatpush1.bf16.xpose.msra.mxu0 0
        %5202 = vmatprep.subr.bf16.mxu0 0
        %5203 = vmatpush1.bf16.xpose.msra.mxu0 0
        %5204 = vmatprep.subr.bf16.mxu0 0
        %5205 = vmatpush1.bf16.xpose.msra.mxu0 0
        %5206 = vmatprep.subr.bf16.mxu0 0
        %5207 = vmatpush1.bf16.xpose.msra.mxu0 0
        %5208 = vmatprep.subr.bf16.mxu0 0
        %5209 = vmatpush1.bf16.xpose.msra.mxu0 0
        %5210 = vmatprep.subr.bf16.mxu0 0
        %5211 = vmatpush1.bf16.xpose.msra.mxu0 0
        %5212 = vmatprep.subr.bf16.mxu0 0
        %5213 = vmatpush1.bf16.xpose.msra.mxu0 0
        %5214 = vmatprep.subr.bf16.mxu0 0
        %5215 = vmatpush1.bf16.xpose.msra.mxu0 0
        %5216 = vmatprep.subr.bf16.mxu0 0
        %5217 = vmatpush1.bf16.xpose.msra.mxu0 0
        %5218 = vmatprep.subr.bf16.mxu0 0
        %5219 = vmatpush1.bf16.xpose.msra.mxu0 0
        %5220 = vmatprep.mubr.bf16.mxu0 %v1555
        %5221 = vmatmul.mubr.bf16.gmra.mrb[0].mxu0 %v1554
        %v5222 = vpop.f32.mrb[0].mxu0
        %v5223 = vadd.f32 %v5183, %v5222
        %v5224 = vpop.f32.mrb[0].mxu0
        %v5225 = vpop.f32.mrb[0].mxu0
        %v5226 = vpop.f32.mrb[0].mxu0
        %5227 = vdwg.mxu0
        %5228 = vmatprep.subr.bf16.mxu0 %v2383
        %5229 = vmatpush1.bf16.xpose.msra.mxu0 %v2382
        %5230 = vmatprep.subr.bf16.mxu0 0
        %5231 = vmatpush1.bf16.xpose.msra.mxu0 0
        %5232 = vmatprep.subr.bf16.mxu0 0
        %5233 = vmatpush1.bf16.xpose.msra.mxu0 0
        %5234 = vmatprep.subr.bf16.mxu0 0
        %5235 = vmatpush1.bf16.xpose.msra.mxu0 0
        %5236 = vmatprep.subr.bf16.mxu0 0
        %5237 = vmatpush1.bf16.xpose.msra.mxu0 0
        %5238 = vmatprep.subr.bf16.mxu0 0
        %5239 = vmatpush1.bf16.xpose.msra.mxu0 0
        %5240 = vmatprep.subr.bf16.mxu0 0
        %5241 = vmatpush1.bf16.xpose.msra.mxu0 0
        %5242 = vmatprep.subr.bf16.mxu0 0
        %5243 = vmatpush1.bf16.xpose.msra.mxu0 0
        %5244 = vmatprep.subr.bf16.mxu0 0
        %5245 = vmatpush1.bf16.xpose.msra.mxu0 0
        %5246 = vmatprep.subr.bf16.mxu0 0
        %5247 = vmatpush1.bf16.xpose.msra.mxu0 0
        %5248 = vmatprep.subr.bf16.mxu0 0
        %5249 = vmatpush1.bf16.xpose.msra.mxu0 0
        %5250 = vmatprep.subr.bf16.mxu0 0
        %5251 = vmatpush1.bf16.xpose.msra.mxu0 0
        %5252 = vmatprep.subr.bf16.mxu0 0
        %5253 = vmatpush1.bf16.xpose.msra.mxu0 0
        %5254 = vmatprep.subr.bf16.mxu0 0
        %5255 = vmatpush1.bf16.xpose.msra.mxu0 0
        %5256 = vmatprep.subr.bf16.mxu0 0
        %5257 = vmatpush1.bf16.xpose.msra.mxu0 0
        %5258 = vmatprep.subr.bf16.mxu0 0
        %5259 = vmatpush1.bf16.xpose.msra.mxu0 0
        %5260 = vmatprep.mubr.bf16.mxu0 %v1557
        %5261 = vmatmul.mubr.bf16.gmra.mrb[0].mxu0 %v1556
        %v5262 = vpop.f32.mrb[0].mxu0
        %v5263 = vadd.f32 %v5223, %v5262
        %v5264 = vpop.f32.mrb[0].mxu0
        %v5265 = vpop.f32.mrb[0].mxu0
        %v5266 = vpop.f32.mrb[0].mxu0
        %5267 = vdwg.mxu0
        %5268 = vmatprep.subr.bf16.mxu0 %v2385
        %5269 = vmatpush1.bf16.xpose.msra.mxu0 %v2384
        %5270 = vmatprep.subr.bf16.mxu0 0
        %5271 = vmatpush1.bf16.xpose.msra.mxu0 0
        %5272 = vmatprep.subr.bf16.mxu0 0
        %5273 = vmatpush1.bf16.xpose.msra.mxu0 0
        %5274 = vmatprep.subr.bf16.mxu0 0
        %5275 = vmatpush1.bf16.xpose.msra.mxu0 0
        %5276 = vmatprep.subr.bf16.mxu0 0
        %5277 = vmatpush1.bf16.xpose.msra.mxu0 0
        %5278 = vmatprep.subr.bf16.mxu0 0
        %5279 = vmatpush1.bf16.xpose.msra.mxu0 0
        %5280 = vmatprep.subr.bf16.mxu0 0
        %5281 = vmatpush1.bf16.xpose.msra.mxu0 0
        %5282 = vmatprep.subr.bf16.mxu0 0
        %5283 = vmatpush1.bf16.xpose.msra.mxu0 0
        %5284 = vmatprep.subr.bf16.mxu0 0
        %5285 = vmatpush1.bf16.xpose.msra.mxu0 0
        %5286 = vmatprep.subr.bf16.mxu0 0
        %5287 = vmatpush1.bf16.xpose.msra.mxu0 0
        %5288 = vmatprep.subr.bf16.mxu0 0
        %5289 = vmatpush1.bf16.xpose.msra.mxu0 0
        %5290 = vmatprep.subr.bf16.mxu0 0
        %5291 = vmatpush1.bf16.xpose.msra.mxu0 0
        %5292 = vmatprep.subr.bf16.mxu0 0
        %5293 = vmatpush1.bf16.xpose.msra.mxu0 0
        %5294 = vmatprep.subr.bf16.mxu0 0
        %5295 = vmatpush1.bf16.xpose.msra.mxu0 0
        %5296 = vmatprep.subr.bf16.mxu0 0
        %5297 = vmatpush1.bf16.xpose.msra.mxu0 0
        %5298 = vmatprep.subr.bf16.mxu0 0
        %5299 = vmatpush1.bf16.xpose.msra.mxu0 0
        %5300 = vmatprep.mubr.bf16.mxu0 %v1559
        %5301 = vmatmul.mubr.bf16.gmra.mrb[0].mxu0 %v1558
        %v5302 = vpop.f32.mrb[0].mxu0
        %v5303 = vadd.f32 %v5263, %v5302
        %v5304 = vpop.f32.mrb[0].mxu0
        %v5305 = vpop.f32.mrb[0].mxu0
        %v5306 = vpop.f32.mrb[0].mxu0
        %5307 = vdwg.mxu0
        %5308 = vmatprep.subr.bf16.mxu0 %v2387
        %5309 = vmatpush1.bf16.xpose.msra.mxu0 %v2386
        %5310 = vmatprep.subr.bf16.mxu0 0
        %5311 = vmatpush1.bf16.xpose.msra.mxu0 0
        %5312 = vmatprep.subr.bf16.mxu0 0
        %5313 = vmatpush1.bf16.xpose.msra.mxu0 0
        %5314 = vmatprep.subr.bf16.mxu0 0
        %5315 = vmatpush1.bf16.xpose.msra.mxu0 0
        %5316 = vmatprep.subr.bf16.mxu0 0
        %5317 = vmatpush1.bf16.xpose.msra.mxu0 0
        %5318 = vmatprep.subr.bf16.mxu0 0
        %5319 = vmatpush1.bf16.xpose.msra.mxu0 0
        %5320 = vmatprep.subr.bf16.mxu0 0
        %5321 = vmatpush1.bf16.xpose.msra.mxu0 0
        %5322 = vmatprep.subr.bf16.mxu0 0
        %5323 = vmatpush1.bf16.xpose.msra.mxu0 0
        %5324 = vmatprep.subr.bf16.mxu0 0
        %5325 = vmatpush1.bf16.xpose.msra.mxu0 0
        %5326 = vmatprep.subr.bf16.mxu0 0
        %5327 = vmatpush1.bf16.xpose.msra.mxu0 0
        %5328 = vmatprep.subr.bf16.mxu0 0
        %5329 = vmatpush1.bf16.xpose.msra.mxu0 0
        %5330 = vmatprep.subr.bf16.mxu0 0
        %5331 = vmatpush1.bf16.xpose.msra.mxu0 0
        %5332 = vmatprep.subr.bf16.mxu0 0
        %5333 = vmatpush1.bf16.xpose.msra.mxu0 0
        %5334 = vmatprep.subr.bf16.mxu0 0
        %5335 = vmatpush1.bf16.xpose.msra.mxu0 0
        %5336 = vmatprep.subr.bf16.mxu0 0
        %5337 = vmatpush1.bf16.xpose.msra.mxu0 0
        %5338 = vmatprep.subr.bf16.mxu0 0
        %5339 = vmatpush1.bf16.xpose.msra.mxu0 0
        %5340 = vmatprep.mubr.bf16.mxu0 %v1561
        %5341 = vmatmul.mubr.bf16.gmra.mrb[0].mxu0 %v1560
        %v5342 = vpop.f32.mrb[0].mxu0
        %v5343 = vadd.f32 %v5303, %v5342
        %v5344 = vpop.f32.mrb[0].mxu0
        %v5345 = vpop.f32.mrb[0].mxu0
        %v5346 = vpop.f32.mrb[0].mxu0
        %5347 = vdwg.mxu0
        %5348 = vmatprep.subr.bf16.mxu0 %v2389
        %5349 = vmatpush1.bf16.xpose.msra.mxu0 %v2388
        %5350 = vmatprep.subr.bf16.mxu0 0
        %5351 = vmatpush1.bf16.xpose.msra.mxu0 0
        %5352 = vmatprep.subr.bf16.mxu0 0
        %5353 = vmatpush1.bf16.xpose.msra.mxu0 0
        %5354 = vmatprep.subr.bf16.mxu0 0
        %5355 = vmatpush1.bf16.xpose.msra.mxu0 0
        %5356 = vmatprep.subr.bf16.mxu0 0
        %5357 = vmatpush1.bf16.xpose.msra.mxu0 0
        %5358 = vmatprep.subr.bf16.mxu0 0
        %5359 = vmatpush1.bf16.xpose.msra.mxu0 0
        %5360 = vmatprep.subr.bf16.mxu0 0
        %5361 = vmatpush1.bf16.xpose.msra.mxu0 0
        %5362 = vmatprep.subr.bf16.mxu0 0
        %5363 = vmatpush1.bf16.xpose.msra.mxu0 0
        %5364 = vmatprep.subr.bf16.mxu0 0
        %5365 = vmatpush1.bf16.xpose.msra.mxu0 0
        %5366 = vmatprep.subr.bf16.mxu0 0
        %5367 = vmatpush1.bf16.xpose.msra.mxu0 0
        %5368 = vmatprep.subr.bf16.mxu0 0
        %5369 = vmatpush1.bf16.xpose.msra.mxu0 0
        %5370 = vmatprep.subr.bf16.mxu0 0
        %5371 = vmatpush1.bf16.xpose.msra.mxu0 0
        %5372 = vmatprep.subr.bf16.mxu0 0
        %5373 = vmatpush1.bf16.xpose.msra.mxu0 0
        %5374 = vmatprep.subr.bf16.mxu0 0
        %5375 = vmatpush1.bf16.xpose.msra.mxu0 0
        %5376 = vmatprep.subr.bf16.mxu0 0
        %5377 = vmatpush1.bf16.xpose.msra.mxu0 0
        %5378 = vmatprep.subr.bf16.mxu0 0
        %5379 = vmatpush1.bf16.xpose.msra.mxu0 0
        %5380 = vmatprep.mubr.bf16.mxu0 %v1563
        %5381 = vmatmul.mubr.bf16.gmra.mrb[0].mxu0 %v1562
        %v5382 = vpop.f32.mrb[0].mxu0
        %v5383 = vadd.f32 %v5343, %v5382
        %v5384 = vpop.f32.mrb[0].mxu0
        %v5385 = vpop.f32.mrb[0].mxu0
        %v5386 = vpop.f32.mrb[0].mxu0
        %5387 = vdwg.mxu0
        %5388 = vmatprep.subr.bf16.mxu0 %v2391
        %5389 = vmatpush1.bf16.xpose.msra.mxu0 %v2390
        %5390 = vmatprep.subr.bf16.mxu0 0
        %5391 = vmatpush1.bf16.xpose.msra.mxu0 0
        %5392 = vmatprep.subr.bf16.mxu0 0
        %5393 = vmatpush1.bf16.xpose.msra.mxu0 0
        %5394 = vmatprep.subr.bf16.mxu0 0
        %5395 = vmatpush1.bf16.xpose.msra.mxu0 0
        %5396 = vmatprep.subr.bf16.mxu0 0
        %5397 = vmatpush1.bf16.xpose.msra.mxu0 0
        %5398 = vmatprep.subr.bf16.mxu0 0
        %5399 = vmatpush1.bf16.xpose.msra.mxu0 0
        %5400 = vmatprep.subr.bf16.mxu0 0
        %5401 = vmatpush1.bf16.xpose.msra.mxu0 0
        %5402 = vmatprep.subr.bf16.mxu0 0
        %5403 = vmatpush1.bf16.xpose.msra.mxu0 0
        %5404 = vmatprep.subr.bf16.mxu0 0
        %5405 = vmatpush1.bf16.xpose.msra.mxu0 0
        %5406 = vmatprep.subr.bf16.mxu0 0
        %5407 = vmatpush1.bf16.xpose.msra.mxu0 0
        %5408 = vmatprep.subr.bf16.mxu0 0
        %5409 = vmatpush1.bf16.xpose.msra.mxu0 0
        %5410 = vmatprep.subr.bf16.mxu0 0
        %5411 = vmatpush1.bf16.xpose.msra.mxu0 0
        %5412 = vmatprep.subr.bf16.mxu0 0
        %5413 = vmatpush1.bf16.xpose.msra.mxu0 0
        %5414 = vmatprep.subr.bf16.mxu0 0
        %5415 = vmatpush1.bf16.xpose.msra.mxu0 0
        %5416 = vmatprep.subr.bf16.mxu0 0
        %5417 = vmatpush1.bf16.xpose.msra.mxu0 0
        %5418 = vmatprep.subr.bf16.mxu0 0
        %5419 = vmatpush1.bf16.xpose.msra.mxu0 0
        %5420 = vmatprep.mubr.bf16.mxu0 %v1565
        %5421 = vmatmul.mubr.bf16.gmra.mrb[0].mxu0 %v1564
        %v5422 = vpop.f32.mrb[0].mxu0
        %v5423 = vadd.f32 %v5383, %v5422
        %v5424 = vpop.f32.mrb[0].mxu0
        %v5425 = vpop.f32.mrb[0].mxu0
        %v5426 = vpop.f32.mrb[0].mxu0
        %5427 = vdwg.mxu0
        %5428 = vmatprep.subr.bf16.mxu0 %v2393
        %5429 = vmatpush1.bf16.xpose.msra.mxu0 %v2392
        %5430 = vmatprep.subr.bf16.mxu0 0
        %5431 = vmatpush1.bf16.xpose.msra.mxu0 0
        %5432 = vmatprep.subr.bf16.mxu0 0
        %5433 = vmatpush1.bf16.xpose.msra.mxu0 0
        %5434 = vmatprep.subr.bf16.mxu0 0
        %5435 = vmatpush1.bf16.xpose.msra.mxu0 0
        %5436 = vmatprep.subr.bf16.mxu0 0
        %5437 = vmatpush1.bf16.xpose.msra.mxu0 0
        %5438 = vmatprep.subr.bf16.mxu0 0
        %5439 = vmatpush1.bf16.xpose.msra.mxu0 0
        %5440 = vmatprep.subr.bf16.mxu0 0
        %5441 = vmatpush1.bf16.xpose.msra.mxu0 0
        %5442 = vmatprep.subr.bf16.mxu0 0
        %5443 = vmatpush1.bf16.xpose.msra.mxu0 0
        %5444 = vmatprep.subr.bf16.mxu0 0
        %5445 = vmatpush1.bf16.xpose.msra.mxu0 0
        %5446 = vmatprep.subr.bf16.mxu0 0
        %5447 = vmatpush1.bf16.xpose.msra.mxu0 0
        %5448 = vmatprep.subr.bf16.mxu0 0
        %5449 = vmatpush1.bf16.xpose.msra.mxu0 0
        %5450 = vmatprep.subr.bf16.mxu0 0
        %5451 = vmatpush1.bf16.xpose.msra.mxu0 0
        %5452 = vmatprep.subr.bf16.mxu0 0
        %5453 = vmatpush1.bf16.xpose.msra.mxu0 0
        %5454 = vmatprep.subr.bf16.mxu0 0
        %5455 = vmatpush1.bf16.xpose.msra.mxu0 0
        %5456 = vmatprep.subr.bf16.mxu0 0
        %5457 = vmatpush1.bf16.xpose.msra.mxu0 0
        %5458 = vmatprep.subr.bf16.mxu0 0
        %5459 = vmatpush1.bf16.xpose.msra.mxu0 0
        %5460 = vmatprep.mubr.bf16.mxu0 %v1567
        %5461 = vmatmul.mubr.bf16.gmra.mrb[0].mxu0 %v1566
        %v5462 = vpop.f32.mrb[0].mxu0
        %v5463 = vadd.f32 %v5423, %v5462
        %v5464 = vpop.f32.mrb[0].mxu0
        %v5465 = vpop.f32.mrb[0].mxu0
        %v5466 = vpop.f32.mrb[0].mxu0
        %5467 = vdwg.mxu0
        %5468 = vmatprep.subr.bf16.mxu0 %v2395
        %5469 = vmatpush1.bf16.xpose.msra.mxu0 %v2394
        %5470 = vmatprep.subr.bf16.mxu0 0
        %5471 = vmatpush1.bf16.xpose.msra.mxu0 0
        %5472 = vmatprep.subr.bf16.mxu0 0
        %5473 = vmatpush1.bf16.xpose.msra.mxu0 0
        %5474 = vmatprep.subr.bf16.mxu0 0
        %5475 = vmatpush1.bf16.xpose.msra.mxu0 0
        %5476 = vmatprep.subr.bf16.mxu0 0
        %5477 = vmatpush1.bf16.xpose.msra.mxu0 0
        %5478 = vmatprep.subr.bf16.mxu0 0
        %5479 = vmatpush1.bf16.xpose.msra.mxu0 0
        %5480 = vmatprep.subr.bf16.mxu0 0
        %5481 = vmatpush1.bf16.xpose.msra.mxu0 0
        %5482 = vmatprep.subr.bf16.mxu0 0
        %5483 = vmatpush1.bf16.xpose.msra.mxu0 0
        %5484 = vmatprep.subr.bf16.mxu0 0
        %5485 = vmatpush1.bf16.xpose.msra.mxu0 0
        %5486 = vmatprep.subr.bf16.mxu0 0
        %5487 = vmatpush1.bf16.xpose.msra.mxu0 0
        %5488 = vmatprep.subr.bf16.mxu0 0
        %5489 = vmatpush1.bf16.xpose.msra.mxu0 0
        %5490 = vmatprep.subr.bf16.mxu0 0
        %5491 = vmatpush1.bf16.xpose.msra.mxu0 0
        %5492 = vmatprep.subr.bf16.mxu0 0
        %5493 = vmatpush1.bf16.xpose.msra.mxu0 0
        %5494 = vmatprep.subr.bf16.mxu0 0
        %5495 = vmatpush1.bf16.xpose.msra.mxu0 0
        %5496 = vmatprep.subr.bf16.mxu0 0
        %5497 = vmatpush1.bf16.xpose.msra.mxu0 0
        %5498 = vmatprep.subr.bf16.mxu0 0
        %5499 = vmatpush1.bf16.xpose.msra.mxu0 0
        %5500 = vmatprep.mubr.bf16.mxu0 %v1569
        %5501 = vmatmul.mubr.bf16.gmra.mrb[0].mxu0 %v1568
        %v5502 = vpop.f32.mrb[0].mxu0
        %v5503 = vadd.f32 %v5463, %v5502
        %v5504 = vpop.f32.mrb[0].mxu0
        %v5505 = vpop.f32.mrb[0].mxu0
        %v5506 = vpop.f32.mrb[0].mxu0
        %5507 = vdwg.mxu0
        %5508 = vmatprep.subr.bf16.mxu0 %v2397
        %5509 = vmatpush1.bf16.xpose.msra.mxu0 %v2396
        %5510 = vmatprep.subr.bf16.mxu0 0
        %5511 = vmatpush1.bf16.xpose.msra.mxu0 0
        %5512 = vmatprep.subr.bf16.mxu0 0
        %5513 = vmatpush1.bf16.xpose.msra.mxu0 0
        %5514 = vmatprep.subr.bf16.mxu0 0
        %5515 = vmatpush1.bf16.xpose.msra.mxu0 0
        %5516 = vmatprep.subr.bf16.mxu0 0
        %5517 = vmatpush1.bf16.xpose.msra.mxu0 0
        %5518 = vmatprep.subr.bf16.mxu0 0
        %5519 = vmatpush1.bf16.xpose.msra.mxu0 0
        %5520 = vmatprep.subr.bf16.mxu0 0
        %5521 = vmatpush1.bf16.xpose.msra.mxu0 0
        %5522 = vmatprep.subr.bf16.mxu0 0
        %5523 = vmatpush1.bf16.xpose.msra.mxu0 0
        %5524 = vmatprep.subr.bf16.mxu0 0
        %5525 = vmatpush1.bf16.xpose.msra.mxu0 0
        %5526 = vmatprep.subr.bf16.mxu0 0
        %5527 = vmatpush1.bf16.xpose.msra.mxu0 0
        %5528 = vmatprep.subr.bf16.mxu0 0
        %5529 = vmatpush1.bf16.xpose.msra.mxu0 0
        %5530 = vmatprep.subr.bf16.mxu0 0
        %5531 = vmatpush1.bf16.xpose.msra.mxu0 0
        %5532 = vmatprep.subr.bf16.mxu0 0
        %5533 = vmatpush1.bf16.xpose.msra.mxu0 0
        %5534 = vmatprep.subr.bf16.mxu0 0
        %5535 = vmatpush1.bf16.xpose.msra.mxu0 0
        %5536 = vmatprep.subr.bf16.mxu0 0
        %5537 = vmatpush1.bf16.xpose.msra.mxu0 0
        %5538 = vmatprep.subr.bf16.mxu0 0
        %5539 = vmatpush1.bf16.xpose.msra.mxu0 0
        %5540 = vmatprep.mubr.bf16.mxu0 %v1571
        %5541 = vmatmul.mubr.bf16.gmra.mrb[0].mxu0 %v1570
        %v5542 = vpop.f32.mrb[0].mxu0
        %v5543 = vadd.f32 %v5503, %v5542
        %v5544 = vpop.f32.mrb[0].mxu0
        %v5545 = vpop.f32.mrb[0].mxu0
        %v5546 = vpop.f32.mrb[0].mxu0
        %5547 = vdwg.mxu0
        %v5548 = vadd.f32 %v596, %v5543
        %vm5549 = vcmask 74752
        %5550 = vst.msk [vmem:[#allocation2] sm:$0x3] %vm5549, %v5548
        %p5551 = scmp.eq.s32.totalorder %s16, 3
        // Predicated region
        $region67: #{image_mlp_forward.1} parent=57 // pred_check
          %p5552 = pneg %p5551
        $region68: #{image_mlp_forward.1} parent=57 // pred_check_branch
          %5554 = sbr.rel (%p5552) target = $region70
        $region69: #{image_mlp_forward.1} parent=57 // pred_region
          %v5555 = vld [vmem:[#allocation2] sm:$0x3]
          %v5556 = vld [vmem:[%s1] sm:$0x3]
          %5558 = vset.pattern.permute.xlu0 0
          %5559 = vperm.xlu0 %5558, %v5556
          %v5560 = vpop.permute.xlu0 %5559
          %v5562 = vmul.f32 %v5555, %v5560
          %v5563 = vsel %vm5549, %v5562, -inf
          %5564 = vmax.xlane.f32.xlu0 %v5563
          %v5565 = vpop.xlane.xlu0 %5564
          %v5566 = vsub.f32 %v5562, %v5565
          %v5567 = vmul.f32 %v5566, 1.442695
          %v5568 = vpow.pop %v5567
          %v5569 = vsel %vm5549, %v5568, 0.0
          %5570 = vadd.xlane.f32.xlu0 %v5569
          %v5571 = vpop.xlane.xlu0 %5570
          %v5572 = vrcp.pop %v5571
          %v5573 = vmul.f32 %v5568, %v5572
          %5574 = vst.msk [vmem:[#allocation4] sm:$0x3] %vm5549, %v5573
        $region70: #{image_mlp_forward.1} parent=57 // pred_fallthru
          _
        // Predicated region
        $region71: #{image_mlp_forward.1} parent=57 // pred_check
          %p5575 = pneg %p123
        $region72: #{image_mlp_forward.1} parent=57 // pred_check_branch
          %5577 = sbr.rel (%p5575) target = $region74
        $region73: #{image_mlp_forward.1} parent=57 // pred_region
          %s5579 = ssub.s32 32, 32
          %5580 = vsyncadd [#allocation5], %s5579
          %s5582 = sshll.u32 [#allocation4], 4
          %s5583 = int_to_ptr.vmem [resolvable:$true] %s5582
          %5585 = dma.vmem_to_hbm [thread:$0]  %s5583, 32, %s4, [#allocation5]
        $region74: #{image_mlp_forward.1} parent=57 // pred_fallthru
          _
        // Predicated region
        $region75: #{image_mlp_forward.1} parent=57 // pred_check
          %p5586 = pneg %p123
        $region76: #{image_mlp_forward.1} parent=57 // pred_check_branch
          %5588 = sbr.rel (%p5586) target = $region78
        $region77: #{image_mlp_forward.1} parent=57 // pred_region
          %5589 = dma.done [#allocation5], 32
        $region78: #{image_mlp_forward.1} parent=57 // pred_fallthru
          _
      $region58: #{image_mlp_forward.1} parent=5 // pred_fallthru
        _
      %p5590 = scmp.le.s32.totalorder 2, %s11
      // Predicated region
      $region79: #{image_mlp_forward.1} parent=5 // pred_check
        %p5591 = pneg %p5590
      $region80: #{image_mlp_forward.1} parent=5 // pred_check_branch
        %5593 = sbr.rel (%p5591) target = $region82
      $region81: #{image_mlp_forward.1} parent=5 // pred_region
        %s5594 = ssub.s32 %s11, 2
      $region82: #{image_mlp_forward.1} parent=5 // pred_fallthru
        _
    $region6: #{image_mlp_forward.1} parent=1 // loop_footer
      %s15 = sadd.s32 1, %s11
    $region7: #{image_mlp_forward.1} parent=1 // loop_footer_branch
      %10 = sbr.rel target = $region3
    $region8: #{image_mlp_forward.1} parent=1 // loop_exit
      _
    %5595 = vsyncpa [#allocation5], 1
    %s5596 = scalar_lea.sflag [#allocation5], 1
    %5597 = vsyncpa %s5596, 1

</llo_original>
